<compile_context>
chip_gen: v6e
topology: v6e:2x2x1
jax: 0.10.0
libtpu: 0.0.40
codegen_flags: <defaults>
</compile_context>

<pallas_src>
import numpy as np
import jax
import jax.numpy as jnp
from jax import lax
from jax.experimental import pallas as pl
from jax.experimental.pallas import tpu as pltpu


# ----------------------------- Pallas kernel ------------------------------ #
def fusion_kernel(x1p_ref, x2p_ref, wbig_ref, bias_ref, w3a_ref, w3b_ref,
                  b3_ref, out_ref, pad1_ref, pad2_ref):
    nph, B_blk, Ho, Wo, C = x1p_ref.shape
    cout = wbig_ref.shape[1]
    M = B_blk * Ho * Wo

    x1 = x1p_ref[...]                      # (4, B_blk, Ho, Wo, C) raw phases
    x2 = x2p_ref[...]

    # Zero-bordered padded copies (covers pad=1 of the 3x3 / stride-2 conv).
    # Border is re-zeroed every step so the kernel is independent of grid
    # ordering / megacore splitting; the interior is overwritten each step.
    zrow = jnp.zeros((nph, B_blk, 1, Wo + 1, C), jnp.float32)
    zcol = jnp.zeros((nph, B_blk, Ho + 1, 1, C), jnp.float32)
    pad1_ref[:, :, 0:1, :, :] = zrow
    pad1_ref[:, :, :, 0:1, :] = zcol
    pad2_ref[:, :, 0:1, :, :] = zrow
    pad2_ref[:, :, :, 0:1, :] = zcol
    pad1_ref[:, :, 1:, 1:, :] = x1
    pad2_ref[:, :, 1:, 1:, :] = x2
    p1 = pad1_ref[...]                     # (4, B_blk, Ho+1, Wo+1, C)
    p2 = pad2_ref[...]

    # AvgPool2d(2,2) == mean of the 4 phase images (raw; BN folded into W/bias)
    pooled1 = (x1[0] + x1[1] + x1[2] + x1[3]) * 0.25     # (B_blk, Ho, Wo, C)
    pooled2 = (x2[0] + x2[1] + x2[2] + x2[3]) * 0.25

    # im2col: the 9 conv2 taps of each input plus the pooled conv1 inputs,
    # stacked along channels -> one fused (M, 20C) x (20C, cout) matmul.
    pieces = []
    for pp in (p1, p2):
        for kh in range(3):
            p_par = 0 if kh == 1 else 1    # phase-row parity of this tap
            r0 = 0 if kh == 0 else 1       # 0 -> shifted tap (hits zero border)
            for kw in range(3):
                q_par = 0 if kw == 1 else 1
                c0 = 0 if kw == 0 else 1
                f = 2 * p_par + q_par
                pieces.append(pp[f, :, r0:r0 + Ho, c0:c0 + Wo, :])
    pieces.append(pooled1)
    pieces.append(pooled2)
    col = jnp.concatenate(pieces, axis=-1)               # (B_blk, Ho, Wo, 20C)
    col2d = col.reshape(M, col.shape[-1])

    pre = jnp.dot(col2d, wbig_ref[...], preferred_element_type=jnp.float32)
    pre = pre.reshape(B_blk, Ho * Wo, cout) + bias_ref[...][None]

    # squeeze gate: global mean == mean of the already-pooled activations
    m1 = jnp.mean(pooled1, axis=(1, 2))                  # (B_blk, C)
    m2 = jnp.mean(pooled2, axis=(1, 2))
    zlin = (jnp.dot(m1, w3a_ref[...], preferred_element_type=jnp.float32)
            + jnp.dot(m2, w3b_ref[...], preferred_element_type=jnp.float32)
            + b3_ref[...])
    z = jax.nn.sigmoid(zlin)                             # (B_blk, cout)

    b = pre * z[:, None, :]
    out = b * jax.nn.sigmoid(b)                          # SiLU
    # lane-dense store: last dim Ho*Wo*cout (multiple of 128) instead of cout
    out_ref[0] = out.reshape(B_blk, Ho * Wo * cout)


# ------------------------------ JAX wrapper -------------------------------- #
def _pick_b_blk(B, Ho, Wo):
    """Batch block: aim for M >= ~256 rows, but keep >= 2 grid steps (v7x)."""
    target = max(1, 256 // (Ho * Wo))
    b_blk = max(1, min(B, target))
    while B % b_blk:
        b_blk -= 1
    if B // b_blk < 2 and B > 1:
        b_blk = max(1, B // 2)
        while B % b_blk:
            b_blk -= 1
    return b_blk


def fusion_forward(x1_nchw, x2_nchw, params, b_blk=None):
    B, C, H, W = x1_nchw.shape
    Ho, Wo = H // 2, W // 2
    cout = params["w_big"].shape[1]
    k_big = params["w_big"].shape[0]       # 20 * C

    if b_blk is None:
        b_blk = _pick_b_blk(B, Ho, Wo)
    nb = B // b_blk

    def to_phases(x):                      # NCHW -> (4, B, Ho, Wo, C) phases
        x = jnp.transpose(x, (0, 2, 3, 1))                    # NHWC
        x = x.reshape(B, Ho, 2, Wo, 2, C)
        x = jnp.transpose(x, (2, 4, 0, 1, 3, 5))              # (2,2,B,Ho,Wo,C)
        return x.reshape(4, B, Ho, Wo, C)
    # TODO(synk): with an NHWC producer upstream this transpose/phase-split
    # could be dropped (or done in-kernel with strided reads) to save an HBM pass.

    x1p = to_phases(x1_nchw).astype(jnp.float32)
    x2p = to_phases(x2_nchw).astype(jnp.float32)

    def full(shape):
        return pl.BlockSpec(shape, lambda b: (0,) * len(shape))

    in_specs = [
        pl.BlockSpec((4, b_blk, Ho, Wo, C), lambda b: (0, b, 0, 0, 0)),  # x1 phases
        pl.BlockSpec((4, b_blk, Ho, Wo, C), lambda b: (0, b, 0, 0, 0)),  # x2 phases
        full((k_big, cout)),          # fused conv1+conv2 weight (BN folded)
        full((Ho * Wo, cout)),        # per-position bias (BN shifts folded)
        full((C, cout)), full((C, cout)), full((1, cout)),   # conv3 gate params
    ]
    out_spec = pl.BlockSpec((1, b_blk, Ho * Wo * cout), lambda b: (b, 0, 0))

    out = pl.pallas_call(
        fusion_kernel,
        out_shape=jax.ShapeDtypeStruct((nb, b_blk, Ho * Wo * cout), jnp.float32),
        grid=(nb,),
        in_specs=in_specs,
        out_specs=out_spec,
        scratch_shapes=[pltpu.VMEM((4, b_blk, Ho + 1, Wo + 1, C), jnp.float32),
                        pltpu.VMEM((4, b_blk, Ho + 1, Wo + 1, C), jnp.float32)],
        compiler_params=pltpu.CompilerParams(dimension_semantics=("parallel",)),
    )(x1p, x2p, params["w_big"], params["bias_map"],
      params["w3a_f"], params["w3b_f"], params["b3_f"])

    out = out.reshape(B, Ho, Wo, cout)
    return jnp.transpose(out, (0, 3, 1, 2))                   # NCHW


# --------------------------- parameter setup glue --------------------------- #
def make_eff_weight(w_oihw, C, cout):
    """Grouped (groups=2) weight acting on the channel-SHUFFLED tensor ->
    dense (kh*kw, 2C, cout) weight acting on the un-shuffled concatenated
    [x1 | x2] channel layout (zeros outside the group blocks)."""
    w = np.asarray(w_oihw)
    _, _, kh, kw = w.shape
    mid = 2 * C
    half = cout // 2
    w_eff = np.zeros((kh * kw, mid, cout), np.float32)
    for c_cat in range(mid):
        gc, g = divmod(c_cat, C)           # gc: which input (x1/x2), g: channel
        c_shuf = 2 * g + gc                # channel index after channel_shuffle
        j = c_shuf // C                    # conv group of this channel
        for o in range(j * half, (j + 1) * half):
            w_eff[:, c_cat, o] = w[o, c_shuf - j * C].reshape(-1)
    return w_eff


def make_params(key, C, cout, H, W):
    eps = 1e-5
    Ho, Wo = H // 2, W // 2
    ks = jax.random.split(key, 7)

    def bn_fold(k, n):
        kg, kb, km, kv = jax.random.split(k, 4)
        gamma = jax.random.uniform(kg, (n,), minval=0.5, maxval=1.5)
        beta = 0.1 * jax.random.normal(kb, (n,))
        mean = 0.1 * jax.random.normal(km, (n,))
        var = jax.random.uniform(kv, (n,), minval=0.5, maxval=1.5)
        s = gamma / jnp.sqrt(var + eps)
        b = beta - mean * s
        return np.asarray(s, np.float32), np.asarray(b, np.float32)

    bn_s, bn_b = bn_fold(ks[0], C)          # shared BN applied to both inputs
    bn1_s, bn1_b = bn_fold(ks[1], cout)
    bn2_s, bn2_b = bn_fold(ks[2], cout)

    w1_raw = 0.2 * jax.random.normal(ks[3], (cout, C, 1, 1), jnp.float32)
    w2_raw = 0.2 * jax.random.normal(ks[4], (cout, C, 3, 3), jnp.float32)
    w3_raw = 0.2 * jax.random.normal(ks[5], (cout, C, 3 // 3, 1), jnp.float32)
    w3_raw = w3_raw.reshape(cout, C, 1, 1)
    b3 = 0.1 * jax.random.normal(ks[6], (cout,), jnp.float32)

    # --- fold shuffle + groups + BN into kernel-ready dense matrices (host) ---
    we1 = make_eff_weight(w1_raw, C, cout)[0]      # (2C, cout)
    we2 = make_eff_weight(w2_raw, C, cout)         # (9, 2C, cout)
    we3 = make_eff_weight(w3_raw, C, cout)[0]      # (2C, cout)
    s, t = bn_s, bn_b

    w1a, w1b = we1[:C], we1[C:]                    # per-input (C, cout) blocks
    w2a, w2b = we2[:, :C, :], we2[:, C:, :]        # (9, C, cout)
    w3a, w3b = we3[:C], we3[C:]

    w1a_f = s[:, None] * w1a * bn1_s[None, :]
    w1b_f = s[:, None] * w1b * bn1_s[None, :]
    w2a_f = s[None, :, None] * w2a * bn2_s[None, None, :]
    w2b_f = s[None, :, None] * w2b * bn2_s[None, None, :]
    w3a_f = s[:, None] * w3a
    w3b_f = s[:, None] * w3b

    # single fused weight: [x1 taps | x2 taps | x1 pooled | x2 pooled] rows
    w_big = np.concatenate([w2a_f.reshape(9 * C, cout),
                            w2b_f.reshape(9 * C, cout),
                            w1a_f, w1b_f], axis=0).astype(np.float32)  # (20C, cout)

    # Position-dependent bias: BN shift pushed through every VALID conv tap
    # (zero-padded border taps of the 3x3 conv must NOT receive the shift).
    c1b = (t @ (w1a + w1b)) * bn1_s + bn1_b                            # (cout,)
    tap_shift = np.einsum('c,kco->ko', t, w2a + w2b)                   # (9, cout)
    valid = np.ones((Ho, Wo, 9), np.float32)
    for kh in range(3):
        for kw in range(3):
            k = kh * 3 + kw
            if kh == 0:
                valid[0, :, k] = 0.0
            if kw == 0:
                valid[:, 0, k] = 0.0
    c2b = np.einsum('hwk,ko->hwo', valid, tap_shift) * bn2_s + bn2_b   # (Ho,Wo,cout)
    bias_map = (c2b + c1b).reshape(Ho * Wo, cout).astype(np.float32)

    b3_f = (t @ (w3a + w3b) + np.asarray(b3)).reshape(1, cout).astype(np.float32)

    return dict(
        # raw parameters (consumed by the pure-JAX reference)
        bn_s=jnp.asarray(bn_s), bn_b=jnp.asarray(bn_b),
        bn1_s=jnp.asarray(bn1_s), bn1_b=jnp.asarray(bn1_b),
        bn2_s=jnp.asarray(bn2_s), bn2_b=jnp.asarray(bn2_b),
        w1_raw=w1_raw, w2_raw=w2_raw, w3_raw=w3_raw, b3=b3,
        # kernel-ready folded parameters
        w_big=jnp.asarray(w_big), bias_map=jnp.asarray(bias_map),
        w3a_f=jnp.asarray(w3a_f.astype(np.float32)),
        w3b_f=jnp.asarray(w3b_f.astype(np.float32)),
        b3_f=jnp.asarray(b3_f),
    )


# --------------------------- pure-JAX reference ----------------------------- #
def reference(x1, x2, P):
    def aff(x, s, b):
        return x * s[None, :, None, None] + b[None, :, None, None]
    a = jnp.concatenate([aff(x1, P["bn_s"], P["bn_b"]),
                         aff(x2, P["bn_s"], P["bn_b"])], axis=1)
    B, CC, H, W = a.shape
    C = CC // 2
    a = a.reshape(B, 2, C, H, W).transpose(0, 2, 1, 3, 4).reshape(B, CC, H, W)
    xp = a.reshape(B, CC, H // 2, 2, W // 2, 2).mean(axis=(3, 5))
    dn = ('NCHW', 'OIHW', 'NCHW')
    x_ = lax.conv_general_dilated(xp, P["w1_raw"], (1, 1), 'VALID',
                                  feature_group_count=2, dimension_numbers=dn)
    x_ = aff(x_, P["bn1_s"], P["bn1_b"])
    y_ = lax.conv_general_dilated(a, P["w2_raw"], (2, 2), [(1, 1), (1, 1)],
                                  feature_group_count=2, dimension_numbers=dn)
    y_ = aff(y_, P["bn2_s"], P["bn2_b"])
    z = a.mean(axis=(2, 3), keepdims=True)
    z = lax.conv_general_dilated(z, P["w3_raw"], (1, 1), 'VALID',
                                 feature_group_count=2, dimension_numbers=dn)
    z = jax.nn.sigmoid(z + P["b3"][None, :, None, None])
    b = (x_ + y_) * z
    return b * jax.nn.sigmoid(b)


if __name__ == "__main__":
    B, C_in, H, W = 4, 4, 16, 16
    C_out = 8
    key = jax.random.PRNGKey(0)
    k1, k2, kp = jax.random.split(key, 3)
    x1 = jax.random.normal(k1, (B, C_in, H, W), jnp.float32)
    x2 = jax.random.normal(k2, (B, C_in, H, W), jnp.float32)
    params = make_params(kp, C_in, C_out, H, W)

    out = fusion_forward(x1, x2, params)
    jax.block_until_ready(out)

    ref = reference(x1, x2, params)
    np.testing.assert_allclose(np.asarray(out), np.asarray(ref),
                               rtol=2e-2, atol=2e-3)
    print("KERNEL_OK")
</pallas_src>

<mosaic_0001>
module attributes {stable_mosaic.version = 11 : i64} {
  func.func @fusion_kernel(%arg0: i32, %arg1: memref<4x2x8x8x4xf32, #tpu.memory_space<vmem>>, %arg2: memref<4x2x8x8x4xf32, #tpu.memory_space<vmem>>, %arg3: memref<80x8xf32, #tpu.memory_space<vmem>>, %arg4: memref<64x8xf32, #tpu.memory_space<vmem>>, %arg5: memref<4x8xf32, #tpu.memory_space<vmem>>, %arg6: memref<4x8xf32, #tpu.memory_space<vmem>>, %arg7: memref<1x8xf32, #tpu.memory_space<vmem>>, %arg8: memref<1x2x512xf32, #tpu.memory_space<vmem>>, %arg9: memref<4x2x9x9x4xf32, #tpu.memory_space<vmem>>, %arg10: memref<4x2x9x9x4xf32, #tpu.memory_space<vmem>>) attributes {dimension_semantics = [#tpu.dimension_semantics<parallel>], iteration_bounds = array<i64: 2>, scalar_prefetch = 0 : i64, scratch_operands = 2 : i64, tpu.core_type = #tpu.core_type<tc>, window_params = [{transform_indices = @transform_0, window_bounds = array<i64: 4, 2, 8, 8, 4>}, {transform_indices = @transform_1, window_bounds = array<i64: 4, 2, 8, 8, 4>}, {pipeline_mode = #tpu.pipeline_mode<synchronous>, transform_indices = @transform_2, window_bounds = array<i64: 80, 8>}, {pipeline_mode = #tpu.pipeline_mode<synchronous>, transform_indices = @transform_3, window_bounds = array<i64: 64, 8>}, {pipeline_mode = #tpu.pipeline_mode<synchronous>, transform_indices = @transform_4, window_bounds = array<i64: 4, 8>}, {pipeline_mode = #tpu.pipeline_mode<synchronous>, transform_indices = @transform_5, window_bounds = array<i64: 4, 8>}, {pipeline_mode = #tpu.pipeline_mode<synchronous>, transform_indices = @transform_6, window_bounds = array<i64: 1, 8>}, {transform_indices = @transform_7, window_bounds = array<i64: 1, 2, 512>}]} {
    %c0 = arith.constant 0 : index
    %c0_0 = arith.constant 0 : index
    %c0_1 = arith.constant 0 : index
    %c0_2 = arith.constant 0 : index
    %c0_3 = arith.constant 0 : index
    %0 = vector.load %arg1[%c0, %c0_0, %c0_1, %c0_2, %c0_3] : memref<4x2x8x8x4xf32, #tpu.memory_space<vmem>>, vector<4x2x8x8x4xf32>
    %c0_4 = arith.constant 0 : index
    %c0_5 = arith.constant 0 : index
    %c0_6 = arith.constant 0 : index
    %c0_7 = arith.constant 0 : index
    %c0_8 = arith.constant 0 : index
    %1 = vector.load %arg2[%c0_4, %c0_5, %c0_6, %c0_7, %c0_8] : memref<4x2x8x8x4xf32, #tpu.memory_space<vmem>>, vector<4x2x8x8x4xf32>
    %cst = arith.constant 0.000000e+00 : f32
    %2 = vector.broadcast %cst : f32 to vector<4x2x1x9x4xf32>
    %cst_9 = arith.constant 0.000000e+00 : f32
    %3 = vector.broadcast %cst_9 : f32 to vector<4x2x9x1x4xf32>
    %c0_10 = arith.constant 0 : index
    %c0_11 = arith.constant 0 : index
    %c0_12 = arith.constant 0 : index
    %c0_13 = arith.constant 0 : index
    %c0_14 = arith.constant 0 : index
    %4 = vector.load %arg9[%c0_10, %c0_11, %c0_12, %c0_13, %c0_14] : memref<4x2x9x9x4xf32, #tpu.memory_space<vmem>>, vector<4x2x1x9x4xf32>
    tpu.vector_store %arg9[%c0_10, %c0_11, %c0_12, %c0_13, %c0_14], %2 {strides = array<i32>} : memref<4x2x9x9x4xf32, #tpu.memory_space<vmem>>, vector<4x2x1x9x4xf32>,
    %c0_15 = arith.constant 0 : index
    %c0_16 = arith.constant 0 : index
    %c0_17 = arith.constant 0 : index
    %c0_18 = arith.constant 0 : index
    %c0_19 = arith.constant 0 : index
    %5 = vector.load %arg9[%c0_15, %c0_16, %c0_17, %c0_18, %c0_19] : memref<4x2x9x9x4xf32, #tpu.memory_space<vmem>>, vector<4x2x9x1x4xf32>
    tpu.vector_store %arg9[%c0_15, %c0_16, %c0_17, %c0_18, %c0_19], %3 {strides = array<i32>} : memref<4x2x9x9x4xf32, #tpu.memory_space<vmem>>, vector<4x2x9x1x4xf32>,
    %c0_20 = arith.constant 0 : index
    %c0_21 = arith.constant 0 : index
    %c0_22 = arith.constant 0 : index
    %c0_23 = arith.constant 0 : index
    %c0_24 = arith.constant 0 : index
    %6 = vector.load %arg10[%c0_20, %c0_21, %c0_22, %c0_23, %c0_24] : memref<4x2x9x9x4xf32, #tpu.memory_space<vmem>>, vector<4x2x1x9x4xf32>
    tpu.vector_store %arg10[%c0_20, %c0_21, %c0_22, %c0_23, %c0_24], %2 {strides = array<i32>} : memref<4x2x9x9x4xf32, #tpu.memory_space<vmem>>, vector<4x2x1x9x4xf32>,
    %c0_25 = arith.constant 0 : index
    %c0_26 = arith.constant 0 : index
    %c0_27 = arith.constant 0 : index
    %c0_28 = arith.constant 0 : index
    %c0_29 = arith.constant 0 : index
    %7 = vector.load %arg10[%c0_25, %c0_26, %c0_27, %c0_28, %c0_29] : memref<4x2x9x9x4xf32, #tpu.memory_space<vmem>>, vector<4x2x9x1x4xf32>
    tpu.vector_store %arg10[%c0_25, %c0_26, %c0_27, %c0_28, %c0_29], %3 {strides = array<i32>} : memref<4x2x9x9x4xf32, #tpu.memory_space<vmem>>, vector<4x2x9x1x4xf32>,
    %c0_30 = arith.constant 0 : index
    %c0_31 = arith.constant 0 : index
    %c1 = arith.constant 1 : index
    %c1_32 = arith.constant 1 : index
    %c0_33 = arith.constant 0 : index
    %8 = vector.load %arg9[%c0_30, %c0_31, %c1, %c1_32, %c0_33] : memref<4x2x9x9x4xf32, #tpu.memory_space<vmem>>, vector<4x2x8x8x4xf32>
    tpu.vector_store %arg9[%c0_30, %c0_31, %c1, %c1_32, %c0_33], %0 {strides = array<i32>} : memref<4x2x9x9x4xf32, #tpu.memory_space<vmem>>, vector<4x2x8x8x4xf32>,
    %c0_34 = arith.constant 0 : index
    %c0_35 = arith.constant 0 : index
    %c1_36 = arith.constant 1 : index
    %c1_37 = arith.constant 1 : index
    %c0_38 = arith.constant 0 : index
    %9 = vector.load %arg10[%c0_34, %c0_35, %c1_36, %c1_37, %c0_38] : memref<4x2x9x9x4xf32, #tpu.memory_space<vmem>>, vector<4x2x8x8x4xf32>
    tpu.vector_store %arg10[%c0_34, %c0_35, %c1_36, %c1_37, %c0_38], %1 {strides = array<i32>} : memref<4x2x9x9x4xf32, #tpu.memory_space<vmem>>, vector<4x2x8x8x4xf32>,
    %c0_39 = arith.constant 0 : index
    %c0_40 = arith.constant 0 : index
    %c0_41 = arith.constant 0 : index
    %c0_42 = arith.constant 0 : index
    %c0_43 = arith.constant 0 : index
    %10 = vector.load %arg9[%c0_39, %c0_40, %c0_41, %c0_42, %c0_43] : memref<4x2x9x9x4xf32, #tpu.memory_space<vmem>>, vector<4x2x9x9x4xf32>
    %c0_44 = arith.constant 0 : index
    %c0_45 = arith.constant 0 : index
    %c0_46 = arith.constant 0 : index
    %c0_47 = arith.constant 0 : index
    %c0_48 = arith.constant 0 : index
    %11 = vector.load %arg10[%c0_44, %c0_45, %c0_46, %c0_47, %c0_48] : memref<4x2x9x9x4xf32, #tpu.memory_space<vmem>>, vector<4x2x9x9x4xf32>
    %12 = vector.extract_strided_slice %0 {offsets = [0, 0, 0, 0, 0], sizes = [1, 2, 8, 8, 4], strides = [1, 1, 1, 1, 1]} : vector<4x2x8x8x4xf32> to vector<1x2x8x8x4xf32>
    %13 = vector.shape_cast %12 : vector<1x2x8x8x4xf32> to vector<2x8x8x4xf32>
    %14 = vector.extract_strided_slice %0 {offsets = [1, 0, 0, 0, 0], sizes = [1, 2, 8, 8, 4], strides = [1, 1, 1, 1, 1]} : vector<4x2x8x8x4xf32> to vector<1x2x8x8x4xf32>
    %15 = vector.shape_cast %14 : vector<1x2x8x8x4xf32> to vector<2x8x8x4xf32>
    %16 = arith.addf %13, %15 : vector<2x8x8x4xf32>
    %17 = vector.extract_strided_slice %0 {offsets = [2, 0, 0, 0, 0], sizes = [1, 2, 8, 8, 4], strides = [1, 1, 1, 1, 1]} : vector<4x2x8x8x4xf32> to vector<1x2x8x8x4xf32>
    %18 = vector.shape_cast %17 : vector<1x2x8x8x4xf32> to vector<2x8x8x4xf32>
    %19 = arith.addf %16, %18 : vector<2x8x8x4xf32>
    %20 = vector.extract_strided_slice %0 {offsets = [3, 0, 0, 0, 0], sizes = [1, 2, 8, 8, 4], strides = [1, 1, 1, 1, 1]} : vector<4x2x8x8x4xf32> to vector<1x2x8x8x4xf32>
    %21 = vector.shape_cast %20 : vector<1x2x8x8x4xf32> to vector<2x8x8x4xf32>
    %22 = arith.addf %19, %21 : vector<2x8x8x4xf32>
    %cst_49 = arith.constant 2.500000e-01 : f32
    %23 = vector.broadcast %cst_49 : f32 to vector<2x8x8x4xf32>
    %24 = arith.mulf %22, %23 : vector<2x8x8x4xf32>
    %25 = vector.extract_strided_slice %1 {offsets = [0, 0, 0, 0, 0], sizes = [1, 2, 8, 8, 4], strides = [1, 1, 1, 1, 1]} : vector<4x2x8x8x4xf32> to vector<1x2x8x8x4xf32>
    %26 = vector.shape_cast %25 : vector<1x2x8x8x4xf32> to vector<2x8x8x4xf32>
    %27 = vector.extract_strided_slice %1 {offsets = [1, 0, 0, 0, 0], sizes = [1, 2, 8, 8, 4], strides = [1, 1, 1, 1, 1]} : vector<4x2x8x8x4xf32> to vector<1x2x8x8x4xf32>
    %28 = vector.shape_cast %27 : vector<1x2x8x8x4xf32> to vector<2x8x8x4xf32>
    %29 = arith.addf %26, %28 : vector<2x8x8x4xf32>
    %30 = vector.extract_strided_slice %1 {offsets = [2, 0, 0, 0, 0], sizes = [1, 2, 8, 8, 4], strides = [1, 1, 1, 1, 1]} : vector<4x2x8x8x4xf32> to vector<1x2x8x8x4xf32>
    %31 = vector.shape_cast %30 : vector<1x2x8x8x4xf32> to vector<2x8x8x4xf32>
    %32 = arith.addf %29, %31 : vector<2x8x8x4xf32>
    %33 = vector.extract_strided_slice %1 {offsets = [3, 0, 0, 0, 0], sizes = [1, 2, 8, 8, 4], strides = [1, 1, 1, 1, 1]} : vector<4x2x8x8x4xf32> to vector<1x2x8x8x4xf32>
    %34 = vector.shape_cast %33 : vector<1x2x8x8x4xf32> to vector<2x8x8x4xf32>
    %35 = arith.addf %32, %34 : vector<2x8x8x4xf32>
    %cst_50 = arith.constant 2.500000e-01 : f32
    %36 = vector.broadcast %cst_50 : f32 to vector<2x8x8x4xf32>
    %37 = arith.mulf %35, %36 : vector<2x8x8x4xf32>
    %38 = vector.extract_strided_slice %10 {offsets = [3, 0, 0, 0, 0], sizes = [1, 2, 8, 8, 4], strides = [1, 1, 1, 1, 1]} : vector<4x2x9x9x4xf32> to vector<1x2x8x8x4xf32>
    %39 = vector.shape_cast %38 : vector<1x2x8x8x4xf32> to vector<2x8x8x4xf32>
    %40 = vector.extract_strided_slice %10 {offsets = [2, 0, 0, 1, 0], sizes = [1, 2, 8, 8, 4], strides = [1, 1, 1, 1, 1]} : vector<4x2x9x9x4xf32> to vector<1x2x8x8x4xf32>
    %41 = vector.shape_cast %40 : vector<1x2x8x8x4xf32> to vector<2x8x8x4xf32>
    %42 = vector.extract_strided_slice %10 {offsets = [3, 0, 0, 1, 0], sizes = [1, 2, 8, 8, 4], strides = [1, 1, 1, 1, 1]} : vector<4x2x9x9x4xf32> to vector<1x2x8x8x4xf32>
    %43 = vector.shape_cast %42 : vector<1x2x8x8x4xf32> to vector<2x8x8x4xf32>
    %44 = vector.extract_strided_slice %10 {offsets = [1, 0, 1, 0, 0], sizes = [1, 2, 8, 8, 4], strides = [1, 1, 1, 1, 1]} : vector<4x2x9x9x4xf32> to vector<1x2x8x8x4xf32>
    %45 = vector.shape_cast %44 : vector<1x2x8x8x4xf32> to vector<2x8x8x4xf32>
    %46 = vector.extract_strided_slice %10 {offsets = [0, 0, 1, 1, 0], sizes = [1, 2, 8, 8, 4], strides = [1, 1, 1, 1, 1]} : vector<4x2x9x9x4xf32> to vector<1x2x8x8x4xf32>
    %47 = vector.shape_cast %46 : vector<1x2x8x8x4xf32> to vector<2x8x8x4xf32>
    %48 = vector.extract_strided_slice %10 {offsets = [1, 0, 1, 1, 0], sizes = [1, 2, 8, 8, 4], strides = [1, 1, 1, 1, 1]} : vector<4x2x9x9x4xf32> to vector<1x2x8x8x4xf32>
    %49 = vector.shape_cast %48 : vector<1x2x8x8x4xf32> to vector<2x8x8x4xf32>
    %50 = vector.extract_strided_slice %10 {offsets = [3, 0, 1, 0, 0], sizes = [1, 2, 8, 8, 4], strides = [1, 1, 1, 1, 1]} : vector<4x2x9x9x4xf32> to vector<1x2x8x8x4xf32>
    %51 = vector.shape_cast %50 : vector<1x2x8x8x4xf32> to vector<2x8x8x4xf32>
    %52 = vector.extract_strided_slice %10 {offsets = [2, 0, 1, 1, 0], sizes = [1, 2, 8, 8, 4], strides = [1, 1, 1, 1, 1]} : vector<4x2x9x9x4xf32> to vector<1x2x8x8x4xf32>
    %53 = vector.shape_cast %52 : vector<1x2x8x8x4xf32> to vector<2x8x8x4xf32>
    %54 = vector.extract_strided_slice %10 {offsets = [3, 0, 1, 1, 0], sizes = [1, 2, 8, 8, 4], strides = [1, 1, 1, 1, 1]} : vector<4x2x9x9x4xf32> to vector<1x2x8x8x4xf32>
    %55 = vector.shape_cast %54 : vector<1x2x8x8x4xf32> to vector<2x8x8x4xf32>
    %56 = vector.extract_strided_slice %11 {offsets = [3, 0, 0, 0, 0], sizes = [1, 2, 8, 8, 4], strides = [1, 1, 1, 1, 1]} : vector<4x2x9x9x4xf32> to vector<1x2x8x8x4xf32>
    %57 = vector.shape_cast %56 : vector<1x2x8x8x4xf32> to vector<2x8x8x4xf32>
    %58 = vector.extract_strided_slice %11 {offsets = [2, 0, 0, 1, 0], sizes = [1, 2, 8, 8, 4], strides = [1, 1, 1, 1, 1]} : vector<4x2x9x9x4xf32> to vector<1x2x8x8x4xf32>
    %59 = vector.shape_cast %58 : vector<1x2x8x8x4xf32> to vector<2x8x8x4xf32>
    %60 = vector.extract_strided_slice %11 {offsets = [3, 0, 0, 1, 0], sizes = [1, 2, 8, 8, 4], strides = [1, 1, 1, 1, 1]} : vector<4x2x9x9x4xf32> to vector<1x2x8x8x4xf32>
    %61 = vector.shape_cast %60 : vector<1x2x8x8x4xf32> to vector<2x8x8x4xf32>
    %62 = vector.extract_strided_slice %11 {offsets = [1, 0, 1, 0, 0], sizes = [1, 2, 8, 8, 4], strides = [1, 1, 1, 1, 1]} : vector<4x2x9x9x4xf32> to vector<1x2x8x8x4xf32>
    %63 = vector.shape_cast %62 : vector<1x2x8x8x4xf32> to vector<2x8x8x4xf32>
    %64 = vector.extract_strided_slice %11 {offsets = [0, 0, 1, 1, 0], sizes = [1, 2, 8, 8, 4], strides = [1, 1, 1, 1, 1]} : vector<4x2x9x9x4xf32> to vector<1x2x8x8x4xf32>
    %65 = vector.shape_cast %64 : vector<1x2x8x8x4xf32> to vector<2x8x8x4xf32>
    %66 = vector.extract_strided_slice %11 {offsets = [1, 0, 1, 1, 0], sizes = [1, 2, 8, 8, 4], strides = [1, 1, 1, 1, 1]} : vector<4x2x9x9x4xf32> to vector<1x2x8x8x4xf32>
    %67 = vector.shape_cast %66 : vector<1x2x8x8x4xf32> to vector<2x8x8x4xf32>
    %68 = vector.extract_strided_slice %11 {offsets = [3, 0, 1, 0, 0], sizes = [1, 2, 8, 8, 4], strides = [1, 1, 1, 1, 1]} : vector<4x2x9x9x4xf32> to vector<1x2x8x8x4xf32>
    %69 = vector.shape_cast %68 : vector<1x2x8x8x4xf32> to vector<2x8x8x4xf32>
    %70 = vector.extract_strided_slice %11 {offsets = [2, 0, 1, 1, 0], sizes = [1, 2, 8, 8, 4], strides = [1, 1, 1, 1, 1]} : vector<4x2x9x9x4xf32> to vector<1x2x8x8x4xf32>
    %71 = vector.shape_cast %70 : vector<1x2x8x8x4xf32> to vector<2x8x8x4xf32>
    %72 = vector.extract_strided_slice %11 {offsets = [3, 0, 1, 1, 0], sizes = [1, 2, 8, 8, 4], strides = [1, 1, 1, 1, 1]} : vector<4x2x9x9x4xf32> to vector<1x2x8x8x4xf32>
    %73 = vector.shape_cast %72 : vector<1x2x8x8x4xf32> to vector<2x8x8x4xf32>
    %74 = tpu.concatenate %39, %41, %43, %45, %47, %49, %51, %53, %55, %57, %59, %61, %63, %65, %67, %69 in 3 : vector<2x8x8x4xf32>, vector<2x8x8x4xf32>, vector<2x8x8x4xf32>, vector<2x8x8x4xf32>, vector<2x8x8x4xf32>, vector<2x8x8x4xf32>, vector<2x8x8x4xf32>, vector<2x8x8x4xf32>, vector<2x8x8x4xf32>, vector<2x8x8x4xf32>, vector<2x8x8x4xf32>, vector<2x8x8x4xf32>, vector<2x8x8x4xf32>, vector<2x8x8x4xf32>, vector<2x8x8x4xf32>, vector<2x8x8x4xf32> -> vector<2x8x8x64xf32>
    %75 = tpu.concatenate %71, %73, %24, %37 in 3 : vector<2x8x8x4xf32>, vector<2x8x8x4xf32>, vector<2x8x8x4xf32>, vector<2x8x8x4xf32> -> vector<2x8x8x16xf32>
    %76 = tpu.concatenate %74, %75 in 3 : vector<2x8x8x64xf32>, vector<2x8x8x16xf32> -> vector<2x8x8x80xf32>
    %77 = vector.shape_cast %76 : vector<2x8x8x80xf32> to vector<128x80xf32>
    %c0_51 = arith.constant 0 : index
    %c0_52 = arith.constant 0 : index
    %78 = vector.load %arg3[%c0_51, %c0_52] : memref<80x8xf32, #tpu.memory_space<vmem>>, vector<80x8xf32>
    %cst_53 = arith.constant dense<0.000000e+00> : vector<128x8xf32>
    %79 = tpu.matmul %77, %78, %cst_53 {dimension_numbers = #tpu.dot_dimension_numbers<[1], [0], [0], [1], [0, 0, 1, 1], [], []>} : vector<128x80xf32>, vector<80x8xf32>, vector<128x8xf32> -> vector<128x8xf32>
    %80 = vector.shape_cast %79 : vector<128x8xf32> to vector<2x64x8xf32>
    %c0_54 = arith.constant 0 : index
    %c0_55 = arith.constant 0 : index
    %81 = vector.load %arg4[%c0_54, %c0_55] : memref<64x8xf32, #tpu.memory_space<vmem>>, vector<64x8xf32>
    %82 = vector.shape_cast %81 : vector<64x8xf32> to vector<1x64x8xf32>
    %83 = vector.broadcast %82 : vector<1x64x8xf32> to vector<2x64x8xf32>
    %84 = arith.addf %80, %83 : vector<2x64x8xf32>
    %cst_56 = arith.constant dense<0.000000e+00> : vector<2x4xf32>
    %85 = vector.multi_reduction <add>, %24, %cst_56 [1, 2] : vector<2x8x8x4xf32> to vector<2x4xf32>
    %cst_57 = arith.constant 6.400000e+01 : f32
    %86 = vector.broadcast %cst_57 : f32 to vector<2x4xf32>
    %87 = arith.divf %85, %86 : vector<2x4xf32>
    %cst_58 = arith.constant dense<0.000000e+00> : vector<2x4xf32>
    %88 = vector.multi_reduction <add>, %37, %cst_58 [1, 2] : vector<2x8x8x4xf32> to vector<2x4xf32>
    %cst_59 = arith.constant 6.400000e+01 : f32
    %89 = vector.broadcast %cst_59 : f32 to vector<2x4xf32>
    %90 = arith.divf %88, %89 : vector<2x4xf32>
    %c0_60 = arith.constant 0 : index
    %c0_61 = arith.constant 0 : index
    %91 = vector.load %arg5[%c0_60, %c0_61] : memref<4x8xf32, #tpu.memory_space<vmem>>, vector<4x8xf32>
    %cst_62 = arith.constant dense<0.000000e+00> : vector<2x8xf32>
    %92 = tpu.matmul %87, %91, %cst_62 {dimension_numbers = #tpu.dot_dimension_numbers<[1], [0], [0], [1], [0, 0, 1, 1], [], []>} : vector<2x4xf32>, vector<4x8xf32>, vector<2x8xf32> -> vector<2x8xf32>
    %c0_63 = arith.constant 0 : index
    %c0_64 = arith.constant 0 : index
    %93 = vector.load %arg6[%c0_63, %c0_64] : memref<4x8xf32, #tpu.memory_space<vmem>>, vector<4x8xf32>
    %cst_65 = arith.constant dense<0.000000e+00> : vector<2x8xf32>
    %94 = tpu.matmul %90, %93, %cst_65 {dimension_numbers = #tpu.dot_dimension_numbers<[1], [0], [0], [1], [0, 0, 1, 1], [], []>} : vector<2x4xf32>, vector<4x8xf32>, vector<2x8xf32> -> vector<2x8xf32>
    %95 = arith.addf %92, %94 : vector<2x8xf32>
    %c0_66 = arith.constant 0 : index
    %c0_67 = arith.constant 0 : index
    %96 = vector.load %arg7[%c0_66, %c0_67] : memref<1x8xf32, #tpu.memory_space<vmem>>, vector<1x8xf32>
    %97 = vector.broadcast %96 : vector<1x8xf32> to vector<2x8xf32>
    %98 = arith.addf %95, %97 : vector<2x8xf32>
    %99 = arith.negf %98 : vector<2x8xf32>
    %100 = math.exp %99 : vector<2x8xf32>
    %cst_68 = arith.constant 1.000000e+00 : f32
    %101 = vector.broadcast %cst_68 : f32 to vector<2x8xf32>
    %102 = arith.addf %101, %100 : vector<2x8xf32>
    %103 = arith.divf %101, %102 : vector<2x8xf32>
    %104 = vector.shape_cast %103 : vector<2x8xf32> to vector<2x1x8xf32>
    %105 = vector.broadcast %104 : vector<2x1x8xf32> to vector<2x64x8xf32>
    %106 = arith.mulf %84, %105 : vector<2x64x8xf32>
    %107 = arith.negf %106 : vector<2x64x8xf32>
    %108 = math.exp %107 : vector<2x64x8xf32>
    %cst_69 = arith.constant 1.000000e+00 : f32
    %109 = vector.broadcast %cst_69 : f32 to vector<2x64x8xf32>
    %110 = arith.addf %109, %108 : vector<2x64x8xf32>
    %111 = arith.divf %109, %110 : vector<2x64x8xf32>
    %112 = arith.mulf %106, %111 : vector<2x64x8xf32>
    %113 = vector.shape_cast %112 : vector<2x64x8xf32> to vector<2x512xf32>
    %c0_70 = arith.constant 0 : index
    %c0_71 = arith.constant 0 : index
    %c0_72 = arith.constant 0 : index
    %114 = vector.load %arg8[%c0_70, %c0_71, %c0_72] : memref<1x2x512xf32, #tpu.memory_space<vmem>>, vector<1x2x512xf32>
    %115 = vector.shape_cast %114 : vector<1x2x512xf32> to vector<2x512xf32>
    %116 = vector.shape_cast %113 : vector<2x512xf32> to vector<1x2x512xf32>
    tpu.vector_store %arg8[%c0_70, %c0_71, %c0_72], %116 {strides = array<i32>} : memref<1x2x512xf32, #tpu.memory_space<vmem>>, vector<1x2x512xf32>,
    return
  }
  func.func @transform_0(%arg0: i32) -> (i32, i32, i32, i32, i32) {
    %c0_i32 = arith.constant 0 : i32
    %c0_i32_0 = arith.constant 0 : i32
    %c0_i32_1 = arith.constant 0 : i32
    %c0_i32_2 = arith.constant 0 : i32
    %c0_i32_3 = arith.constant 0 : i32
    return %c0_i32, %arg0, %c0_i32_0, %c0_i32_1, %c0_i32_2 : i32, i32, i32, i32, i32
  }
  func.func @transform_1(%arg0: i32) -> (i32, i32, i32, i32, i32) {
    %c0_i32 = arith.constant 0 : i32
    %c0_i32_0 = arith.constant 0 : i32
    %c0_i32_1 = arith.constant 0 : i32
    %c0_i32_2 = arith.constant 0 : i32
    %c0_i32_3 = arith.constant 0 : i32
    return %c0_i32, %arg0, %c0_i32_0, %c0_i32_1, %c0_i32_2 : i32, i32, i32, i32, i32
  }
  func.func @transform_2(%arg0: i32) -> (i32, i32) {
    %c0_i32 = arith.constant 0 : i32
    %c0_i32_0 = arith.constant 0 : i32
    %c0_i32_1 = arith.constant 0 : i32
    return %c0_i32, %c0_i32_0 : i32, i32
  }
  func.func @transform_3(%arg0: i32) -> (i32, i32) {
    %c0_i32 = arith.constant 0 : i32
    %c0_i32_0 = arith.constant 0 : i32
    %c0_i32_1 = arith.constant 0 : i32
    return %c0_i32, %c0_i32_0 : i32, i32
  }
  func.func @transform_4(%arg0: i32) -> (i32, i32) {
    %c0_i32 = arith.constant 0 : i32
    %c0_i32_0 = arith.constant 0 : i32
    %c0_i32_1 = arith.constant 0 : i32
    return %c0_i32, %c0_i32_0 : i32, i32
  }
  func.func @transform_5(%arg0: i32) -> (i32, i32) {
    %c0_i32 = arith.constant 0 : i32
    %c0_i32_0 = arith.constant 0 : i32
    %c0_i32_1 = arith.constant 0 : i32
    return %c0_i32, %c0_i32_0 : i32, i32
  }
  func.func @transform_6(%arg0: i32) -> (i32, i32) {
    %c0_i32 = arith.constant 0 : i32
    %c0_i32_0 = arith.constant 0 : i32
    %c0_i32_1 = arith.constant 0 : i32
    return %c0_i32, %c0_i32_0 : i32, i32
  }
  func.func @transform_7(%arg0: i32) -> (i32, i32, i32) {
    %c0_i32 = arith.constant 0 : i32
    %c0_i32_0 = arith.constant 0 : i32
    %c0_i32_1 = arith.constant 0 : i32
    return %arg0, %c0_i32, %c0_i32_0 : i32, i32, i32
  }
}

</mosaic_0001>

<llo_original>
// kernel: tpu_custom_call.1
$region0: #{tpu_custom_call.1}
  #allocation0 [shape = 'u32[]', space=smem, size = 0x4, offset = 0x4, fixed_abs, tag = 'smem constant byte address 0x4 - core index']
  #allocation1 [shape = 'u32[144,128]{1,0:T(1,128)}', space=vmem, size = 0x12000, scoped, tag = 'internal scratch']
  #allocation2 [shape = 'f32[4,2,9,9,4]{4,3,2,1,0:T(8,128)}', space=vmem, size = 0x90000, scoped, tag = 'scratch operand']
  #allocation3 [shape = 'f32[4,2,9,9,4]{4,3,2,1,0:T(8,128)}', space=vmem, size = 0x90000, scoped, tag = 'scratch operand']
  %s0 = inlined_call_operand.vmem [shape: f32[4,4,8,8,4], index: 0, kind: input, shape index: {}]
  %s1 = inlined_call_operand.vmem [shape: f32[4,4,8,8,4], index: 1, kind: input, shape index: {}]
  %s2 = inlined_call_operand.vmem [shape: f32[80,8], index: 2, kind: input, shape index: {}]
  %s3 = inlined_call_operand.vmem [shape: f32[64,8], index: 3, kind: input, shape index: {}]
  %s4 = inlined_call_operand.vmem [shape: f32[4,8], index: 4, kind: input, shape index: {}]
  %s5 = inlined_call_operand.vmem [shape: f32[4,8], index: 5, kind: input, shape index: {}]
  %s6 = inlined_call_operand.vmem [shape: f32[1,8], index: 6, kind: input, shape index: {}]
  %s7 = inlined_call_operand.hbm [shape: f32[2,2,512], index: 7, kind: output, shape index: {}]
  %s8 = sld [smem:[#allocation0]]
  $region137: #{tpu_custom_call.1} parent=0
    _
  %s10 = ssub.s32 1, %s8
  %s11 = scalar_select 0, %s10, %s8
  $region1: #{tpu_custom_call.1} parent=0
    #allocation4 [shape = 'u8[524288]{0}', space=vmem, size = 0x80000, scoped, tag = 'input window, operand 0']
    #allocation5 [shape = 'u8[524288]{0}', space=vmem, size = 0x80000, scoped, tag = 'input window, operand 1']
    #allocation6 [shape = 'u8[8192]{0}', space=vmem, size = 0x2000, scoped, tag = 'output window, operand 0']
    #allocation7 [shape = 's32[2]{0}', space=sflag, size = 0x8, scoped, tag = 'scoped memory for tpu_custom_call.1']
    %12 = vsyncpa [#allocation7], 0
    %s13 = scalar_lea.sflag [#allocation7], 1
    %14 = vsyncpa %s13, 0
    loop: start=0, step=1, limit=4
    $region2: #{tpu_custom_call.1} parent=1 // loop_pre_header
      _
    $region3: #{tpu_custom_call.1} parent=1 // loop_header
      %s16 = sphi 0, %s20
      %p17 = scmp.ge.s32.totalorder %s16, 4
      %s26 = sphi 0, %s28
      %s29 = sphi 0, %s26
      %s30 = sphi 0, %s29
      %s46 = sphi 0, %s30
      %s52 = sphi 0, %s54
      %s55 = sphi 0, %s52
      %s56 = sphi 0, %s55
      %s72 = sphi 0, %s56
      %s76 = sphi 0, %s76
      %s78 = sphi 0, %s76
      %s79 = sphi 0, %s78
      %s93 = sphi 0, %s79
      %s97 = sphi 0, %s97
      %s99 = sphi 0, %s97
      %s100 = sphi 0, %s99
      %s114 = sphi 0, %s100
      %s118 = sphi 0, %s118
      %s120 = sphi 0, %s118
      %s121 = sphi 0, %s120
      %s135 = sphi 0, %s121
      %s139 = sphi 0, %s139
      %s141 = sphi 0, %s139
      %s142 = sphi 0, %s141
      %s156 = sphi 0, %s142
      %s160 = sphi 0, %s160
      %s162 = sphi 0, %s160
      %s163 = sphi 0, %s162
      %s177 = sphi 0, %s163
      %s183 = sphi 0, %s185
      %s186 = sphi 0, %s183
      %s187 = sphi 0, %s186
      %s203 = sphi 0, %s187
    $region4: #{tpu_custom_call.1} parent=1 // loop_header_branch
      %19 = sbr.rel (%p17) target = $region8
    $region5: #{tpu_custom_call.1} parent=1 // loop_body
      %s21 = ssub.s32 %s16, 1
      %s22 = ssub.s32 %s16, 2
      %s23 = sadd.s32 %s16, 1
      %s24 = ssub.s32 %s16, %s23
      %p25 = scmp.eq.s32.totalorder %s24, 0
      %s27 = sadd.s32 %s26, 1
      %s28 = scalar_select %p25, %s26, %s27
      %p31 = pneg %p25
      %p32 = scmp.eq.s32.totalorder %s16, 1
      %p33 = por %p31, %p32
      %p34 = scmp.ne.s32.totalorder %s26, %s29
      %p35 = scmp.eq.s32.totalorder %s16, 0
      %p36 = por %p34, %p35
      %p37 = scmp.ne.s32.totalorder %s26, %s29
      %p38 = scmp.eq.s32.totalorder %s21, 1
      %p39 = por %p37, %p38
      %p40 = scmp.ne.s32.totalorder %s29, %s30
      %p41 = scmp.eq.s32.totalorder %s21, 0
      %p42 = por %p40, %p41
      %p43 = scmp.ne.s32.totalorder %s29, %s30
      %p44 = scmp.eq.s32.totalorder %s22, 1
      %p45 = por %p43, %p44
      %p47 = scmp.ne.s32.totalorder %s30, %s46
      %p48 = scmp.eq.s32.totalorder %s22, 0
      %p49 = por %p47, %p48
      %s50 = ssub.s32 %s16, %s23
      %p51 = scmp.eq.s32.totalorder %s50, 0
      %s53 = sadd.s32 %s52, 1
      %s54 = scalar_select %p51, %s52, %s53
      %p57 = pneg %p51
      %p58 = scmp.eq.s32.totalorder %s16, 1
      %p59 = por %p57, %p58
      %p60 = scmp.ne.s32.totalorder %s52, %s55
      %p61 = scmp.eq.s32.totalorder %s16, 0
      %p62 = por %p60, %p61
      %p63 = scmp.ne.s32.totalorder %s52, %s55
      %p64 = scmp.eq.s32.totalorder %s21, 1
      %p65 = por %p63, %p64
      %p66 = scmp.ne.s32.totalorder %s55, %s56
      %p67 = scmp.eq.s32.totalorder %s21, 0
      %p68 = por %p66, %p67
      %p69 = scmp.ne.s32.totalorder %s55, %s56
      %p70 = scmp.eq.s32.totalorder %s22, 1
      %p71 = por %p69, %p70
      %p73 = scmp.ne.s32.totalorder %s56, %s72
      %p74 = scmp.eq.s32.totalorder %s22, 0
      %p75 = por %p73, %p74
      %s77 = sadd.s32 %s76, 1
      %p80 = scmp.eq.s32.totalorder %s16, 1
      %p81 = scmp.ne.s32.totalorder %s76, %s78
      %p82 = scmp.eq.s32.totalorder %s16, 0
      %p83 = por %p81, %p82
      %p84 = scmp.ne.s32.totalorder %s76, %s78
      %p85 = scmp.eq.s32.totalorder %s21, 1
      %p86 = por %p84, %p85
      %p87 = scmp.ne.s32.totalorder %s78, %s79
      %p88 = scmp.eq.s32.totalorder %s21, 0
      %p89 = por %p87, %p88
      %p90 = scmp.ne.s32.totalorder %s78, %s79
      %p91 = scmp.eq.s32.totalorder %s22, 1
      %p92 = por %p90, %p91
      %p94 = scmp.ne.s32.totalorder %s79, %s93
      %p95 = scmp.eq.s32.totalorder %s22, 0
      %p96 = por %p94, %p95
      %s98 = sadd.s32 %s97, 1
      %p101 = scmp.eq.s32.totalorder %s16, 1
      %p102 = scmp.ne.s32.totalorder %s97, %s99
      %p103 = scmp.eq.s32.totalorder %s16, 0
      %p104 = por %p102, %p103
      %p105 = scmp.ne.s32.totalorder %s97, %s99
      %p106 = scmp.eq.s32.totalorder %s21, 1
      %p107 = por %p105, %p106
      %p108 = scmp.ne.s32.totalorder %s99, %s100
      %p109 = scmp.eq.s32.totalorder %s21, 0
      %p110 = por %p108, %p109
      %p111 = scmp.ne.s32.totalorder %s99, %s100
      %p112 = scmp.eq.s32.totalorder %s22, 1
      %p113 = por %p111, %p112
      %p115 = scmp.ne.s32.totalorder %s100, %s114
      %p116 = scmp.eq.s32.totalorder %s22, 0
      %p117 = por %p115, %p116
      %s119 = sadd.s32 %s118, 1
      %p122 = scmp.eq.s32.totalorder %s16, 1
      %p123 = scmp.ne.s32.totalorder %s118, %s120
      %p124 = scmp.eq.s32.totalorder %s16, 0
      %p125 = por %p123, %p124
      %p126 = scmp.ne.s32.totalorder %s118, %s120
      %p127 = scmp.eq.s32.totalorder %s21, 1
      %p128 = por %p126, %p127
      %p129 = scmp.ne.s32.totalorder %s120, %s121
      %p130 = scmp.eq.s32.totalorder %s21, 0
      %p131 = por %p129, %p130
      %p132 = scmp.ne.s32.totalorder %s120, %s121
      %p133 = scmp.eq.s32.totalorder %s22, 1
      %p134 = por %p132, %p133
      %p136 = scmp.ne.s32.totalorder %s121, %s135
      %p137 = scmp.eq.s32.totalorder %s22, 0
      %p138 = por %p136, %p137
      %s140 = sadd.s32 %s139, 1
      %p143 = scmp.eq.s32.totalorder %s16, 1
      %p144 = scmp.ne.s32.totalorder %s139, %s141
      %p145 = scmp.eq.s32.totalorder %s16, 0
      %p146 = por %p144, %p145
      %p147 = scmp.ne.s32.totalorder %s139, %s141
      %p148 = scmp.eq.s32.totalorder %s21, 1
      %p149 = por %p147, %p148
      %p150 = scmp.ne.s32.totalorder %s141, %s142
      %p151 = scmp.eq.s32.totalorder %s21, 0
      %p152 = por %p150, %p151
      %p153 = scmp.ne.s32.totalorder %s141, %s142
      %p154 = scmp.eq.s32.totalorder %s22, 1
      %p155 = por %p153, %p154
      %p157 = scmp.ne.s32.totalorder %s142, %s156
      %p158 = scmp.eq.s32.totalorder %s22, 0
      %p159 = por %p157, %p158
      %s161 = sadd.s32 %s160, 1
      %p164 = scmp.eq.s32.totalorder %s16, 1
      %p165 = scmp.ne.s32.totalorder %s160, %s162
      %p166 = scmp.eq.s32.totalorder %s16, 0
      %p167 = por %p165, %p166
      %p168 = scmp.ne.s32.totalorder %s160, %s162
      %p169 = scmp.eq.s32.totalorder %s21, 1
      %p170 = por %p168, %p169
      %p171 = scmp.ne.s32.totalorder %s162, %s163
      %p172 = scmp.eq.s32.totalorder %s21, 0
      %p173 = por %p171, %p172
      %p174 = scmp.ne.s32.totalorder %s162, %s163
      %p175 = scmp.eq.s32.totalorder %s22, 1
      %p176 = por %p174, %p175
      %p178 = scmp.ne.s32.totalorder %s163, %s177
      %p179 = scmp.eq.s32.totalorder %s22, 0
      %p180 = por %p178, %p179
      %s181 = ssub.s32 %s16, %s23
      %p182 = scmp.eq.s32.totalorder %s181, 0
      %s184 = sadd.s32 %s183, 1
      %s185 = scalar_select %p182, %s183, %s184
      %p188 = pneg %p182
      %p189 = scmp.eq.s32.totalorder %s16, 1
      %p190 = por %p188, %p189
      %p191 = scmp.ne.s32.totalorder %s183, %s186
      %p192 = scmp.eq.s32.totalorder %s16, 0
      %p193 = por %p191, %p192
      %p194 = scmp.ne.s32.totalorder %s183, %s186
      %p195 = scmp.eq.s32.totalorder %s21, 1
      %p196 = por %p194, %p195
      %p197 = scmp.ne.s32.totalorder %s186, %s187
      %p198 = scmp.eq.s32.totalorder %s21, 0
      %p199 = por %p197, %p198
      %p200 = scmp.ne.s32.totalorder %s186, %s187
      %p201 = scmp.eq.s32.totalorder %s22, 1
      %p202 = por %p200, %p201
      %p204 = scmp.ne.s32.totalorder %s187, %s203
      %p205 = scmp.eq.s32.totalorder %s22, 0
      %p206 = por %p204, %p205
      %p207 = scmp.le.s32.totalorder 1, %s16
      %p208 = scmp.lt.s32.totalorder %s16, 3
      %p209 = pnand %p207, %p208
      %p210 = pneg %p209
      // Predicated region
      $region9: #{tpu_custom_call.1} parent=5 // pred_check
        _
      $region10: #{tpu_custom_call.1} parent=5 // pred_check_branch
        %212 = sbr.rel (%p209) target = $region12
      $region11: #{tpu_custom_call.1} parent=5 // pred_region
        %s213 = ssub.s32 %s16, 1
        // Predicated region
        $region13: #{tpu_custom_call.1} parent=11 // pred_check
          %p214 = pneg %p89
        $region14: #{tpu_custom_call.1} parent=11 // pred_check_branch
          %216 = sbr.rel (%p214) target = $region16
        $region15: #{tpu_custom_call.1} parent=11 // pred_region
          _
        $region16: #{tpu_custom_call.1} parent=11 // pred_fallthru
          _
        // Predicated region
        $region17: #{tpu_custom_call.1} parent=11 // pred_check
          %p217 = pneg %p110
        $region18: #{tpu_custom_call.1} parent=11 // pred_check_branch
          %219 = sbr.rel (%p217) target = $region20
        $region19: #{tpu_custom_call.1} parent=11 // pred_region
          _
        $region20: #{tpu_custom_call.1} parent=11 // pred_fallthru
          _
        // Predicated region
        $region21: #{tpu_custom_call.1} parent=11 // pred_check
          %p220 = pneg %p131
        $region22: #{tpu_custom_call.1} parent=11 // pred_check_branch
          %222 = sbr.rel (%p220) target = $region24
        $region23: #{tpu_custom_call.1} parent=11 // pred_region
          _
        $region24: #{tpu_custom_call.1} parent=11 // pred_fallthru
          _
        // Predicated region
        $region25: #{tpu_custom_call.1} parent=11 // pred_check
          %p223 = pneg %p152
        $region26: #{tpu_custom_call.1} parent=11 // pred_check_branch
          %225 = sbr.rel (%p223) target = $region28
        $region27: #{tpu_custom_call.1} parent=11 // pred_region
          _
        $region28: #{tpu_custom_call.1} parent=11 // pred_fallthru
          _
        // Predicated region
        $region29: #{tpu_custom_call.1} parent=11 // pred_check
          %p226 = pneg %p173
        $region30: #{tpu_custom_call.1} parent=11 // pred_check_branch
          %228 = sbr.rel (%p226) target = $region32
        $region31: #{tpu_custom_call.1} parent=11 // pred_region
          _
        $region32: #{tpu_custom_call.1} parent=11 // pred_fallthru
          _
      $region12: #{tpu_custom_call.1} parent=5 // pred_fallthru
        _
      %p229 = scmp.lt.s32.totalorder %s16, 2
      // Predicated region
      $region33: #{tpu_custom_call.1} parent=5 // pred_check
        %p230 = pneg %p229
      $region34: #{tpu_custom_call.1} parent=5 // pred_check_branch
        %232 = sbr.rel (%p230) target = $region36
      $region35: #{tpu_custom_call.1} parent=5 // pred_region
        // Predicated region
        $region37: #{tpu_custom_call.1} parent=35 // pred_check
          %p233 = pneg %p36
        $region38: #{tpu_custom_call.1} parent=35 // pred_check_branch
          %235 = sbr.rel (%p233) target = $region40
        $region39: #{tpu_custom_call.1} parent=35 // pred_region
          %s236 = sand.u32 %s26, 1
          %s237 = sand.u32 %s26, 1
          %s238 = smul.addr %s237, 512
          %s239 = scalar_lea.vmem [#allocation4], %s238
          %s240 = smul.u32 2, %s16
          %s241 = smul.addr %s240, 8
          %s242 = smul.addr %s241, 8
          %s243 = scalar_lea.vmem %s0, %s242
          // Predicated region
          $region41: #{tpu_custom_call.1} parent=39 // pred_check
            _
          $region42: #{tpu_custom_call.1} parent=39 // pred_check_branch
            %245 = sbr.rel (0) target = $region44
          $region43: #{tpu_custom_call.1} parent=39 // pred_region
            // Predicated region
            $region45: #{tpu_custom_call.1} parent=43 // pred_check
              _
            $region46: #{tpu_custom_call.1} parent=43 // pred_check_branch
              %247 = sbr.rel (0) target = $region48
            $region47: #{tpu_custom_call.1} parent=43 // pred_region
              // Predicated region
              $region60: #{tpu_custom_call.1} parent=47 // pred_check
                _
              $region61: #{tpu_custom_call.1} parent=47 // pred_check_branch
                %389 = sbr.rel (0) target = $region63
              $region62: #{tpu_custom_call.1} parent=47 // pred_region
                loop: start=0, step=1, limit=1
                $region64: #{tpu_custom_call.1} parent=62 // loop_pre_header
                  _
                $region65: #{tpu_custom_call.1} parent=62 // loop_header
                  %s391 = sphi 0, %s395
                  %p392 = scmp.ge.s32.totalorder %s391, 1
                  %s396 = sphi %s243, %s243
                  %s397 = sphi %s239, %s239
                $region66: #{tpu_custom_call.1} parent=62 // loop_header_branch
                  %394 = sbr.rel (%p392) target = $region70
                $region67: #{tpu_custom_call.1} parent=62 // loop_body
                  %v398 = vld [vmem:[%s396] sm:$0xff]
                  %399 = vst [vmem:[%s397] sm:$0xff] %v398
                  %v400 = vld [vmem:[%s396 + $0x8] sm:$0xff]
                  %401 = vst [vmem:[%s397 + $0x8] sm:$0xff] %v400
                  %v402 = vld [vmem:[%s396 + $0x10] sm:$0xff]
                  %403 = vst [vmem:[%s397 + $0x10] sm:$0xff] %v402
                  %v404 = vld [vmem:[%s396 + $0x18] sm:$0xff]
                  %405 = vst [vmem:[%s397 + $0x18] sm:$0xff] %v404
                  %v406 = vld [vmem:[%s396 + $0x20] sm:$0xff]
                  %407 = vst [vmem:[%s397 + $0x20] sm:$0xff] %v406
                  %v408 = vld [vmem:[%s396 + $0x28] sm:$0xff]
                  %409 = vst [vmem:[%s397 + $0x28] sm:$0xff] %v408
                  %v410 = vld [vmem:[%s396 + $0x30] sm:$0xff]
                  %411 = vst [vmem:[%s397 + $0x30] sm:$0xff] %v410
                  %v412 = vld [vmem:[%s396 + $0x38] sm:$0xff]
                  %413 = vst [vmem:[%s397 + $0x38] sm:$0xff] %v412
                  %v414 = vld [vmem:[%s396 + $0x40] sm:$0xff]
                  %415 = vst [vmem:[%s397 + $0x40] sm:$0xff] %v414
                  %v416 = vld [vmem:[%s396 + $0x48] sm:$0xff]
                  %417 = vst [vmem:[%s397 + $0x48] sm:$0xff] %v416
                  %v418 = vld [vmem:[%s396 + $0x50] sm:$0xff]
                  %419 = vst [vmem:[%s397 + $0x50] sm:$0xff] %v418
                  %v420 = vld [vmem:[%s396 + $0x58] sm:$0xff]
                  %421 = vst [vmem:[%s397 + $0x58] sm:$0xff] %v420
                  %v422 = vld [vmem:[%s396 + $0x60] sm:$0xff]
                  %423 = vst [vmem:[%s397 + $0x60] sm:$0xff] %v422
                  %v424 = vld [vmem:[%s396 + $0x68] sm:$0xff]
                  %425 = vst [vmem:[%s397 + $0x68] sm:$0xff] %v424
                  %v426 = vld [vmem:[%s396 + $0x70] sm:$0xff]
                  %427 = vst [vmem:[%s397 + $0x70] sm:$0xff] %v426
                  %v428 = vld [vmem:[%s396 + $0x78] sm:$0xff]
                  %429 = vst [vmem:[%s397 + $0x78] sm:$0xff] %v428
                  %v430 = vld [vmem:[%s396 + $0x100] sm:$0xff]
                  %431 = vst [vmem:[%s397 + $0x80] sm:$0xff] %v430
                  %v432 = vld [vmem:[%s396 + $0x108] sm:$0xff]
                  %433 = vst [vmem:[%s397 + $0x88] sm:$0xff] %v432
                  %v434 = vld [vmem:[%s396 + $0x110] sm:$0xff]
                  %435 = vst [vmem:[%s397 + $0x90] sm:$0xff] %v434
                  %v436 = vld [vmem:[%s396 + $0x118] sm:$0xff]
                  %437 = vst [vmem:[%s397 + $0x98] sm:$0xff] %v436
                  %v438 = vld [vmem:[%s396 + $0x120] sm:$0xff]
                  %439 = vst [vmem:[%s397 + $0xa0] sm:$0xff] %v438
                  %v440 = vld [vmem:[%s396 + $0x128] sm:$0xff]
                  %441 = vst [vmem:[%s397 + $0xa8] sm:$0xff] %v440
                  %v442 = vld [vmem:[%s396 + $0x130] sm:$0xff]
                  %443 = vst [vmem:[%s397 + $0xb0] sm:$0xff] %v442
                  %v444 = vld [vmem:[%s396 + $0x138] sm:$0xff]
                  %445 = vst [vmem:[%s397 + $0xb8] sm:$0xff] %v444
                  %v446 = vld [vmem:[%s396 + $0x140] sm:$0xff]
                  %447 = vst [vmem:[%s397 + $0xc0] sm:$0xff] %v446
                  %v448 = vld [vmem:[%s396 + $0x148] sm:$0xff]
                  %449 = vst [vmem:[%s397 + $0xc8] sm:$0xff] %v448
                  %v450 = vld [vmem:[%s396 + $0x150] sm:$0xff]
                  %451 = vst [vmem:[%s397 + $0xd0] sm:$0xff] %v450
                  %v452 = vld [vmem:[%s396 + $0x158] sm:$0xff]
                  %453 = vst [vmem:[%s397 + $0xd8] sm:$0xff] %v452
                  %v454 = vld [vmem:[%s396 + $0x160] sm:$0xff]
                  %455 = vst [vmem:[%s397 + $0xe0] sm:$0xff] %v454
                  %v456 = vld [vmem:[%s396 + $0x168] sm:$0xff]
                  %457 = vst [vmem:[%s397 + $0xe8] sm:$0xff] %v456
                  %v458 = vld [vmem:[%s396 + $0x170] sm:$0xff]
                  %459 = vst [vmem:[%s397 + $0xf0] sm:$0xff] %v458
                  %v460 = vld [vmem:[%s396 + $0x178] sm:$0xff]
                  %461 = vst [vmem:[%s397 + $0xf8] sm:$0xff] %v460
                  %v462 = vld [vmem:[%s396 + $0x200] sm:$0xff]
                  %463 = vst [vmem:[%s397 + $0x100] sm:$0xff] %v462
                  %v464 = vld [vmem:[%s396 + $0x208] sm:$0xff]
                  %465 = vst [vmem:[%s397 + $0x108] sm:$0xff] %v464
                  %v466 = vld [vmem:[%s396 + $0x210] sm:$0xff]
                  %467 = vst [vmem:[%s397 + $0x110] sm:$0xff] %v466
                  %v468 = vld [vmem:[%s396 + $0x218] sm:$0xff]
                  %469 = vst [vmem:[%s397 + $0x118] sm:$0xff] %v468
                  %v470 = vld [vmem:[%s396 + $0x220] sm:$0xff]
                  %471 = vst [vmem:[%s397 + $0x120] sm:$0xff] %v470
                  %v472 = vld [vmem:[%s396 + $0x228] sm:$0xff]
                  %473 = vst [vmem:[%s397 + $0x128] sm:$0xff] %v472
                  %v474 = vld [vmem:[%s396 + $0x230] sm:$0xff]
                  %475 = vst [vmem:[%s397 + $0x130] sm:$0xff] %v474
                  %v476 = vld [vmem:[%s396 + $0x238] sm:$0xff]
                  %477 = vst [vmem:[%s397 + $0x138] sm:$0xff] %v476
                  %v478 = vld [vmem:[%s396 + $0x240] sm:$0xff]
                  %479 = vst [vmem:[%s397 + $0x140] sm:$0xff] %v478
                  %v480 = vld [vmem:[%s396 + $0x248] sm:$0xff]
                  %481 = vst [vmem:[%s397 + $0x148] sm:$0xff] %v480
                  %v482 = vld [vmem:[%s396 + $0x250] sm:$0xff]
                  %483 = vst [vmem:[%s397 + $0x150] sm:$0xff] %v482
                  %v484 = vld [vmem:[%s396 + $0x258] sm:$0xff]
                  %485 = vst [vmem:[%s397 + $0x158] sm:$0xff] %v484
                  %v486 = vld [vmem:[%s396 + $0x260] sm:$0xff]
                  %487 = vst [vmem:[%s397 + $0x160] sm:$0xff] %v486
                  %v488 = vld [vmem:[%s396 + $0x268] sm:$0xff]
                  %489 = vst [vmem:[%s397 + $0x168] sm:$0xff] %v488
                  %v490 = vld [vmem:[%s396 + $0x270] sm:$0xff]
                  %491 = vst [vmem:[%s397 + $0x170] sm:$0xff] %v490
                  %v492 = vld [vmem:[%s396 + $0x278] sm:$0xff]
                  %493 = vst [vmem:[%s397 + $0x178] sm:$0xff] %v492
                  %v494 = vld [vmem:[%s396 + $0x300] sm:$0xff]
                  %495 = vst [vmem:[%s397 + $0x180] sm:$0xff] %v494
                  %v496 = vld [vmem:[%s396 + $0x308] sm:$0xff]
                  %497 = vst [vmem:[%s397 + $0x188] sm:$0xff] %v496
                  %v498 = vld [vmem:[%s396 + $0x310] sm:$0xff]
                  %499 = vst [vmem:[%s397 + $0x190] sm:$0xff] %v498
                  %v500 = vld [vmem:[%s396 + $0x318] sm:$0xff]
                  %501 = vst [vmem:[%s397 + $0x198] sm:$0xff] %v500
                  %v502 = vld [vmem:[%s396 + $0x320] sm:$0xff]
                  %503 = vst [vmem:[%s397 + $0x1a0] sm:$0xff] %v502
                  %v504 = vld [vmem:[%s396 + $0x328] sm:$0xff]
                  %505 = vst [vmem:[%s397 + $0x1a8] sm:$0xff] %v504
                  %v506 = vld [vmem:[%s396 + $0x330] sm:$0xff]
                  %507 = vst [vmem:[%s397 + $0x1b0] sm:$0xff] %v506
                  %v508 = vld [vmem:[%s396 + $0x338] sm:$0xff]
                  %509 = vst [vmem:[%s397 + $0x1b8] sm:$0xff] %v508
                  %v510 = vld [vmem:[%s396 + $0x340] sm:$0xff]
                  %511 = vst [vmem:[%s397 + $0x1c0] sm:$0xff] %v510
                  %v512 = vld [vmem:[%s396 + $0x348] sm:$0xff]
                  %513 = vst [vmem:[%s397 + $0x1c8] sm:$0xff] %v512
                  %v514 = vld [vmem:[%s396 + $0x350] sm:$0xff]
                  %515 = vst [vmem:[%s397 + $0x1d0] sm:$0xff] %v514
                  %v516 = vld [vmem:[%s396 + $0x358] sm:$0xff]
                  %517 = vst [vmem:[%s397 + $0x1d8] sm:$0xff] %v516
                  %v518 = vld [vmem:[%s396 + $0x360] sm:$0xff]
                  %519 = vst [vmem:[%s397 + $0x1e0] sm:$0xff] %v518
                  %v520 = vld [vmem:[%s396 + $0x368] sm:$0xff]
                  %521 = vst [vmem:[%s397 + $0x1e8] sm:$0xff] %v520
                  %v522 = vld [vmem:[%s396 + $0x370] sm:$0xff]
                  %523 = vst [vmem:[%s397 + $0x1f0] sm:$0xff] %v522
                  %v524 = vld [vmem:[%s396 + $0x378] sm:$0xff]
                  %525 = vst [vmem:[%s397 + $0x1f8] sm:$0xff] %v524
                $region68: #{tpu_custom_call.1} parent=62 // loop_footer
                  %s395 = sadd.s32 1, %s391
                $region69: #{tpu_custom_call.1} parent=62 // loop_footer_branch
                  %390 = sbr.rel target = $region65
                $region70: #{tpu_custom_call.1} parent=62 // loop_exit
                  _
              $region63: #{tpu_custom_call.1} parent=47 // pred_fallthru
                _
              // Predicated region
              $region71: #{tpu_custom_call.1} parent=47 // pred_check
                _
              $region72: #{tpu_custom_call.1} parent=47 // pred_check_branch
                %527 = sbr.rel target = $region74
              $region73: #{tpu_custom_call.1} parent=47 // pred_region
                _
              $region74: #{tpu_custom_call.1} parent=47 // pred_fallthru
                _
            $region48: #{tpu_custom_call.1} parent=43 // pred_fallthru
              _
            // Predicated region
            $region49: #{tpu_custom_call.1} parent=43 // pred_check
              _
            $region50: #{tpu_custom_call.1} parent=43 // pred_check_branch
              %249 = sbr.rel target = $region52
            $region51: #{tpu_custom_call.1} parent=43 // pred_region
              %s251 = ssub.s32 256, 1
              loop: start=0, step=1, limit=1
              $region53: #{tpu_custom_call.1} parent=51 // loop_pre_header
                _
              $region54: #{tpu_custom_call.1} parent=51 // loop_header
                %s253 = sphi 0, %s257
                %p254 = scmp.ge.s32.totalorder %s253, 1
                %s258 = sphi %s243, %s243
                %s259 = sphi %s239, %s239
              $region55: #{tpu_custom_call.1} parent=51 // loop_header_branch
                %256 = sbr.rel (%p254) target = $region59
              $region56: #{tpu_custom_call.1} parent=51 // loop_body
                %v260 = vld [vmem:[%s258] sm:%s251]
                %261 = vst [vmem:[%s259] sm:%s251] %v260
                %v262 = vld [vmem:[%s258 + $0x8] sm:%s251]
                %263 = vst [vmem:[%s259 + $0x8] sm:%s251] %v262
                %v264 = vld [vmem:[%s258 + $0x10] sm:%s251]
                %265 = vst [vmem:[%s259 + $0x10] sm:%s251] %v264
                %v266 = vld [vmem:[%s258 + $0x18] sm:%s251]
                %267 = vst [vmem:[%s259 + $0x18] sm:%s251] %v266
                %v268 = vld [vmem:[%s258 + $0x20] sm:%s251]
                %269 = vst [vmem:[%s259 + $0x20] sm:%s251] %v268
                %v270 = vld [vmem:[%s258 + $0x28] sm:%s251]
                %271 = vst [vmem:[%s259 + $0x28] sm:%s251] %v270
                %v272 = vld [vmem:[%s258 + $0x30] sm:%s251]
                %273 = vst [vmem:[%s259 + $0x30] sm:%s251] %v272
                %v274 = vld [vmem:[%s258 + $0x38] sm:%s251]
                %275 = vst [vmem:[%s259 + $0x38] sm:%s251] %v274
                %v276 = vld [vmem:[%s258 + $0x40] sm:%s251]
                %277 = vst [vmem:[%s259 + $0x40] sm:%s251] %v276
                %v278 = vld [vmem:[%s258 + $0x48] sm:%s251]
                %279 = vst [vmem:[%s259 + $0x48] sm:%s251] %v278
                %v280 = vld [vmem:[%s258 + $0x50] sm:%s251]
                %281 = vst [vmem:[%s259 + $0x50] sm:%s251] %v280
                %v282 = vld [vmem:[%s258 + $0x58] sm:%s251]
                %283 = vst [vmem:[%s259 + $0x58] sm:%s251] %v282
                %v284 = vld [vmem:[%s258 + $0x60] sm:%s251]
                %285 = vst [vmem:[%s259 + $0x60] sm:%s251] %v284
                %v286 = vld [vmem:[%s258 + $0x68] sm:%s251]
                %287 = vst [vmem:[%s259 + $0x68] sm:%s251] %v286
                %v288 = vld [vmem:[%s258 + $0x70] sm:%s251]
                %289 = vst [vmem:[%s259 + $0x70] sm:%s251] %v288
                %v290 = vld [vmem:[%s258 + $0x78] sm:%s251]
                %291 = vst [vmem:[%s259 + $0x78] sm:%s251] %v290
                %v292 = vld [vmem:[%s258 + $0x100] sm:%s251]
                %293 = vst [vmem:[%s259 + $0x80] sm:%s251] %v292
                %v294 = vld [vmem:[%s258 + $0x108] sm:%s251]
                %295 = vst [vmem:[%s259 + $0x88] sm:%s251] %v294
                %v296 = vld [vmem:[%s258 + $0x110] sm:%s251]
                %297 = vst [vmem:[%s259 + $0x90] sm:%s251] %v296
                %v298 = vld [vmem:[%s258 + $0x118] sm:%s251]
                %299 = vst [vmem:[%s259 + $0x98] sm:%s251] %v298
                %v300 = vld [vmem:[%s258 + $0x120] sm:%s251]
                %301 = vst [vmem:[%s259 + $0xa0] sm:%s251] %v300
                %v302 = vld [vmem:[%s258 + $0x128] sm:%s251]
                %303 = vst [vmem:[%s259 + $0xa8] sm:%s251] %v302
                %v304 = vld [vmem:[%s258 + $0x130] sm:%s251]
                %305 = vst [vmem:[%s259 + $0xb0] sm:%s251] %v304
                %v306 = vld [vmem:[%s258 + $0x138] sm:%s251]
                %307 = vst [vmem:[%s259 + $0xb8] sm:%s251] %v306
                %v308 = vld [vmem:[%s258 + $0x140] sm:%s251]
                %309 = vst [vmem:[%s259 + $0xc0] sm:%s251] %v308
                %v310 = vld [vmem:[%s258 + $0x148] sm:%s251]
                %311 = vst [vmem:[%s259 + $0xc8] sm:%s251] %v310
                %v312 = vld [vmem:[%s258 + $0x150] sm:%s251]
                %313 = vst [vmem:[%s259 + $0xd0] sm:%s251] %v312
                %v314 = vld [vmem:[%s258 + $0x158] sm:%s251]
                %315 = vst [vmem:[%s259 + $0xd8] sm:%s251] %v314
                %v316 = vld [vmem:[%s258 + $0x160] sm:%s251]
                %317 = vst [vmem:[%s259 + $0xe0] sm:%s251] %v316
                %v318 = vld [vmem:[%s258 + $0x168] sm:%s251]
                %319 = vst [vmem:[%s259 + $0xe8] sm:%s251] %v318
                %v320 = vld [vmem:[%s258 + $0x170] sm:%s251]
                %321 = vst [vmem:[%s259 + $0xf0] sm:%s251] %v320
                %v322 = vld [vmem:[%s258 + $0x178] sm:%s251]
                %323 = vst [vmem:[%s259 + $0xf8] sm:%s251] %v322
                %v324 = vld [vmem:[%s258 + $0x200] sm:%s251]
                %325 = vst [vmem:[%s259 + $0x100] sm:%s251] %v324
                %v326 = vld [vmem:[%s258 + $0x208] sm:%s251]
                %327 = vst [vmem:[%s259 + $0x108] sm:%s251] %v326
                %v328 = vld [vmem:[%s258 + $0x210] sm:%s251]
                %329 = vst [vmem:[%s259 + $0x110] sm:%s251] %v328
                %v330 = vld [vmem:[%s258 + $0x218] sm:%s251]
                %331 = vst [vmem:[%s259 + $0x118] sm:%s251] %v330
                %v332 = vld [vmem:[%s258 + $0x220] sm:%s251]
                %333 = vst [vmem:[%s259 + $0x120] sm:%s251] %v332
                %v334 = vld [vmem:[%s258 + $0x228] sm:%s251]
                %335 = vst [vmem:[%s259 + $0x128] sm:%s251] %v334
                %v336 = vld [vmem:[%s258 + $0x230] sm:%s251]
                %337 = vst [vmem:[%s259 + $0x130] sm:%s251] %v336
                %v338 = vld [vmem:[%s258 + $0x238] sm:%s251]
                %339 = vst [vmem:[%s259 + $0x138] sm:%s251] %v338
                %v340 = vld [vmem:[%s258 + $0x240] sm:%s251]
                %341 = vst [vmem:[%s259 + $0x140] sm:%s251] %v340
                %v342 = vld [vmem:[%s258 + $0x248] sm:%s251]
                %343 = vst [vmem:[%s259 + $0x148] sm:%s251] %v342
                %v344 = vld [vmem:[%s258 + $0x250] sm:%s251]
                %345 = vst [vmem:[%s259 + $0x150] sm:%s251] %v344
                %v346 = vld [vmem:[%s258 + $0x258] sm:%s251]
                %347 = vst [vmem:[%s259 + $0x158] sm:%s251] %v346
                %v348 = vld [vmem:[%s258 + $0x260] sm:%s251]
                %349 = vst [vmem:[%s259 + $0x160] sm:%s251] %v348
                %v350 = vld [vmem:[%s258 + $0x268] sm:%s251]
                %351 = vst [vmem:[%s259 + $0x168] sm:%s251] %v350
                %v352 = vld [vmem:[%s258 + $0x270] sm:%s251]
                %353 = vst [vmem:[%s259 + $0x170] sm:%s251] %v352
                %v354 = vld [vmem:[%s258 + $0x278] sm:%s251]
                %355 = vst [vmem:[%s259 + $0x178] sm:%s251] %v354
                %v356 = vld [vmem:[%s258 + $0x300] sm:%s251]
                %357 = vst [vmem:[%s259 + $0x180] sm:%s251] %v356
                %v358 = vld [vmem:[%s258 + $0x308] sm:%s251]
                %359 = vst [vmem:[%s259 + $0x188] sm:%s251] %v358
                %v360 = vld [vmem:[%s258 + $0x310] sm:%s251]
                %361 = vst [vmem:[%s259 + $0x190] sm:%s251] %v360
                %v362 = vld [vmem:[%s258 + $0x318] sm:%s251]
                %363 = vst [vmem:[%s259 + $0x198] sm:%s251] %v362
                %v364 = vld [vmem:[%s258 + $0x320] sm:%s251]
                %365 = vst [vmem:[%s259 + $0x1a0] sm:%s251] %v364
                %v366 = vld [vmem:[%s258 + $0x328] sm:%s251]
                %367 = vst [vmem:[%s259 + $0x1a8] sm:%s251] %v366
                %v368 = vld [vmem:[%s258 + $0x330] sm:%s251]
                %369 = vst [vmem:[%s259 + $0x1b0] sm:%s251] %v368
                %v370 = vld [vmem:[%s258 + $0x338] sm:%s251]
                %371 = vst [vmem:[%s259 + $0x1b8] sm:%s251] %v370
                %v372 = vld [vmem:[%s258 + $0x340] sm:%s251]
                %373 = vst [vmem:[%s259 + $0x1c0] sm:%s251] %v372
                %v374 = vld [vmem:[%s258 + $0x348] sm:%s251]
                %375 = vst [vmem:[%s259 + $0x1c8] sm:%s251] %v374
                %v376 = vld [vmem:[%s258 + $0x350] sm:%s251]
                %377 = vst [vmem:[%s259 + $0x1d0] sm:%s251] %v376
                %v378 = vld [vmem:[%s258 + $0x358] sm:%s251]
                %379 = vst [vmem:[%s259 + $0x1d8] sm:%s251] %v378
                %v380 = vld [vmem:[%s258 + $0x360] sm:%s251]
                %381 = vst [vmem:[%s259 + $0x1e0] sm:%s251] %v380
                %v382 = vld [vmem:[%s258 + $0x368] sm:%s251]
                %383 = vst [vmem:[%s259 + $0x1e8] sm:%s251] %v382
                %v384 = vld [vmem:[%s258 + $0x370] sm:%s251]
                %385 = vst [vmem:[%s259 + $0x1f0] sm:%s251] %v384
                %v386 = vld [vmem:[%s258 + $0x378] sm:%s251]
                %387 = vst [vmem:[%s259 + $0x1f8] sm:%s251] %v386
              $region57: #{tpu_custom_call.1} parent=51 // loop_footer
                %s257 = sadd.s32 1, %s253
              $region58: #{tpu_custom_call.1} parent=51 // loop_footer_branch
                %252 = sbr.rel target = $region54
              $region59: #{tpu_custom_call.1} parent=51 // loop_exit
                _
            $region52: #{tpu_custom_call.1} parent=43 // pred_fallthru
              _
          $region44: #{tpu_custom_call.1} parent=39 // pred_fallthru
            _
          %528 = vnop
        $region40: #{tpu_custom_call.1} parent=35 // pred_fallthru
          _
        // Predicated region
        $region75: #{tpu_custom_call.1} parent=35 // pred_check
          %p529 = pneg %p62
        $region76: #{tpu_custom_call.1} parent=35 // pred_check_branch
          %531 = sbr.rel (%p529) target = $region78
        $region77: #{tpu_custom_call.1} parent=35 // pred_region
          %s532 = sand.u32 %s52, 1
          %s533 = sand.u32 %s52, 1
          %s534 = smul.addr %s533, 512
          %s535 = scalar_lea.vmem [#allocation5], %s534
          %s536 = smul.u32 2, %s16
          %s537 = smul.addr %s536, 8
          %s538 = smul.addr %s537, 8
          %s539 = scalar_lea.vmem %s1, %s538
          // Predicated region
          $region79: #{tpu_custom_call.1} parent=77 // pred_check
            _
          $region80: #{tpu_custom_call.1} parent=77 // pred_check_branch
            %541 = sbr.rel (0) target = $region82
          $region81: #{tpu_custom_call.1} parent=77 // pred_region
            // Predicated region
            $region83: #{tpu_custom_call.1} parent=81 // pred_check
              _
            $region84: #{tpu_custom_call.1} parent=81 // pred_check_branch
              %543 = sbr.rel (0) target = $region86
            $region85: #{tpu_custom_call.1} parent=81 // pred_region
              // Predicated region
              $region98: #{tpu_custom_call.1} parent=85 // pred_check
                _
              $region99: #{tpu_custom_call.1} parent=85 // pred_check_branch
                %685 = sbr.rel (0) target = $region101
              $region100: #{tpu_custom_call.1} parent=85 // pred_region
                loop: start=0, step=1, limit=1
                $region102: #{tpu_custom_call.1} parent=100 // loop_pre_header
                  _
                $region103: #{tpu_custom_call.1} parent=100 // loop_header
                  %s687 = sphi 0, %s691
                  %p688 = scmp.ge.s32.totalorder %s687, 1
                  %s692 = sphi %s539, %s539
                  %s693 = sphi %s535, %s535
                $region104: #{tpu_custom_call.1} parent=100 // loop_header_branch
                  %690 = sbr.rel (%p688) target = $region108
                $region105: #{tpu_custom_call.1} parent=100 // loop_body
                  %v694 = vld [vmem:[%s692] sm:$0xff]
                  %695 = vst [vmem:[%s693] sm:$0xff] %v694
                  %v696 = vld [vmem:[%s692 + $0x8] sm:$0xff]
                  %697 = vst [vmem:[%s693 + $0x8] sm:$0xff] %v696
                  %v698 = vld [vmem:[%s692 + $0x10] sm:$0xff]
                  %699 = vst [vmem:[%s693 + $0x10] sm:$0xff] %v698
                  %v700 = vld [vmem:[%s692 + $0x18] sm:$0xff]
                  %701 = vst [vmem:[%s693 + $0x18] sm:$0xff] %v700
                  %v702 = vld [vmem:[%s692 + $0x20] sm:$0xff]
                  %703 = vst [vmem:[%s693 + $0x20] sm:$0xff] %v702
                  %v704 = vld [vmem:[%s692 + $0x28] sm:$0xff]
                  %705 = vst [vmem:[%s693 + $0x28] sm:$0xff] %v704
                  %v706 = vld [vmem:[%s692 + $0x30] sm:$0xff]
                  %707 = vst [vmem:[%s693 + $0x30] sm:$0xff] %v706
                  %v708 = vld [vmem:[%s692 + $0x38] sm:$0xff]
                  %709 = vst [vmem:[%s693 + $0x38] sm:$0xff] %v708
                  %v710 = vld [vmem:[%s692 + $0x40] sm:$0xff]
                  %711 = vst [vmem:[%s693 + $0x40] sm:$0xff] %v710
                  %v712 = vld [vmem:[%s692 + $0x48] sm:$0xff]
                  %713 = vst [vmem:[%s693 + $0x48] sm:$0xff] %v712
                  %v714 = vld [vmem:[%s692 + $0x50] sm:$0xff]
                  %715 = vst [vmem:[%s693 + $0x50] sm:$0xff] %v714
                  %v716 = vld [vmem:[%s692 + $0x58] sm:$0xff]
                  %717 = vst [vmem:[%s693 + $0x58] sm:$0xff] %v716
                  %v718 = vld [vmem:[%s692 + $0x60] sm:$0xff]
                  %719 = vst [vmem:[%s693 + $0x60] sm:$0xff] %v718
                  %v720 = vld [vmem:[%s692 + $0x68] sm:$0xff]
                  %721 = vst [vmem:[%s693 + $0x68] sm:$0xff] %v720
                  %v722 = vld [vmem:[%s692 + $0x70] sm:$0xff]
                  %723 = vst [vmem:[%s693 + $0x70] sm:$0xff] %v722
                  %v724 = vld [vmem:[%s692 + $0x78] sm:$0xff]
                  %725 = vst [vmem:[%s693 + $0x78] sm:$0xff] %v724
                  %v726 = vld [vmem:[%s692 + $0x100] sm:$0xff]
                  %727 = vst [vmem:[%s693 + $0x80] sm:$0xff] %v726
                  %v728 = vld [vmem:[%s692 + $0x108] sm:$0xff]
                  %729 = vst [vmem:[%s693 + $0x88] sm:$0xff] %v728
                  %v730 = vld [vmem:[%s692 + $0x110] sm:$0xff]
                  %731 = vst [vmem:[%s693 + $0x90] sm:$0xff] %v730
                  %v732 = vld [vmem:[%s692 + $0x118] sm:$0xff]
                  %733 = vst [vmem:[%s693 + $0x98] sm:$0xff] %v732
                  %v734 = vld [vmem:[%s692 + $0x120] sm:$0xff]
                  %735 = vst [vmem:[%s693 + $0xa0] sm:$0xff] %v734
                  %v736 = vld [vmem:[%s692 + $0x128] sm:$0xff]
                  %737 = vst [vmem:[%s693 + $0xa8] sm:$0xff] %v736
                  %v738 = vld [vmem:[%s692 + $0x130] sm:$0xff]
                  %739 = vst [vmem:[%s693 + $0xb0] sm:$0xff] %v738
                  %v740 = vld [vmem:[%s692 + $0x138] sm:$0xff]
                  %741 = vst [vmem:[%s693 + $0xb8] sm:$0xff] %v740
                  %v742 = vld [vmem:[%s692 + $0x140] sm:$0xff]
                  %743 = vst [vmem:[%s693 + $0xc0] sm:$0xff] %v742
                  %v744 = vld [vmem:[%s692 + $0x148] sm:$0xff]
                  %745 = vst [vmem:[%s693 + $0xc8] sm:$0xff] %v744
                  %v746 = vld [vmem:[%s692 + $0x150] sm:$0xff]
                  %747 = vst [vmem:[%s693 + $0xd0] sm:$0xff] %v746
                  %v748 = vld [vmem:[%s692 + $0x158] sm:$0xff]
                  %749 = vst [vmem:[%s693 + $0xd8] sm:$0xff] %v748
                  %v750 = vld [vmem:[%s692 + $0x160] sm:$0xff]
                  %751 = vst [vmem:[%s693 + $0xe0] sm:$0xff] %v750
                  %v752 = vld [vmem:[%s692 + $0x168] sm:$0xff]
                  %753 = vst [vmem:[%s693 + $0xe8] sm:$0xff] %v752
                  %v754 = vld [vmem:[%s692 + $0x170] sm:$0xff]
                  %755 = vst [vmem:[%s693 + $0xf0] sm:$0xff] %v754
                  %v756 = vld [vmem:[%s692 + $0x178] sm:$0xff]
                  %757 = vst [vmem:[%s693 + $0xf8] sm:$0xff] %v756
                  %v758 = vld [vmem:[%s692 + $0x200] sm:$0xff]
                  %759 = vst [vmem:[%s693 + $0x100] sm:$0xff] %v758
                  %v760 = vld [vmem:[%s692 + $0x208] sm:$0xff]
                  %761 = vst [vmem:[%s693 + $0x108] sm:$0xff] %v760
                  %v762 = vld [vmem:[%s692 + $0x210] sm:$0xff]
                  %763 = vst [vmem:[%s693 + $0x110] sm:$0xff] %v762
                  %v764 = vld [vmem:[%s692 + $0x218] sm:$0xff]
                  %765 = vst [vmem:[%s693 + $0x118] sm:$0xff] %v764
                  %v766 = vld [vmem:[%s692 + $0x220] sm:$0xff]
                  %767 = vst [vmem:[%s693 + $0x120] sm:$0xff] %v766
                  %v768 = vld [vmem:[%s692 + $0x228] sm:$0xff]
                  %769 = vst [vmem:[%s693 + $0x128] sm:$0xff] %v768
                  %v770 = vld [vmem:[%s692 + $0x230] sm:$0xff]
                  %771 = vst [vmem:[%s693 + $0x130] sm:$0xff] %v770
                  %v772 = vld [vmem:[%s692 + $0x238] sm:$0xff]
                  %773 = vst [vmem:[%s693 + $0x138] sm:$0xff] %v772
                  %v774 = vld [vmem:[%s692 + $0x240] sm:$0xff]
                  %775 = vst [vmem:[%s693 + $0x140] sm:$0xff] %v774
                  %v776 = vld [vmem:[%s692 + $0x248] sm:$0xff]
                  %777 = vst [vmem:[%s693 + $0x148] sm:$0xff] %v776
                  %v778 = vld [vmem:[%s692 + $0x250] sm:$0xff]
                  %779 = vst [vmem:[%s693 + $0x150] sm:$0xff] %v778
                  %v780 = vld [vmem:[%s692 + $0x258] sm:$0xff]
                  %781 = vst [vmem:[%s693 + $0x158] sm:$0xff] %v780
                  %v782 = vld [vmem:[%s692 + $0x260] sm:$0xff]
                  %783 = vst [vmem:[%s693 + $0x160] sm:$0xff] %v782
                  %v784 = vld [vmem:[%s692 + $0x268] sm:$0xff]
                  %785 = vst [vmem:[%s693 + $0x168] sm:$0xff] %v784
                  %v786 = vld [vmem:[%s692 + $0x270] sm:$0xff]
                  %787 = vst [vmem:[%s693 + $0x170] sm:$0xff] %v786
                  %v788 = vld [vmem:[%s692 + $0x278] sm:$0xff]
                  %789 = vst [vmem:[%s693 + $0x178] sm:$0xff] %v788
                  %v790 = vld [vmem:[%s692 + $0x300] sm:$0xff]
                  %791 = vst [vmem:[%s693 + $0x180] sm:$0xff] %v790
                  %v792 = vld [vmem:[%s692 + $0x308] sm:$0xff]
                  %793 = vst [vmem:[%s693 + $0x188] sm:$0xff] %v792
                  %v794 = vld [vmem:[%s692 + $0x310] sm:$0xff]
                  %795 = vst [vmem:[%s693 + $0x190] sm:$0xff] %v794
                  %v796 = vld [vmem:[%s692 + $0x318] sm:$0xff]
                  %797 = vst [vmem:[%s693 + $0x198] sm:$0xff] %v796
                  %v798 = vld [vmem:[%s692 + $0x320] sm:$0xff]
                  %799 = vst [vmem:[%s693 + $0x1a0] sm:$0xff] %v798
                  %v800 = vld [vmem:[%s692 + $0x328] sm:$0xff]
                  %801 = vst [vmem:[%s693 + $0x1a8] sm:$0xff] %v800
                  %v802 = vld [vmem:[%s692 + $0x330] sm:$0xff]
                  %803 = vst [vmem:[%s693 + $0x1b0] sm:$0xff] %v802
                  %v804 = vld [vmem:[%s692 + $0x338] sm:$0xff]
                  %805 = vst [vmem:[%s693 + $0x1b8] sm:$0xff] %v804
                  %v806 = vld [vmem:[%s692 + $0x340] sm:$0xff]
                  %807 = vst [vmem:[%s693 + $0x1c0] sm:$0xff] %v806
                  %v808 = vld [vmem:[%s692 + $0x348] sm:$0xff]
                  %809 = vst [vmem:[%s693 + $0x1c8] sm:$0xff] %v808
                  %v810 = vld [vmem:[%s692 + $0x350] sm:$0xff]
                  %811 = vst [vmem:[%s693 + $0x1d0] sm:$0xff] %v810
                  %v812 = vld [vmem:[%s692 + $0x358] sm:$0xff]
                  %813 = vst [vmem:[%s693 + $0x1d8] sm:$0xff] %v812
                  %v814 = vld [vmem:[%s692 + $0x360] sm:$0xff]
                  %815 = vst [vmem:[%s693 + $0x1e0] sm:$0xff] %v814
                  %v816 = vld [vmem:[%s692 + $0x368] sm:$0xff]
                  %817 = vst [vmem:[%s693 + $0x1e8] sm:$0xff] %v816
                  %v818 = vld [vmem:[%s692 + $0x370] sm:$0xff]
                  %819 = vst [vmem:[%s693 + $0x1f0] sm:$0xff] %v818
                  %v820 = vld [vmem:[%s692 + $0x378] sm:$0xff]
                  %821 = vst [vmem:[%s693 + $0x1f8] sm:$0xff] %v820
                $region106: #{tpu_custom_call.1} parent=100 // loop_footer
                  %s691 = sadd.s32 1, %s687
                $region107: #{tpu_custom_call.1} parent=100 // loop_footer_branch
                  %686 = sbr.rel target = $region103
                $region108: #{tpu_custom_call.1} parent=100 // loop_exit
                  _
              $region101: #{tpu_custom_call.1} parent=85 // pred_fallthru
                _
              // Predicated region
              $region109: #{tpu_custom_call.1} parent=85 // pred_check
                _
              $region110: #{tpu_custom_call.1} parent=85 // pred_check_branch
                %823 = sbr.rel target = $region112
              $region111: #{tpu_custom_call.1} parent=85 // pred_region
                _
              $region112: #{tpu_custom_call.1} parent=85 // pred_fallthru
                _
            $region86: #{tpu_custom_call.1} parent=81 // pred_fallthru
              _
            // Predicated region
            $region87: #{tpu_custom_call.1} parent=81 // pred_check
              _
            $region88: #{tpu_custom_call.1} parent=81 // pred_check_branch
              %545 = sbr.rel target = $region90
            $region89: #{tpu_custom_call.1} parent=81 // pred_region
              %s547 = ssub.s32 256, 1
              loop: start=0, step=1, limit=1
              $region91: #{tpu_custom_call.1} parent=89 // loop_pre_header
                _
              $region92: #{tpu_custom_call.1} parent=89 // loop_header
                %s549 = sphi 0, %s553
                %p550 = scmp.ge.s32.totalorder %s549, 1
                %s554 = sphi %s539, %s539
                %s555 = sphi %s535, %s535
              $region93: #{tpu_custom_call.1} parent=89 // loop_header_branch
                %552 = sbr.rel (%p550) target = $region97
              $region94: #{tpu_custom_call.1} parent=89 // loop_body
                %v556 = vld [vmem:[%s554] sm:%s547]
                %557 = vst [vmem:[%s555] sm:%s547] %v556
                %v558 = vld [vmem:[%s554 + $0x8] sm:%s547]
                %559 = vst [vmem:[%s555 + $0x8] sm:%s547] %v558
                %v560 = vld [vmem:[%s554 + $0x10] sm:%s547]
                %561 = vst [vmem:[%s555 + $0x10] sm:%s547] %v560
                %v562 = vld [vmem:[%s554 + $0x18] sm:%s547]
                %563 = vst [vmem:[%s555 + $0x18] sm:%s547] %v562
                %v564 = vld [vmem:[%s554 + $0x20] sm:%s547]
                %565 = vst [vmem:[%s555 + $0x20] sm:%s547] %v564
                %v566 = vld [vmem:[%s554 + $0x28] sm:%s547]
                %567 = vst [vmem:[%s555 + $0x28] sm:%s547] %v566
                %v568 = vld [vmem:[%s554 + $0x30] sm:%s547]
                %569 = vst [vmem:[%s555 + $0x30] sm:%s547] %v568
                %v570 = vld [vmem:[%s554 + $0x38] sm:%s547]
                %571 = vst [vmem:[%s555 + $0x38] sm:%s547] %v570
                %v572 = vld [vmem:[%s554 + $0x40] sm:%s547]
                %573 = vst [vmem:[%s555 + $0x40] sm:%s547] %v572
                %v574 = vld [vmem:[%s554 + $0x48] sm:%s547]
                %575 = vst [vmem:[%s555 + $0x48] sm:%s547] %v574
                %v576 = vld [vmem:[%s554 + $0x50] sm:%s547]
                %577 = vst [vmem:[%s555 + $0x50] sm:%s547] %v576
                %v578 = vld [vmem:[%s554 + $0x58] sm:%s547]
                %579 = vst [vmem:[%s555 + $0x58] sm:%s547] %v578
                %v580 = vld [vmem:[%s554 + $0x60] sm:%s547]
                %581 = vst [vmem:[%s555 + $0x60] sm:%s547] %v580
                %v582 = vld [vmem:[%s554 + $0x68] sm:%s547]
                %583 = vst [vmem:[%s555 + $0x68] sm:%s547] %v582
                %v584 = vld [vmem:[%s554 + $0x70] sm:%s547]
                %585 = vst [vmem:[%s555 + $0x70] sm:%s547] %v584
                %v586 = vld [vmem:[%s554 + $0x78] sm:%s547]
                %587 = vst [vmem:[%s555 + $0x78] sm:%s547] %v586
                %v588 = vld [vmem:[%s554 + $0x100] sm:%s547]
                %589 = vst [vmem:[%s555 + $0x80] sm:%s547] %v588
                %v590 = vld [vmem:[%s554 + $0x108] sm:%s547]
                %591 = vst [vmem:[%s555 + $0x88] sm:%s547] %v590
                %v592 = vld [vmem:[%s554 + $0x110] sm:%s547]
                %593 = vst [vmem:[%s555 + $0x90] sm:%s547] %v592
                %v594 = vld [vmem:[%s554 + $0x118] sm:%s547]
                %595 = vst [vmem:[%s555 + $0x98] sm:%s547] %v594
                %v596 = vld [vmem:[%s554 + $0x120] sm:%s547]
                %597 = vst [vmem:[%s555 + $0xa0] sm:%s547] %v596
                %v598 = vld [vmem:[%s554 + $0x128] sm:%s547]
                %599 = vst [vmem:[%s555 + $0xa8] sm:%s547] %v598
                %v600 = vld [vmem:[%s554 + $0x130] sm:%s547]
                %601 = vst [vmem:[%s555 + $0xb0] sm:%s547] %v600
                %v602 = vld [vmem:[%s554 + $0x138] sm:%s547]
                %603 = vst [vmem:[%s555 + $0xb8] sm:%s547] %v602
                %v604 = vld [vmem:[%s554 + $0x140] sm:%s547]
                %605 = vst [vmem:[%s555 + $0xc0] sm:%s547] %v604
                %v606 = vld [vmem:[%s554 + $0x148] sm:%s547]
                %607 = vst [vmem:[%s555 + $0xc8] sm:%s547] %v606
                %v608 = vld [vmem:[%s554 + $0x150] sm:%s547]
                %609 = vst [vmem:[%s555 + $0xd0] sm:%s547] %v608
                %v610 = vld [vmem:[%s554 + $0x158] sm:%s547]
                %611 = vst [vmem:[%s555 + $0xd8] sm:%s547] %v610
                %v612 = vld [vmem:[%s554 + $0x160] sm:%s547]
                %613 = vst [vmem:[%s555 + $0xe0] sm:%s547] %v612
                %v614 = vld [vmem:[%s554 + $0x168] sm:%s547]
                %615 = vst [vmem:[%s555 + $0xe8] sm:%s547] %v614
                %v616 = vld [vmem:[%s554 + $0x170] sm:%s547]
                %617 = vst [vmem:[%s555 + $0xf0] sm:%s547] %v616
                %v618 = vld [vmem:[%s554 + $0x178] sm:%s547]
                %619 = vst [vmem:[%s555 + $0xf8] sm:%s547] %v618
                %v620 = vld [vmem:[%s554 + $0x200] sm:%s547]
                %621 = vst [vmem:[%s555 + $0x100] sm:%s547] %v620
                %v622 = vld [vmem:[%s554 + $0x208] sm:%s547]
                %623 = vst [vmem:[%s555 + $0x108] sm:%s547] %v622
                %v624 = vld [vmem:[%s554 + $0x210] sm:%s547]
                %625 = vst [vmem:[%s555 + $0x110] sm:%s547] %v624
                %v626 = vld [vmem:[%s554 + $0x218] sm:%s547]
                %627 = vst [vmem:[%s555 + $0x118] sm:%s547] %v626
                %v628 = vld [vmem:[%s554 + $0x220] sm:%s547]
                %629 = vst [vmem:[%s555 + $0x120] sm:%s547] %v628
                %v630 = vld [vmem:[%s554 + $0x228] sm:%s547]
                %631 = vst [vmem:[%s555 + $0x128] sm:%s547] %v630
                %v632 = vld [vmem:[%s554 + $0x230] sm:%s547]
                %633 = vst [vmem:[%s555 + $0x130] sm:%s547] %v632
                %v634 = vld [vmem:[%s554 + $0x238] sm:%s547]
                %635 = vst [vmem:[%s555 + $0x138] sm:%s547] %v634
                %v636 = vld [vmem:[%s554 + $0x240] sm:%s547]
                %637 = vst [vmem:[%s555 + $0x140] sm:%s547] %v636
                %v638 = vld [vmem:[%s554 + $0x248] sm:%s547]
                %639 = vst [vmem:[%s555 + $0x148] sm:%s547] %v638
                %v640 = vld [vmem:[%s554 + $0x250] sm:%s547]
                %641 = vst [vmem:[%s555 + $0x150] sm:%s547] %v640
                %v642 = vld [vmem:[%s554 + $0x258] sm:%s547]
                %643 = vst [vmem:[%s555 + $0x158] sm:%s547] %v642
                %v644 = vld [vmem:[%s554 + $0x260] sm:%s547]
                %645 = vst [vmem:[%s555 + $0x160] sm:%s547] %v644
                %v646 = vld [vmem:[%s554 + $0x268] sm:%s547]
                %647 = vst [vmem:[%s555 + $0x168] sm:%s547] %v646
                %v648 = vld [vmem:[%s554 + $0x270] sm:%s547]
                %649 = vst [vmem:[%s555 + $0x170] sm:%s547] %v648
                %v650 = vld [vmem:[%s554 + $0x278] sm:%s547]
                %651 = vst [vmem:[%s555 + $0x178] sm:%s547] %v650
                %v652 = vld [vmem:[%s554 + $0x300] sm:%s547]
                %653 = vst [vmem:[%s555 + $0x180] sm:%s547] %v652
                %v654 = vld [vmem:[%s554 + $0x308] sm:%s547]
                %655 = vst [vmem:[%s555 + $0x188] sm:%s547] %v654
                %v656 = vld [vmem:[%s554 + $0x310] sm:%s547]
                %657 = vst [vmem:[%s555 + $0x190] sm:%s547] %v656
                %v658 = vld [vmem:[%s554 + $0x318] sm:%s547]
                %659 = vst [vmem:[%s555 + $0x198] sm:%s547] %v658
                %v660 = vld [vmem:[%s554 + $0x320] sm:%s547]
                %661 = vst [vmem:[%s555 + $0x1a0] sm:%s547] %v660
                %v662 = vld [vmem:[%s554 + $0x328] sm:%s547]
                %663 = vst [vmem:[%s555 + $0x1a8] sm:%s547] %v662
                %v664 = vld [vmem:[%s554 + $0x330] sm:%s547]
                %665 = vst [vmem:[%s555 + $0x1b0] sm:%s547] %v664
                %v666 = vld [vmem:[%s554 + $0x338] sm:%s547]
                %667 = vst [vmem:[%s555 + $0x1b8] sm:%s547] %v666
                %v668 = vld [vmem:[%s554 + $0x340] sm:%s547]
                %669 = vst [vmem:[%s555 + $0x1c0] sm:%s547] %v668
                %v670 = vld [vmem:[%s554 + $0x348] sm:%s547]
                %671 = vst [vmem:[%s555 + $0x1c8] sm:%s547] %v670
                %v672 = vld [vmem:[%s554 + $0x350] sm:%s547]
                %673 = vst [vmem:[%s555 + $0x1d0] sm:%s547] %v672
                %v674 = vld [vmem:[%s554 + $0x358] sm:%s547]
                %675 = vst [vmem:[%s555 + $0x1d8] sm:%s547] %v674
                %v676 = vld [vmem:[%s554 + $0x360] sm:%s547]
                %677 = vst [vmem:[%s555 + $0x1e0] sm:%s547] %v676
                %v678 = vld [vmem:[%s554 + $0x368] sm:%s547]
                %679 = vst [vmem:[%s555 + $0x1e8] sm:%s547] %v678
                %v680 = vld [vmem:[%s554 + $0x370] sm:%s547]
                %681 = vst [vmem:[%s555 + $0x1f0] sm:%s547] %v680
                %v682 = vld [vmem:[%s554 + $0x378] sm:%s547]
                %683 = vst [vmem:[%s555 + $0x1f8] sm:%s547] %v682
              $region95: #{tpu_custom_call.1} parent=89 // loop_footer
                %s553 = sadd.s32 1, %s549
              $region96: #{tpu_custom_call.1} parent=89 // loop_footer_branch
                %548 = sbr.rel target = $region92
              $region97: #{tpu_custom_call.1} parent=89 // loop_exit
                _
            $region90: #{tpu_custom_call.1} parent=81 // pred_fallthru
              _
          $region82: #{tpu_custom_call.1} parent=77 // pred_fallthru
            _
          %824 = vnop
        $region78: #{tpu_custom_call.1} parent=35 // pred_fallthru
          _
      $region36: #{tpu_custom_call.1} parent=5 // pred_fallthru
        _
      %p825 = scmp.le.s32.totalorder 1, %s16
      %p826 = scmp.lt.s32.totalorder %s16, 3
      %p827 = pnand %p825, %p826
      %p828 = pneg %p827
      // Predicated region
      $region113: #{tpu_custom_call.1} parent=5 // pred_check
        _
      $region114: #{tpu_custom_call.1} parent=5 // pred_check_branch
        %830 = sbr.rel (%p827) target = $region116
      $region115: #{tpu_custom_call.1} parent=5 // pred_region
        %s831 = ssub.s32 %s16, 1
        %s832 = sand.u32 %s29, 1
        %s833 = sand.u32 %s29, 1
        %s834 = smul.addr %s833, 512
        %s835 = scalar_lea.vmem [#allocation4], %s834
        // Predicated region
        $region117: #{tpu_custom_call.1} parent=115 // pred_check
          %p836 = pneg %p42
        $region118: #{tpu_custom_call.1} parent=115 // pred_check_branch
          %838 = sbr.rel (%p836) target = $region120
        $region119: #{tpu_custom_call.1} parent=115 // pred_region
          _
        $region120: #{tpu_custom_call.1} parent=115 // pred_fallthru
          _
        %s839 = sand.u32 %s55, 1
        %s840 = sand.u32 %s55, 1
        %s841 = smul.addr %s840, 512
        %s842 = scalar_lea.vmem [#allocation5], %s841
        // Predicated region
        $region121: #{tpu_custom_call.1} parent=115 // pred_check
          %p843 = pneg %p68
        $region122: #{tpu_custom_call.1} parent=115 // pred_check_branch
          %845 = sbr.rel (%p843) target = $region124
        $region123: #{tpu_custom_call.1} parent=115 // pred_region
          _
        $region124: #{tpu_custom_call.1} parent=115 // pred_fallthru
          _
        %s846 = sand.u32 %s29, 1
        %s847 = sand.u32 %s29, 1
        %s848 = smul.addr %s847, 512
        %s849 = scalar_lea.vmem [#allocation4], %s848
        %p850 = pneg %p42
        %p851 = pneg %p39
        %s852 = sand.u32 %s55, 1
        %s853 = sand.u32 %s55, 1
        %s854 = smul.addr %s853, 512
        %s855 = scalar_lea.vmem [#allocation5], %s854
        %p856 = pneg %p68
        %p857 = pneg %p65
        %p858 = pneg %p89
        %p859 = pneg %p86
        %p860 = pneg %p110
        %p861 = pneg %p107
        %p862 = pneg %p131
        %p863 = pneg %p128
        %p864 = pneg %p152
        %p865 = pneg %p149
        %p866 = pneg %p173
        %p867 = pneg %p170
        %p868 = pneg %p199
        %p869 = pneg %p196
        %s870 = sand.u32 %s186, 1
        %s871 = scalar_lea.sflag [#allocation7], %s870
        %s872 = sand.u32 %s186, 1
        %s873 = smul.addr %s872, 8
        %s874 = scalar_lea.vmem [#allocation6], %s873
        %s875 = smul.u32 2, %s21
        %s876 = smul.u32 2, %s21
        %v877 = vld [vmem:[%s835] sm:$0xff]
        %v878 = vld [vmem:[%s835 + $0x8] sm:$0xff]
        %v879 = vld [vmem:[%s835 + $0x10] sm:$0xff]
        %v880 = vld [vmem:[%s835 + $0x18] sm:$0xff]
        %v881 = vld [vmem:[%s835 + $0x20] sm:$0xff]
        %v882 = vld [vmem:[%s835 + $0x28] sm:$0xff]
        %v883 = vld [vmem:[%s835 + $0x30] sm:$0xff]
        %v884 = vld [vmem:[%s835 + $0x38] sm:$0xff]
        %v885 = vld [vmem:[%s835 + $0x40] sm:$0xff]
        %v886 = vld [vmem:[%s835 + $0x48] sm:$0xff]
        %v887 = vld [vmem:[%s835 + $0x50] sm:$0xff]
        %v888 = vld [vmem:[%s835 + $0x58] sm:$0xff]
        %v889 = vld [vmem:[%s835 + $0x60] sm:$0xff]
        %v890 = vld [vmem:[%s835 + $0x68] sm:$0xff]
        %v891 = vld [vmem:[%s835 + $0x70] sm:$0xff]
        %v892 = vld [vmem:[%s835 + $0x78] sm:$0xff]
        %v893 = vld [vmem:[%s835 + $0x80] sm:$0xff]
        %v894 = vld [vmem:[%s835 + $0x88] sm:$0xff]
        %v895 = vld [vmem:[%s835 + $0x90] sm:$0xff]
        %v896 = vld [vmem:[%s835 + $0x98] sm:$0xff]
        %v897 = vld [vmem:[%s835 + $0xa0] sm:$0xff]
        %v898 = vld [vmem:[%s835 + $0xa8] sm:$0xff]
        %v899 = vld [vmem:[%s835 + $0xb0] sm:$0xff]
        %v900 = vld [vmem:[%s835 + $0xb8] sm:$0xff]
        %v901 = vld [vmem:[%s835 + $0xc0] sm:$0xff]
        %v902 = vld [vmem:[%s835 + $0xc8] sm:$0xff]
        %v903 = vld [vmem:[%s835 + $0xd0] sm:$0xff]
        %v904 = vld [vmem:[%s835 + $0xd8] sm:$0xff]
        %v905 = vld [vmem:[%s835 + $0xe0] sm:$0xff]
        %v906 = vld [vmem:[%s835 + $0xe8] sm:$0xff]
        %v907 = vld [vmem:[%s835 + $0xf0] sm:$0xff]
        %v908 = vld [vmem:[%s835 + $0xf8] sm:$0xff]
        %v909 = vld [vmem:[%s835 + $0x100] sm:$0xff]
        %v910 = vld [vmem:[%s835 + $0x108] sm:$0xff]
        %v911 = vld [vmem:[%s835 + $0x110] sm:$0xff]
        %v912 = vld [vmem:[%s835 + $0x118] sm:$0xff]
        %v913 = vld [vmem:[%s835 + $0x120] sm:$0xff]
        %v914 = vld [vmem:[%s835 + $0x128] sm:$0xff]
        %v915 = vld [vmem:[%s835 + $0x130] sm:$0xff]
        %v916 = vld [vmem:[%s835 + $0x138] sm:$0xff]
        %v917 = vld [vmem:[%s835 + $0x140] sm:$0xff]
        %v918 = vld [vmem:[%s835 + $0x148] sm:$0xff]
        %v919 = vld [vmem:[%s835 + $0x150] sm:$0xff]
        %v920 = vld [vmem:[%s835 + $0x158] sm:$0xff]
        %v921 = vld [vmem:[%s835 + $0x160] sm:$0xff]
        %v922 = vld [vmem:[%s835 + $0x168] sm:$0xff]
        %v923 = vld [vmem:[%s835 + $0x170] sm:$0xff]
        %v924 = vld [vmem:[%s835 + $0x178] sm:$0xff]
        %v925 = vld [vmem:[%s835 + $0x180] sm:$0xff]
        %v926 = vld [vmem:[%s835 + $0x188] sm:$0xff]
        %v927 = vld [vmem:[%s835 + $0x190] sm:$0xff]
        %v928 = vld [vmem:[%s835 + $0x198] sm:$0xff]
        %v929 = vld [vmem:[%s835 + $0x1a0] sm:$0xff]
        %v930 = vld [vmem:[%s835 + $0x1a8] sm:$0xff]
        %v931 = vld [vmem:[%s835 + $0x1b0] sm:$0xff]
        %v932 = vld [vmem:[%s835 + $0x1b8] sm:$0xff]
        %v933 = vld [vmem:[%s835 + $0x1c0] sm:$0xff]
        %v934 = vld [vmem:[%s835 + $0x1c8] sm:$0xff]
        %v935 = vld [vmem:[%s835 + $0x1d0] sm:$0xff]
        %v936 = vld [vmem:[%s835 + $0x1d8] sm:$0xff]
        %v937 = vld [vmem:[%s835 + $0x1e0] sm:$0xff]
        %v938 = vld [vmem:[%s835 + $0x1e8] sm:$0xff]
        %v939 = vld [vmem:[%s835 + $0x1f0] sm:$0xff]
        %v940 = vld [vmem:[%s835 + $0x1f8] sm:$0xff]
        %v941 = vld [vmem:[%s842] sm:$0xff]
        %v942 = vld [vmem:[%s842 + $0x8] sm:$0xff]
        %v943 = vld [vmem:[%s842 + $0x10] sm:$0xff]
        %v944 = vld [vmem:[%s842 + $0x18] sm:$0xff]
        %v945 = vld [vmem:[%s842 + $0x20] sm:$0xff]
        %v946 = vld [vmem:[%s842 + $0x28] sm:$0xff]
        %v947 = vld [vmem:[%s842 + $0x30] sm:$0xff]
        %v948 = vld [vmem:[%s842 + $0x38] sm:$0xff]
        %v949 = vld [vmem:[%s842 + $0x40] sm:$0xff]
        %v950 = vld [vmem:[%s842 + $0x48] sm:$0xff]
        %v951 = vld [vmem:[%s842 + $0x50] sm:$0xff]
        %v952 = vld [vmem:[%s842 + $0x58] sm:$0xff]
        %v953 = vld [vmem:[%s842 + $0x60] sm:$0xff]
        %v954 = vld [vmem:[%s842 + $0x68] sm:$0xff]
        %v955 = vld [vmem:[%s842 + $0x70] sm:$0xff]
        %v956 = vld [vmem:[%s842 + $0x78] sm:$0xff]
        %v957 = vld [vmem:[%s842 + $0x80] sm:$0xff]
        %v958 = vld [vmem:[%s842 + $0x88] sm:$0xff]
        %v959 = vld [vmem:[%s842 + $0x90] sm:$0xff]
        %v960 = vld [vmem:[%s842 + $0x98] sm:$0xff]
        %v961 = vld [vmem:[%s842 + $0xa0] sm:$0xff]
        %v962 = vld [vmem:[%s842 + $0xa8] sm:$0xff]
        %v963 = vld [vmem:[%s842 + $0xb0] sm:$0xff]
        %v964 = vld [vmem:[%s842 + $0xb8] sm:$0xff]
        %v965 = vld [vmem:[%s842 + $0xc0] sm:$0xff]
        %v966 = vld [vmem:[%s842 + $0xc8] sm:$0xff]
        %v967 = vld [vmem:[%s842 + $0xd0] sm:$0xff]
        %v968 = vld [vmem:[%s842 + $0xd8] sm:$0xff]
        %v969 = vld [vmem:[%s842 + $0xe0] sm:$0xff]
        %v970 = vld [vmem:[%s842 + $0xe8] sm:$0xff]
        %v971 = vld [vmem:[%s842 + $0xf0] sm:$0xff]
        %v972 = vld [vmem:[%s842 + $0xf8] sm:$0xff]
        %v973 = vld [vmem:[%s842 + $0x100] sm:$0xff]
        %v974 = vld [vmem:[%s842 + $0x108] sm:$0xff]
        %v975 = vld [vmem:[%s842 + $0x110] sm:$0xff]
        %v976 = vld [vmem:[%s842 + $0x118] sm:$0xff]
        %v977 = vld [vmem:[%s842 + $0x120] sm:$0xff]
        %v978 = vld [vmem:[%s842 + $0x128] sm:$0xff]
        %v979 = vld [vmem:[%s842 + $0x130] sm:$0xff]
        %v980 = vld [vmem:[%s842 + $0x138] sm:$0xff]
        %v981 = vld [vmem:[%s842 + $0x140] sm:$0xff]
        %v982 = vld [vmem:[%s842 + $0x148] sm:$0xff]
        %v983 = vld [vmem:[%s842 + $0x150] sm:$0xff]
        %v984 = vld [vmem:[%s842 + $0x158] sm:$0xff]
        %v985 = vld [vmem:[%s842 + $0x160] sm:$0xff]
        %v986 = vld [vmem:[%s842 + $0x168] sm:$0xff]
        %v987 = vld [vmem:[%s842 + $0x170] sm:$0xff]
        %v988 = vld [vmem:[%s842 + $0x178] sm:$0xff]
        %v989 = vld [vmem:[%s842 + $0x180] sm:$0xff]
        %v990 = vld [vmem:[%s842 + $0x188] sm:$0xff]
        %v991 = vld [vmem:[%s842 + $0x190] sm:$0xff]
        %v992 = vld [vmem:[%s842 + $0x198] sm:$0xff]
        %v993 = vld [vmem:[%s842 + $0x1a0] sm:$0xff]
        %v994 = vld [vmem:[%s842 + $0x1a8] sm:$0xff]
        %v995 = vld [vmem:[%s842 + $0x1b0] sm:$0xff]
        %v996 = vld [vmem:[%s842 + $0x1b8] sm:$0xff]
        %v997 = vld [vmem:[%s842 + $0x1c0] sm:$0xff]
        %v998 = vld [vmem:[%s842 + $0x1c8] sm:$0xff]
        %v999 = vld [vmem:[%s842 + $0x1d0] sm:$0xff]
        %v1000 = vld [vmem:[%s842 + $0x1d8] sm:$0xff]
        %v1001 = vld [vmem:[%s842 + $0x1e0] sm:$0xff]
        %v1002 = vld [vmem:[%s842 + $0x1e8] sm:$0xff]
        %v1003 = vld [vmem:[%s842 + $0x1f0] sm:$0xff]
        %v1004 = vld [vmem:[%s842 + $0x1f8] sm:$0xff]
        %vm1005 = vcmask 31744
        %1006 = vst.msk [vmem:[#allocation2] sm:$0xff] %vm1005, 0.0
        %vm1007 = vcmask 24576
        %1008 = vst.msk [vmem:[#allocation2 + $0x8] sm:$0x1] %vm1007, 0.0
        %1009 = vst.msk [vmem:[#allocation2 + $0x90] sm:$0xff] %vm1005, 0.0
        %1010 = vst.msk [vmem:[#allocation2 + $0x98] sm:$0x1] %vm1007, 0.0
        %1011 = vst.msk [vmem:[#allocation2 + $0x120] sm:$0xff] %vm1005, 0.0
        %1012 = vst.msk [vmem:[#allocation2 + $0x128] sm:$0x1] %vm1007, 0.0
        %1013 = vst.msk [vmem:[#allocation2 + $0x1b0] sm:$0xff] %vm1005, 0.0
        %1014 = vst.msk [vmem:[#allocation2 + $0x1b8] sm:$0x1] %vm1007, 0.0
        %1015 = vst.msk [vmem:[#allocation2 + $0x240] sm:$0xff] %vm1005, 0.0
        %1016 = vst.msk [vmem:[#allocation2 + $0x248] sm:$0x1] %vm1007, 0.0
        %1017 = vst.msk [vmem:[#allocation2 + $0x2d0] sm:$0xff] %vm1005, 0.0
        %1018 = vst.msk [vmem:[#allocation2 + $0x2d8] sm:$0x1] %vm1007, 0.0
        %1019 = vst.msk [vmem:[#allocation2 + $0x360] sm:$0xff] %vm1005, 0.0
        %1020 = vst.msk [vmem:[#allocation2 + $0x368] sm:$0x1] %vm1007, 0.0
        %1021 = vst.msk [vmem:[#allocation2 + $0x3f0] sm:$0xff] %vm1005, 0.0
        %1022 = vst.msk [vmem:[#allocation2 + $0x3f8] sm:$0x1] %vm1007, 0.0
        %1023 = vst.msk [vmem:[#allocation2] sm:$0x1] %vm1007, 0.0
        %1024 = vst.msk [vmem:[#allocation2 + $0x10] sm:$0x1] %vm1007, 0.0
        %1025 = vst.msk [vmem:[#allocation2 + $0x20] sm:$0x1] %vm1007, 0.0
        %1026 = vst.msk [vmem:[#allocation2 + $0x30] sm:$0x1] %vm1007, 0.0
        %1027 = vst.msk [vmem:[#allocation2 + $0x40] sm:$0x1] %vm1007, 0.0
        %1028 = vst.msk [vmem:[#allocation2 + $0x50] sm:$0x1] %vm1007, 0.0
        %1029 = vst.msk [vmem:[#allocation2 + $0x60] sm:$0x1] %vm1007, 0.0
        %1030 = vst.msk [vmem:[#allocation2 + $0x70] sm:$0x1] %vm1007, 0.0
        %1031 = vst.msk [vmem:[#allocation2 + $0x80] sm:$0x1] %vm1007, 0.0
        %1032 = vst.msk [vmem:[#allocation2 + $0x90] sm:$0x1] %vm1007, 0.0
        %1033 = vst.msk [vmem:[#allocation2 + $0xa0] sm:$0x1] %vm1007, 0.0
        %1034 = vst.msk [vmem:[#allocation2 + $0xb0] sm:$0x1] %vm1007, 0.0
        %1035 = vst.msk [vmem:[#allocation2 + $0xc0] sm:$0x1] %vm1007, 0.0
        %1036 = vst.msk [vmem:[#allocation2 + $0xd0] sm:$0x1] %vm1007, 0.0
        %1037 = vst.msk [vmem:[#allocation2 + $0xe0] sm:$0x1] %vm1007, 0.0
        %1038 = vst.msk [vmem:[#allocation2 + $0xf0] sm:$0x1] %vm1007, 0.0
        %1039 = vst.msk [vmem:[#allocation2 + $0x100] sm:$0x1] %vm1007, 0.0
        %1040 = vst.msk [vmem:[#allocation2 + $0x110] sm:$0x1] %vm1007, 0.0
        %1041 = vst.msk [vmem:[#allocation2 + $0x120] sm:$0x1] %vm1007, 0.0
        %1042 = vst.msk [vmem:[#allocation2 + $0x130] sm:$0x1] %vm1007, 0.0
        %1043 = vst.msk [vmem:[#allocation2 + $0x140] sm:$0x1] %vm1007, 0.0
        %1044 = vst.msk [vmem:[#allocation2 + $0x150] sm:$0x1] %vm1007, 0.0
        %1045 = vst.msk [vmem:[#allocation2 + $0x160] sm:$0x1] %vm1007, 0.0
        %1046 = vst.msk [vmem:[#allocation2 + $0x170] sm:$0x1] %vm1007, 0.0
        %1047 = vst.msk [vmem:[#allocation2 + $0x180] sm:$0x1] %vm1007, 0.0
        %1048 = vst.msk [vmem:[#allocation2 + $0x190] sm:$0x1] %vm1007, 0.0
        %1049 = vst.msk [vmem:[#allocation2 + $0x1a0] sm:$0x1] %vm1007, 0.0
        %1050 = vst.msk [vmem:[#allocation2 + $0x1b0] sm:$0x1] %vm1007, 0.0
        %1051 = vst.msk [vmem:[#allocation2 + $0x1c0] sm:$0x1] %vm1007, 0.0
        %1052 = vst.msk [vmem:[#allocation2 + $0x1d0] sm:$0x1] %vm1007, 0.0
        %1053 = vst.msk [vmem:[#allocation2 + $0x1e0] sm:$0x1] %vm1007, 0.0
        %1054 = vst.msk [vmem:[#allocation2 + $0x1f0] sm:$0x1] %vm1007, 0.0
        %1055 = vst.msk [vmem:[#allocation2 + $0x200] sm:$0x1] %vm1007, 0.0
        %1056 = vst.msk [vmem:[#allocation2 + $0x210] sm:$0x1] %vm1007, 0.0
        %1057 = vst.msk [vmem:[#allocation2 + $0x220] sm:$0x1] %vm1007, 0.0
        %1058 = vst.msk [vmem:[#allocation2 + $0x230] sm:$0x1] %vm1007, 0.0
        %1059 = vst.msk [vmem:[#allocation2 + $0x240] sm:$0x1] %vm1007, 0.0
        %1060 = vst.msk [vmem:[#allocation2 + $0x250] sm:$0x1] %vm1007, 0.0
        %1061 = vst.msk [vmem:[#allocation2 + $0x260] sm:$0x1] %vm1007, 0.0
        %1062 = vst.msk [vmem:[#allocation2 + $0x270] sm:$0x1] %vm1007, 0.0
        %1063 = vst.msk [vmem:[#allocation2 + $0x280] sm:$0x1] %vm1007, 0.0
        %1064 = vst.msk [vmem:[#allocation2 + $0x290] sm:$0x1] %vm1007, 0.0
        %1065 = vst.msk [vmem:[#allocation2 + $0x2a0] sm:$0x1] %vm1007, 0.0
        %1066 = vst.msk [vmem:[#allocation2 + $0x2b0] sm:$0x1] %vm1007, 0.0
        %1067 = vst.msk [vmem:[#allocation2 + $0x2c0] sm:$0x1] %vm1007, 0.0
        %1068 = vst.msk [vmem:[#allocation2 + $0x2d0] sm:$0x1] %vm1007, 0.0
        %1069 = vst.msk [vmem:[#allocation2 + $0x2e0] sm:$0x1] %vm1007, 0.0
        %1070 = vst.msk [vmem:[#allocation2 + $0x2f0] sm:$0x1] %vm1007, 0.0
        %1071 = vst.msk [vmem:[#allocation2 + $0x300] sm:$0x1] %vm1007, 0.0
        %1072 = vst.msk [vmem:[#allocation2 + $0x310] sm:$0x1] %vm1007, 0.0
        %1073 = vst.msk [vmem:[#allocation2 + $0x320] sm:$0x1] %vm1007, 0.0
        %1074 = vst.msk [vmem:[#allocation2 + $0x330] sm:$0x1] %vm1007, 0.0
        %1075 = vst.msk [vmem:[#allocation2 + $0x340] sm:$0x1] %vm1007, 0.0
        %1076 = vst.msk [vmem:[#allocation2 + $0x350] sm:$0x1] %vm1007, 0.0
        %1077 = vst.msk [vmem:[#allocation2 + $0x360] sm:$0x1] %vm1007, 0.0
        %1078 = vst.msk [vmem:[#allocation2 + $0x370] sm:$0x1] %vm1007, 0.0
        %1079 = vst.msk [vmem:[#allocation2 + $0x380] sm:$0x1] %vm1007, 0.0
        %1080 = vst.msk [vmem:[#allocation2 + $0x390] sm:$0x1] %vm1007, 0.0
        %1081 = vst.msk [vmem:[#allocation2 + $0x3a0] sm:$0x1] %vm1007, 0.0
        %1082 = vst.msk [vmem:[#allocation2 + $0x3b0] sm:$0x1] %vm1007, 0.0
        %1083 = vst.msk [vmem:[#allocation2 + $0x3c0] sm:$0x1] %vm1007, 0.0
        %1084 = vst.msk [vmem:[#allocation2 + $0x3d0] sm:$0x1] %vm1007, 0.0
        %1085 = vst.msk [vmem:[#allocation2 + $0x3e0] sm:$0x1] %vm1007, 0.0
        %1086 = vst.msk [vmem:[#allocation2 + $0x3f0] sm:$0x1] %vm1007, 0.0
        %1087 = vst.msk [vmem:[#allocation2 + $0x400] sm:$0x1] %vm1007, 0.0
        %1088 = vst.msk [vmem:[#allocation2 + $0x410] sm:$0x1] %vm1007, 0.0
        %1089 = vst.msk [vmem:[#allocation2 + $0x420] sm:$0x1] %vm1007, 0.0
        %1090 = vst.msk [vmem:[#allocation2 + $0x430] sm:$0x1] %vm1007, 0.0
        %1091 = vst.msk [vmem:[#allocation2 + $0x440] sm:$0x1] %vm1007, 0.0
        %1092 = vst.msk [vmem:[#allocation2 + $0x450] sm:$0x1] %vm1007, 0.0
        %1093 = vst.msk [vmem:[#allocation2 + $0x460] sm:$0x1] %vm1007, 0.0
        %1094 = vst.msk [vmem:[#allocation2 + $0x470] sm:$0x1] %vm1007, 0.0
        %1095 = vst.msk [vmem:[#allocation3] sm:$0xff] %vm1005, 0.0
        %1096 = vst.msk [vmem:[#allocation3 + $0x8] sm:$0x1] %vm1007, 0.0
        %1097 = vst.msk [vmem:[#allocation3 + $0x90] sm:$0xff] %vm1005, 0.0
        %1098 = vst.msk [vmem:[#allocation3 + $0x98] sm:$0x1] %vm1007, 0.0
        %1099 = vst.msk [vmem:[#allocation3 + $0x120] sm:$0xff] %vm1005, 0.0
        %1100 = vst.msk [vmem:[#allocation3 + $0x128] sm:$0x1] %vm1007, 0.0
        %1101 = vst.msk [vmem:[#allocation3 + $0x1b0] sm:$0xff] %vm1005, 0.0
        %1102 = vst.msk [vmem:[#allocation3 + $0x1b8] sm:$0x1] %vm1007, 0.0
        %1103 = vst.msk [vmem:[#allocation3 + $0x240] sm:$0xff] %vm1005, 0.0
        %1104 = vst.msk [vmem:[#allocation3 + $0x248] sm:$0x1] %vm1007, 0.0
        %1105 = vst.msk [vmem:[#allocation3 + $0x2d0] sm:$0xff] %vm1005, 0.0
        %1106 = vst.msk [vmem:[#allocation3 + $0x2d8] sm:$0x1] %vm1007, 0.0
        %1107 = vst.msk [vmem:[#allocation3 + $0x360] sm:$0xff] %vm1005, 0.0
        %1108 = vst.msk [vmem:[#allocation3 + $0x368] sm:$0x1] %vm1007, 0.0
        %1109 = vst.msk [vmem:[#allocation3 + $0x3f0] sm:$0xff] %vm1005, 0.0
        %1110 = vst.msk [vmem:[#allocation3 + $0x3f8] sm:$0x1] %vm1007, 0.0
        %1111 = vst.msk [vmem:[#allocation3] sm:$0x1] %vm1007, 0.0
        %1112 = vst.msk [vmem:[#allocation3 + $0x10] sm:$0x1] %vm1007, 0.0
        %1113 = vst.msk [vmem:[#allocation3 + $0x20] sm:$0x1] %vm1007, 0.0
        %1114 = vst.msk [vmem:[#allocation3 + $0x30] sm:$0x1] %vm1007, 0.0
        %1115 = vst.msk [vmem:[#allocation3 + $0x40] sm:$0x1] %vm1007, 0.0
        %1116 = vst.msk [vmem:[#allocation3 + $0x50] sm:$0x1] %vm1007, 0.0
        %1117 = vst.msk [vmem:[#allocation3 + $0x60] sm:$0x1] %vm1007, 0.0
        %1118 = vst.msk [vmem:[#allocation3 + $0x70] sm:$0x1] %vm1007, 0.0
        %1119 = vst.msk [vmem:[#allocation3 + $0x80] sm:$0x1] %vm1007, 0.0
        %1120 = vst.msk [vmem:[#allocation3 + $0x90] sm:$0x1] %vm1007, 0.0
        %1121 = vst.msk [vmem:[#allocation3 + $0xa0] sm:$0x1] %vm1007, 0.0
        %1122 = vst.msk [vmem:[#allocation3 + $0xb0] sm:$0x1] %vm1007, 0.0
        %1123 = vst.msk [vmem:[#allocation3 + $0xc0] sm:$0x1] %vm1007, 0.0
        %1124 = vst.msk [vmem:[#allocation3 + $0xd0] sm:$0x1] %vm1007, 0.0
        %1125 = vst.msk [vmem:[#allocation3 + $0xe0] sm:$0x1] %vm1007, 0.0
        %1126 = vst.msk [vmem:[#allocation3 + $0xf0] sm:$0x1] %vm1007, 0.0
        %1127 = vst.msk [vmem:[#allocation3 + $0x100] sm:$0x1] %vm1007, 0.0
        %1128 = vst.msk [vmem:[#allocation3 + $0x110] sm:$0x1] %vm1007, 0.0
        %1129 = vst.msk [vmem:[#allocation3 + $0x120] sm:$0x1] %vm1007, 0.0
        %1130 = vst.msk [vmem:[#allocation3 + $0x130] sm:$0x1] %vm1007, 0.0
        %1131 = vst.msk [vmem:[#allocation3 + $0x140] sm:$0x1] %vm1007, 0.0
        %1132 = vst.msk [vmem:[#allocation3 + $0x150] sm:$0x1] %vm1007, 0.0
        %1133 = vst.msk [vmem:[#allocation3 + $0x160] sm:$0x1] %vm1007, 0.0
        %1134 = vst.msk [vmem:[#allocation3 + $0x170] sm:$0x1] %vm1007, 0.0
        %1135 = vst.msk [vmem:[#allocation3 + $0x180] sm:$0x1] %vm1007, 0.0
        %1136 = vst.msk [vmem:[#allocation3 + $0x190] sm:$0x1] %vm1007, 0.0
        %1137 = vst.msk [vmem:[#allocation3 + $0x1a0] sm:$0x1] %vm1007, 0.0
        %1138 = vst.msk [vmem:[#allocation3 + $0x1b0] sm:$0x1] %vm1007, 0.0
        %1139 = vst.msk [vmem:[#allocation3 + $0x1c0] sm:$0x1] %vm1007, 0.0
        %1140 = vst.msk [vmem:[#allocation3 + $0x1d0] sm:$0x1] %vm1007, 0.0
        %1141 = vst.msk [vmem:[#allocation3 + $0x1e0] sm:$0x1] %vm1007, 0.0
        %1142 = vst.msk [vmem:[#allocation3 + $0x1f0] sm:$0x1] %vm1007, 0.0
        %1143 = vst.msk [vmem:[#allocation3 + $0x200] sm:$0x1] %vm1007, 0.0
        %1144 = vst.msk [vmem:[#allocation3 + $0x210] sm:$0x1] %vm1007, 0.0
        %1145 = vst.msk [vmem:[#allocation3 + $0x220] sm:$0x1] %vm1007, 0.0
        %1146 = vst.msk [vmem:[#allocation3 + $0x230] sm:$0x1] %vm1007, 0.0
        %1147 = vst.msk [vmem:[#allocation3 + $0x240] sm:$0x1] %vm1007, 0.0
        %1148 = vst.msk [vmem:[#allocation3 + $0x250] sm:$0x1] %vm1007, 0.0
        %1149 = vst.msk [vmem:[#allocation3 + $0x260] sm:$0x1] %vm1007, 0.0
        %1150 = vst.msk [vmem:[#allocation3 + $0x270] sm:$0x1] %vm1007, 0.0
        %1151 = vst.msk [vmem:[#allocation3 + $0x280] sm:$0x1] %vm1007, 0.0
        %1152 = vst.msk [vmem:[#allocation3 + $0x290] sm:$0x1] %vm1007, 0.0
        %1153 = vst.msk [vmem:[#allocation3 + $0x2a0] sm:$0x1] %vm1007, 0.0
        %1154 = vst.msk [vmem:[#allocation3 + $0x2b0] sm:$0x1] %vm1007, 0.0
        %1155 = vst.msk [vmem:[#allocation3 + $0x2c0] sm:$0x1] %vm1007, 0.0
        %1156 = vst.msk [vmem:[#allocation3 + $0x2d0] sm:$0x1] %vm1007, 0.0
        %1157 = vst.msk [vmem:[#allocation3 + $0x2e0] sm:$0x1] %vm1007, 0.0
        %1158 = vst.msk [vmem:[#allocation3 + $0x2f0] sm:$0x1] %vm1007, 0.0
        %1159 = vst.msk [vmem:[#allocation3 + $0x300] sm:$0x1] %vm1007, 0.0
        %1160 = vst.msk [vmem:[#allocation3 + $0x310] sm:$0x1] %vm1007, 0.0
        %1161 = vst.msk [vmem:[#allocation3 + $0x320] sm:$0x1] %vm1007, 0.0
        %1162 = vst.msk [vmem:[#allocation3 + $0x330] sm:$0x1] %vm1007, 0.0
        %1163 = vst.msk [vmem:[#allocation3 + $0x340] sm:$0x1] %vm1007, 0.0
        %1164 = vst.msk [vmem:[#allocation3 + $0x350] sm:$0x1] %vm1007, 0.0
        %1165 = vst.msk [vmem:[#allocation3 + $0x360] sm:$0x1] %vm1007, 0.0
        %1166 = vst.msk [vmem:[#allocation3 + $0x370] sm:$0x1] %vm1007, 0.0
        %1167 = vst.msk [vmem:[#allocation3 + $0x380] sm:$0x1] %vm1007, 0.0
        %1168 = vst.msk [vmem:[#allocation3 + $0x390] sm:$0x1] %vm1007, 0.0
        %1169 = vst.msk [vmem:[#allocation3 + $0x3a0] sm:$0x1] %vm1007, 0.0
        %1170 = vst.msk [vmem:[#allocation3 + $0x3b0] sm:$0x1] %vm1007, 0.0
        %1171 = vst.msk [vmem:[#allocation3 + $0x3c0] sm:$0x1] %vm1007, 0.0
        %1172 = vst.msk [vmem:[#allocation3 + $0x3d0] sm:$0x1] %vm1007, 0.0
        %1173 = vst.msk [vmem:[#allocation3 + $0x3e0] sm:$0x1] %vm1007, 0.0
        %1174 = vst.msk [vmem:[#allocation3 + $0x3f0] sm:$0x1] %vm1007, 0.0
        %1175 = vst.msk [vmem:[#allocation3 + $0x400] sm:$0x1] %vm1007, 0.0
        %1176 = vst.msk [vmem:[#allocation3 + $0x410] sm:$0x1] %vm1007, 0.0
        %1177 = vst.msk [vmem:[#allocation3 + $0x420] sm:$0x1] %vm1007, 0.0
        %1178 = vst.msk [vmem:[#allocation3 + $0x430] sm:$0x1] %vm1007, 0.0
        %1179 = vst.msk [vmem:[#allocation3 + $0x440] sm:$0x1] %vm1007, 0.0
        %1180 = vst.msk [vmem:[#allocation3 + $0x450] sm:$0x1] %vm1007, 0.0
        %1181 = vst.msk [vmem:[#allocation3 + $0x460] sm:$0x1] %vm1007, 0.0
        %1182 = vst.msk [vmem:[#allocation3 + $0x470] sm:$0x1] %vm1007, 0.0
        %s1183 = scalar_lea.vmem [#allocation2], 16
        %1184 = vst.msk [vmem:[%s1183 + $0x1] sm:$0xff] %vm1005, %v877
        %1185 = vst.msk [vmem:[%s1183 + $0x11] sm:$0xff] %vm1005, %v878
        %1186 = vst.msk [vmem:[%s1183 + $0x21] sm:$0xff] %vm1005, %v879
        %1187 = vst.msk [vmem:[%s1183 + $0x31] sm:$0xff] %vm1005, %v880
        %1188 = vst.msk [vmem:[%s1183 + $0x41] sm:$0xff] %vm1005, %v881
        %1189 = vst.msk [vmem:[%s1183 + $0x51] sm:$0xff] %vm1005, %v882
        %1190 = vst.msk [vmem:[%s1183 + $0x61] sm:$0xff] %vm1005, %v883
        %1191 = vst.msk [vmem:[%s1183 + $0x71] sm:$0xff] %vm1005, %v884
        %1192 = vst.msk [vmem:[%s1183 + $0x91] sm:$0xff] %vm1005, %v885
        %1193 = vst.msk [vmem:[%s1183 + $0xa1] sm:$0xff] %vm1005, %v886
        %1194 = vst.msk [vmem:[%s1183 + $0xb1] sm:$0xff] %vm1005, %v887
        %1195 = vst.msk [vmem:[%s1183 + $0xc1] sm:$0xff] %vm1005, %v888
        %1196 = vst.msk [vmem:[%s1183 + $0xd1] sm:$0xff] %vm1005, %v889
        %1197 = vst.msk [vmem:[%s1183 + $0xe1] sm:$0xff] %vm1005, %v890
        %1198 = vst.msk [vmem:[%s1183 + $0xf1] sm:$0xff] %vm1005, %v891
        %1199 = vst.msk [vmem:[%s1183 + $0x101] sm:$0xff] %vm1005, %v892
        %1200 = vst.msk [vmem:[%s1183 + $0x121] sm:$0xff] %vm1005, %v893
        %1201 = vst.msk [vmem:[%s1183 + $0x131] sm:$0xff] %vm1005, %v894
        %1202 = vst.msk [vmem:[%s1183 + $0x141] sm:$0xff] %vm1005, %v895
        %1203 = vst.msk [vmem:[%s1183 + $0x151] sm:$0xff] %vm1005, %v896
        %1204 = vst.msk [vmem:[%s1183 + $0x161] sm:$0xff] %vm1005, %v897
        %1205 = vst.msk [vmem:[%s1183 + $0x171] sm:$0xff] %vm1005, %v898
        %1206 = vst.msk [vmem:[%s1183 + $0x181] sm:$0xff] %vm1005, %v899
        %1207 = vst.msk [vmem:[%s1183 + $0x191] sm:$0xff] %vm1005, %v900
        %1208 = vst.msk [vmem:[%s1183 + $0x1b1] sm:$0xff] %vm1005, %v901
        %1209 = vst.msk [vmem:[%s1183 + $0x1c1] sm:$0xff] %vm1005, %v902
        %1210 = vst.msk [vmem:[%s1183 + $0x1d1] sm:$0xff] %vm1005, %v903
        %1211 = vst.msk [vmem:[%s1183 + $0x1e1] sm:$0xff] %vm1005, %v904
        %1212 = vst.msk [vmem:[%s1183 + $0x1f1] sm:$0xff] %vm1005, %v905
        %1213 = vst.msk [vmem:[%s1183 + $0x201] sm:$0xff] %vm1005, %v906
        %1214 = vst.msk [vmem:[%s1183 + $0x211] sm:$0xff] %vm1005, %v907
        %1215 = vst.msk [vmem:[%s1183 + $0x221] sm:$0xff] %vm1005, %v908
        %1216 = vst.msk [vmem:[%s1183 + $0x241] sm:$0xff] %vm1005, %v909
        %1217 = vst.msk [vmem:[%s1183 + $0x251] sm:$0xff] %vm1005, %v910
        %1218 = vst.msk [vmem:[%s1183 + $0x261] sm:$0xff] %vm1005, %v911
        %1219 = vst.msk [vmem:[%s1183 + $0x271] sm:$0xff] %vm1005, %v912
        %1220 = vst.msk [vmem:[%s1183 + $0x281] sm:$0xff] %vm1005, %v913
        %1221 = vst.msk [vmem:[%s1183 + $0x291] sm:$0xff] %vm1005, %v914
        %1222 = vst.msk [vmem:[%s1183 + $0x2a1] sm:$0xff] %vm1005, %v915
        %1223 = vst.msk [vmem:[%s1183 + $0x2b1] sm:$0xff] %vm1005, %v916
        %1224 = vst.msk [vmem:[%s1183 + $0x2d1] sm:$0xff] %vm1005, %v917
        %1225 = vst.msk [vmem:[%s1183 + $0x2e1] sm:$0xff] %vm1005, %v918
        %1226 = vst.msk [vmem:[%s1183 + $0x2f1] sm:$0xff] %vm1005, %v919
        %1227 = vst.msk [vmem:[%s1183 + $0x301] sm:$0xff] %vm1005, %v920
        %1228 = vst.msk [vmem:[%s1183 + $0x311] sm:$0xff] %vm1005, %v921
        %1229 = vst.msk [vmem:[%s1183 + $0x321] sm:$0xff] %vm1005, %v922
        %1230 = vst.msk [vmem:[%s1183 + $0x331] sm:$0xff] %vm1005, %v923
        %1231 = vst.msk [vmem:[%s1183 + $0x341] sm:$0xff] %vm1005, %v924
        %1232 = vst.msk [vmem:[%s1183 + $0x361] sm:$0xff] %vm1005, %v925
        %1233 = vst.msk [vmem:[%s1183 + $0x371] sm:$0xff] %vm1005, %v926
        %1234 = vst.msk [vmem:[%s1183 + $0x381] sm:$0xff] %vm1005, %v927
        %1235 = vst.msk [vmem:[%s1183 + $0x391] sm:$0xff] %vm1005, %v928
        %1236 = vst.msk [vmem:[%s1183 + $0x3a1] sm:$0xff] %vm1005, %v929
        %1237 = vst.msk [vmem:[%s1183 + $0x3b1] sm:$0xff] %vm1005, %v930
        %1238 = vst.msk [vmem:[%s1183 + $0x3c1] sm:$0xff] %vm1005, %v931
        %1239 = vst.msk [vmem:[%s1183 + $0x3d1] sm:$0xff] %vm1005, %v932
        %1240 = vst.msk [vmem:[%s1183 + $0x3f1] sm:$0xff] %vm1005, %v933
        %1241 = vst.msk [vmem:[%s1183 + $0x401] sm:$0xff] %vm1005, %v934
        %1242 = vst.msk [vmem:[%s1183 + $0x411] sm:$0xff] %vm1005, %v935
        %1243 = vst.msk [vmem:[%s1183 + $0x421] sm:$0xff] %vm1005, %v936
        %1244 = vst.msk [vmem:[%s1183 + $0x431] sm:$0xff] %vm1005, %v937
        %1245 = vst.msk [vmem:[%s1183 + $0x441] sm:$0xff] %vm1005, %v938
        %1246 = vst.msk [vmem:[%s1183 + $0x451] sm:$0xff] %vm1005, %v939
        %1247 = vst.msk [vmem:[%s1183 + $0x461] sm:$0xff] %vm1005, %v940
        %s1248 = scalar_lea.vmem [#allocation3], 16
        %1249 = vst.msk [vmem:[%s1248 + $0x1] sm:$0xff] %vm1005, %v941
        %1250 = vst.msk [vmem:[%s1248 + $0x11] sm:$0xff] %vm1005, %v942
        %1251 = vst.msk [vmem:[%s1248 + $0x21] sm:$0xff] %vm1005, %v943
        %1252 = vst.msk [vmem:[%s1248 + $0x31] sm:$0xff] %vm1005, %v944
        %1253 = vst.msk [vmem:[%s1248 + $0x41] sm:$0xff] %vm1005, %v945
        %1254 = vst.msk [vmem:[%s1248 + $0x51] sm:$0xff] %vm1005, %v946
        %1255 = vst.msk [vmem:[%s1248 + $0x61] sm:$0xff] %vm1005, %v947
        %1256 = vst.msk [vmem:[%s1248 + $0x71] sm:$0xff] %vm1005, %v948
        %1257 = vst.msk [vmem:[%s1248 + $0x91] sm:$0xff] %vm1005, %v949
        %1258 = vst.msk [vmem:[%s1248 + $0xa1] sm:$0xff] %vm1005, %v950
        %1259 = vst.msk [vmem:[%s1248 + $0xb1] sm:$0xff] %vm1005, %v951
        %1260 = vst.msk [vmem:[%s1248 + $0xc1] sm:$0xff] %vm1005, %v952
        %1261 = vst.msk [vmem:[%s1248 + $0xd1] sm:$0xff] %vm1005, %v953
        %1262 = vst.msk [vmem:[%s1248 + $0xe1] sm:$0xff] %vm1005, %v954
        %1263 = vst.msk [vmem:[%s1248 + $0xf1] sm:$0xff] %vm1005, %v955
        %1264 = vst.msk [vmem:[%s1248 + $0x101] sm:$0xff] %vm1005, %v956
        %1265 = vst.msk [vmem:[%s1248 + $0x121] sm:$0xff] %vm1005, %v957
        %1266 = vst.msk [vmem:[%s1248 + $0x131] sm:$0xff] %vm1005, %v958
        %1267 = vst.msk [vmem:[%s1248 + $0x141] sm:$0xff] %vm1005, %v959
        %1268 = vst.msk [vmem:[%s1248 + $0x151] sm:$0xff] %vm1005, %v960
        %1269 = vst.msk [vmem:[%s1248 + $0x161] sm:$0xff] %vm1005, %v961
        %1270 = vst.msk [vmem:[%s1248 + $0x171] sm:$0xff] %vm1005, %v962
        %1271 = vst.msk [vmem:[%s1248 + $0x181] sm:$0xff] %vm1005, %v963
        %1272 = vst.msk [vmem:[%s1248 + $0x191] sm:$0xff] %vm1005, %v964
        %1273 = vst.msk [vmem:[%s1248 + $0x1b1] sm:$0xff] %vm1005, %v965
        %1274 = vst.msk [vmem:[%s1248 + $0x1c1] sm:$0xff] %vm1005, %v966
        %1275 = vst.msk [vmem:[%s1248 + $0x1d1] sm:$0xff] %vm1005, %v967
        %1276 = vst.msk [vmem:[%s1248 + $0x1e1] sm:$0xff] %vm1005, %v968
        %1277 = vst.msk [vmem:[%s1248 + $0x1f1] sm:$0xff] %vm1005, %v969
        %1278 = vst.msk [vmem:[%s1248 + $0x201] sm:$0xff] %vm1005, %v970
        %1279 = vst.msk [vmem:[%s1248 + $0x211] sm:$0xff] %vm1005, %v971
        %1280 = vst.msk [vmem:[%s1248 + $0x221] sm:$0xff] %vm1005, %v972
        %1281 = vst.msk [vmem:[%s1248 + $0x241] sm:$0xff] %vm1005, %v973
        %1282 = vst.msk [vmem:[%s1248 + $0x251] sm:$0xff] %vm1005, %v974
        %1283 = vst.msk [vmem:[%s1248 + $0x261] sm:$0xff] %vm1005, %v975
        %1284 = vst.msk [vmem:[%s1248 + $0x271] sm:$0xff] %vm1005, %v976
        %1285 = vst.msk [vmem:[%s1248 + $0x281] sm:$0xff] %vm1005, %v977
        %1286 = vst.msk [vmem:[%s1248 + $0x291] sm:$0xff] %vm1005, %v978
        %1287 = vst.msk [vmem:[%s1248 + $0x2a1] sm:$0xff] %vm1005, %v979
        %1288 = vst.msk [vmem:[%s1248 + $0x2b1] sm:$0xff] %vm1005, %v980
        %1289 = vst.msk [vmem:[%s1248 + $0x2d1] sm:$0xff] %vm1005, %v981
        %1290 = vst.msk [vmem:[%s1248 + $0x2e1] sm:$0xff] %vm1005, %v982
        %1291 = vst.msk [vmem:[%s1248 + $0x2f1] sm:$0xff] %vm1005, %v983
        %1292 = vst.msk [vmem:[%s1248 + $0x301] sm:$0xff] %vm1005, %v984
        %1293 = vst.msk [vmem:[%s1248 + $0x311] sm:$0xff] %vm1005, %v985
        %1294 = vst.msk [vmem:[%s1248 + $0x321] sm:$0xff] %vm1005, %v986
        %1295 = vst.msk [vmem:[%s1248 + $0x331] sm:$0xff] %vm1005, %v987
        %1296 = vst.msk [vmem:[%s1248 + $0x341] sm:$0xff] %vm1005, %v988
        %1297 = vst.msk [vmem:[%s1248 + $0x361] sm:$0xff] %vm1005, %v989
        %1298 = vst.msk [vmem:[%s1248 + $0x371] sm:$0xff] %vm1005, %v990
        %1299 = vst.msk [vmem:[%s1248 + $0x381] sm:$0xff] %vm1005, %v991
        %1300 = vst.msk [vmem:[%s1248 + $0x391] sm:$0xff] %vm1005, %v992
        %1301 = vst.msk [vmem:[%s1248 + $0x3a1] sm:$0xff] %vm1005, %v993
        %1302 = vst.msk [vmem:[%s1248 + $0x3b1] sm:$0xff] %vm1005, %v994
        %1303 = vst.msk [vmem:[%s1248 + $0x3c1] sm:$0xff] %vm1005, %v995
        %1304 = vst.msk [vmem:[%s1248 + $0x3d1] sm:$0xff] %vm1005, %v996
        %1305 = vst.msk [vmem:[%s1248 + $0x3f1] sm:$0xff] %vm1005, %v997
        %1306 = vst.msk [vmem:[%s1248 + $0x401] sm:$0xff] %vm1005, %v998
        %1307 = vst.msk [vmem:[%s1248 + $0x411] sm:$0xff] %vm1005, %v999
        %1308 = vst.msk [vmem:[%s1248 + $0x421] sm:$0xff] %vm1005, %v1000
        %1309 = vst.msk [vmem:[%s1248 + $0x431] sm:$0xff] %vm1005, %v1001
        %1310 = vst.msk [vmem:[%s1248 + $0x441] sm:$0xff] %vm1005, %v1002
        %1311 = vst.msk [vmem:[%s1248 + $0x451] sm:$0xff] %vm1005, %v1003
        %1312 = vst.msk [vmem:[%s1248 + $0x461] sm:$0xff] %vm1005, %v1004
        %v1313 = vld [vmem:[#allocation2 + $0x10] sm:$0xff]
        %v1314 = vld [vmem:[#allocation2 + $0x18] sm:$0x1]
        %v1315 = vld [vmem:[#allocation2 + $0x20] sm:$0xff]
        %v1316 = vld [vmem:[#allocation2 + $0x28] sm:$0x1]
        %v1317 = vld [vmem:[#allocation2 + $0x30] sm:$0xff]
        %v1318 = vld [vmem:[#allocation2 + $0x38] sm:$0x1]
        %v1319 = vld [vmem:[#allocation2 + $0x40] sm:$0xff]
        %v1320 = vld [vmem:[#allocation2 + $0x48] sm:$0x1]
        %v1321 = vld [vmem:[#allocation2 + $0x50] sm:$0xff]
        %v1322 = vld [vmem:[#allocation2 + $0x58] sm:$0x1]
        %v1323 = vld [vmem:[#allocation2 + $0x60] sm:$0xff]
        %v1324 = vld [vmem:[#allocation2 + $0x68] sm:$0x1]
        %v1325 = vld [vmem:[#allocation2 + $0x70] sm:$0xff]
        %v1326 = vld [vmem:[#allocation2 + $0x78] sm:$0x1]
        %v1327 = vld [vmem:[#allocation2 + $0x80] sm:$0xff]
        %v1328 = vld [vmem:[#allocation2 + $0x88] sm:$0x1]
        %v1329 = vld [vmem:[#allocation2 + $0xa0] sm:$0xff]
        %v1330 = vld [vmem:[#allocation2 + $0xa8] sm:$0x1]
        %v1331 = vld [vmem:[#allocation2 + $0xb0] sm:$0xff]
        %v1332 = vld [vmem:[#allocation2 + $0xb8] sm:$0x1]
        %v1333 = vld [vmem:[#allocation2 + $0xc0] sm:$0xff]
        %v1334 = vld [vmem:[#allocation2 + $0xc8] sm:$0x1]
        %v1335 = vld [vmem:[#allocation2 + $0xd0] sm:$0xff]
        %v1336 = vld [vmem:[#allocation2 + $0xd8] sm:$0x1]
        %v1337 = vld [vmem:[#allocation2 + $0xe0] sm:$0xff]
        %v1338 = vld [vmem:[#allocation2 + $0xe8] sm:$0x1]
        %v1339 = vld [vmem:[#allocation2 + $0xf0] sm:$0xff]
        %v1340 = vld [vmem:[#allocation2 + $0xf8] sm:$0x1]
        %v1341 = vld [vmem:[#allocation2 + $0x100] sm:$0xff]
        %v1342 = vld [vmem:[#allocation2 + $0x108] sm:$0x1]
        %v1343 = vld [vmem:[#allocation2 + $0x110] sm:$0xff]
        %v1344 = vld [vmem:[#allocation2 + $0x118] sm:$0x1]
        %v1345 = vld [vmem:[#allocation2 + $0x130] sm:$0xff]
        %v1346 = vld [vmem:[#allocation2 + $0x138] sm:$0x1]
        %v1347 = vld [vmem:[#allocation2 + $0x140] sm:$0xff]
        %v1348 = vld [vmem:[#allocation2 + $0x148] sm:$0x1]
        %v1349 = vld [vmem:[#allocation2 + $0x150] sm:$0xff]
        %v1350 = vld [vmem:[#allocation2 + $0x158] sm:$0x1]
        %v1351 = vld [vmem:[#allocation2 + $0x160] sm:$0xff]
        %v1352 = vld [vmem:[#allocation2 + $0x168] sm:$0x1]
        %v1353 = vld [vmem:[#allocation2 + $0x170] sm:$0xff]
        %v1354 = vld [vmem:[#allocation2 + $0x178] sm:$0x1]
        %v1355 = vld [vmem:[#allocation2 + $0x180] sm:$0xff]
        %v1356 = vld [vmem:[#allocation2 + $0x188] sm:$0x1]
        %v1357 = vld [vmem:[#allocation2 + $0x190] sm:$0xff]
        %v1358 = vld [vmem:[#allocation2 + $0x198] sm:$0x1]
        %v1359 = vld [vmem:[#allocation2 + $0x1a0] sm:$0xff]
        %v1360 = vld [vmem:[#allocation2 + $0x1a8] sm:$0x1]
        %v1361 = vld [vmem:[#allocation2 + $0x1c0] sm:$0xff]
        %v1362 = vld [vmem:[#allocation2 + $0x1c8] sm:$0x1]
        %v1363 = vld [vmem:[#allocation2 + $0x1d0] sm:$0xff]
        %v1364 = vld [vmem:[#allocation2 + $0x1d8] sm:$0x1]
        %v1365 = vld [vmem:[#allocation2 + $0x1e0] sm:$0xff]
        %v1366 = vld [vmem:[#allocation2 + $0x1e8] sm:$0x1]
        %v1367 = vld [vmem:[#allocation2 + $0x1f0] sm:$0xff]
        %v1368 = vld [vmem:[#allocation2 + $0x1f8] sm:$0x1]
        %v1369 = vld [vmem:[#allocation2 + $0x200] sm:$0xff]
        %v1370 = vld [vmem:[#allocation2 + $0x208] sm:$0x1]
        %v1371 = vld [vmem:[#allocation2 + $0x210] sm:$0xff]
        %v1372 = vld [vmem:[#allocation2 + $0x218] sm:$0x1]
        %v1373 = vld [vmem:[#allocation2 + $0x220] sm:$0xff]
        %v1374 = vld [vmem:[#allocation2 + $0x228] sm:$0x1]
        %v1375 = vld [vmem:[#allocation2 + $0x230] sm:$0xff]
        %v1376 = vld [vmem:[#allocation2 + $0x238] sm:$0x1]
        %v1377 = vld [vmem:[#allocation2 + $0x240] sm:$0xff]
        %v1378 = vld [vmem:[#allocation2 + $0x248] sm:$0x1]
        %v1379 = vld [vmem:[#allocation2 + $0x250] sm:$0xff]
        %v1380 = vld [vmem:[#allocation2 + $0x258] sm:$0x1]
        %v1381 = vld [vmem:[#allocation2 + $0x260] sm:$0xff]
        %v1382 = vld [vmem:[#allocation2 + $0x268] sm:$0x1]
        %v1383 = vld [vmem:[#allocation2 + $0x270] sm:$0xff]
        %v1384 = vld [vmem:[#allocation2 + $0x278] sm:$0x1]
        %v1385 = vld [vmem:[#allocation2 + $0x280] sm:$0xff]
        %v1386 = vld [vmem:[#allocation2 + $0x288] sm:$0x1]
        %v1387 = vld [vmem:[#allocation2 + $0x290] sm:$0xff]
        %v1388 = vld [vmem:[#allocation2 + $0x298] sm:$0x1]
        %v1389 = vld [vmem:[#allocation2 + $0x2a0] sm:$0xff]
        %v1390 = vld [vmem:[#allocation2 + $0x2a8] sm:$0x1]
        %v1391 = vld [vmem:[#allocation2 + $0x2b0] sm:$0xff]
        %v1392 = vld [vmem:[#allocation2 + $0x2b8] sm:$0x1]
        %v1393 = vld [vmem:[#allocation2 + $0x2c0] sm:$0xff]
        %v1394 = vld [vmem:[#allocation2 + $0x2c8] sm:$0x1]
        %v1395 = vld [vmem:[#allocation2 + $0x2d0] sm:$0xff]
        %v1396 = vld [vmem:[#allocation2 + $0x2d8] sm:$0x1]
        %v1397 = vld [vmem:[#allocation2 + $0x2e0] sm:$0xff]
        %v1398 = vld [vmem:[#allocation2 + $0x2e8] sm:$0x1]
        %v1399 = vld [vmem:[#allocation2 + $0x2f0] sm:$0xff]
        %v1400 = vld [vmem:[#allocation2 + $0x2f8] sm:$0x1]
        %v1401 = vld [vmem:[#allocation2 + $0x300] sm:$0xff]
        %v1402 = vld [vmem:[#allocation2 + $0x308] sm:$0x1]
        %v1403 = vld [vmem:[#allocation2 + $0x310] sm:$0xff]
        %v1404 = vld [vmem:[#allocation2 + $0x318] sm:$0x1]
        %v1405 = vld [vmem:[#allocation2 + $0x320] sm:$0xff]
        %v1406 = vld [vmem:[#allocation2 + $0x328] sm:$0x1]
        %v1407 = vld [vmem:[#allocation2 + $0x330] sm:$0xff]
        %v1408 = vld [vmem:[#allocation2 + $0x338] sm:$0x1]
        %v1409 = vld [vmem:[#allocation2 + $0x340] sm:$0xff]
        %v1410 = vld [vmem:[#allocation2 + $0x348] sm:$0x1]
        %v1411 = vld [vmem:[#allocation2 + $0x350] sm:$0xff]
        %v1412 = vld [vmem:[#allocation2 + $0x358] sm:$0x1]
        %v1413 = vld [vmem:[#allocation2 + $0x360] sm:$0xff]
        %v1414 = vld [vmem:[#allocation2 + $0x368] sm:$0x1]
        %v1415 = vld [vmem:[#allocation2 + $0x370] sm:$0xff]
        %v1416 = vld [vmem:[#allocation2 + $0x378] sm:$0x1]
        %v1417 = vld [vmem:[#allocation2 + $0x380] sm:$0xff]
        %v1418 = vld [vmem:[#allocation2 + $0x388] sm:$0x1]
        %v1419 = vld [vmem:[#allocation2 + $0x390] sm:$0xff]
        %v1420 = vld [vmem:[#allocation2 + $0x398] sm:$0x1]
        %v1421 = vld [vmem:[#allocation2 + $0x3a0] sm:$0xff]
        %v1422 = vld [vmem:[#allocation2 + $0x3a8] sm:$0x1]
        %v1423 = vld [vmem:[#allocation2 + $0x3b0] sm:$0xff]
        %v1424 = vld [vmem:[#allocation2 + $0x3b8] sm:$0x1]
        %v1425 = vld [vmem:[#allocation2 + $0x3c0] sm:$0xff]
        %v1426 = vld [vmem:[#allocation2 + $0x3c8] sm:$0x1]
        %v1427 = vld [vmem:[#allocation2 + $0x3d0] sm:$0xff]
        %v1428 = vld [vmem:[#allocation2 + $0x3d8] sm:$0x1]
        %v1429 = vld [vmem:[#allocation2 + $0x3e0] sm:$0xff]
        %v1430 = vld [vmem:[#allocation2 + $0x3e8] sm:$0x1]
        %v1431 = vld [vmem:[#allocation2 + $0x3f0] sm:$0xff]
        %v1432 = vld [vmem:[#allocation2 + $0x3f8] sm:$0x1]
        %v1433 = vld [vmem:[#allocation2 + $0x400] sm:$0xff]
        %v1434 = vld [vmem:[#allocation2 + $0x408] sm:$0x1]
        %v1435 = vld [vmem:[#allocation2 + $0x410] sm:$0xff]
        %v1436 = vld [vmem:[#allocation2 + $0x418] sm:$0x1]
        %v1437 = vld [vmem:[#allocation2 + $0x420] sm:$0xff]
        %v1438 = vld [vmem:[#allocation2 + $0x428] sm:$0x1]
        %v1439 = vld [vmem:[#allocation2 + $0x430] sm:$0xff]
        %v1440 = vld [vmem:[#allocation2 + $0x438] sm:$0x1]
        %v1441 = vld [vmem:[#allocation2 + $0x440] sm:$0xff]
        %v1442 = vld [vmem:[#allocation2 + $0x448] sm:$0x1]
        %v1443 = vld [vmem:[#allocation2 + $0x450] sm:$0xff]
        %v1444 = vld [vmem:[#allocation2 + $0x458] sm:$0x1]
        %v1445 = vld [vmem:[#allocation2 + $0x460] sm:$0xff]
        %v1446 = vld [vmem:[#allocation2 + $0x468] sm:$0x1]
        %v1447 = vld [vmem:[#allocation2 + $0x470] sm:$0xff]
        %v1448 = vld [vmem:[#allocation2 + $0x478] sm:$0x1]
        %v1449 = vld [vmem:[#allocation3 + $0x10] sm:$0xff]
        %v1450 = vld [vmem:[#allocation3 + $0x18] sm:$0x1]
        %v1451 = vld [vmem:[#allocation3 + $0x20] sm:$0xff]
        %v1452 = vld [vmem:[#allocation3 + $0x28] sm:$0x1]
        %v1453 = vld [vmem:[#allocation3 + $0x30] sm:$0xff]
        %v1454 = vld [vmem:[#allocation3 + $0x38] sm:$0x1]
        %v1455 = vld [vmem:[#allocation3 + $0x40] sm:$0xff]
        %v1456 = vld [vmem:[#allocation3 + $0x48] sm:$0x1]
        %v1457 = vld [vmem:[#allocation3 + $0x50] sm:$0xff]
        %v1458 = vld [vmem:[#allocation3 + $0x58] sm:$0x1]
        %v1459 = vld [vmem:[#allocation3 + $0x60] sm:$0xff]
        %v1460 = vld [vmem:[#allocation3 + $0x68] sm:$0x1]
        %v1461 = vld [vmem:[#allocation3 + $0x70] sm:$0xff]
        %v1462 = vld [vmem:[#allocation3 + $0x78] sm:$0x1]
        %v1463 = vld [vmem:[#allocation3 + $0x80] sm:$0xff]
        %v1464 = vld [vmem:[#allocation3 + $0x88] sm:$0x1]
        %v1465 = vld [vmem:[#allocation3 + $0xa0] sm:$0xff]
        %v1466 = vld [vmem:[#allocation3 + $0xa8] sm:$0x1]
        %v1467 = vld [vmem:[#allocation3 + $0xb0] sm:$0xff]
        %v1468 = vld [vmem:[#allocation3 + $0xb8] sm:$0x1]
        %v1469 = vld [vmem:[#allocation3 + $0xc0] sm:$0xff]
        %v1470 = vld [vmem:[#allocation3 + $0xc8] sm:$0x1]
        %v1471 = vld [vmem:[#allocation3 + $0xd0] sm:$0xff]
        %v1472 = vld [vmem:[#allocation3 + $0xd8] sm:$0x1]
        %v1473 = vld [vmem:[#allocation3 + $0xe0] sm:$0xff]
        %v1474 = vld [vmem:[#allocation3 + $0xe8] sm:$0x1]
        %v1475 = vld [vmem:[#allocation3 + $0xf0] sm:$0xff]
        %v1476 = vld [vmem:[#allocation3 + $0xf8] sm:$0x1]
        %v1477 = vld [vmem:[#allocation3 + $0x100] sm:$0xff]
        %v1478 = vld [vmem:[#allocation3 + $0x108] sm:$0x1]
        %v1479 = vld [vmem:[#allocation3 + $0x110] sm:$0xff]
        %v1480 = vld [vmem:[#allocation3 + $0x118] sm:$0x1]
        %v1481 = vld [vmem:[#allocation3 + $0x130] sm:$0xff]
        %v1482 = vld [vmem:[#allocation3 + $0x138] sm:$0x1]
        %v1483 = vld [vmem:[#allocation3 + $0x140] sm:$0xff]
        %v1484 = vld [vmem:[#allocation3 + $0x148] sm:$0x1]
        %v1485 = vld [vmem:[#allocation3 + $0x150] sm:$0xff]
        %v1486 = vld [vmem:[#allocation3 + $0x158] sm:$0x1]
        %v1487 = vld [vmem:[#allocation3 + $0x160] sm:$0xff]
        %v1488 = vld [vmem:[#allocation3 + $0x168] sm:$0x1]
        %v1489 = vld [vmem:[#allocation3 + $0x170] sm:$0xff]
        %v1490 = vld [vmem:[#allocation3 + $0x178] sm:$0x1]
        %v1491 = vld [vmem:[#allocation3 + $0x180] sm:$0xff]
        %v1492 = vld [vmem:[#allocation3 + $0x188] sm:$0x1]
        %v1493 = vld [vmem:[#allocation3 + $0x190] sm:$0xff]
        %v1494 = vld [vmem:[#allocation3 + $0x198] sm:$0x1]
        %v1495 = vld [vmem:[#allocation3 + $0x1a0] sm:$0xff]
        %v1496 = vld [vmem:[#allocation3 + $0x1a8] sm:$0x1]
        %v1497 = vld [vmem:[#allocation3 + $0x1c0] sm:$0xff]
        %v1498 = vld [vmem:[#allocation3 + $0x1c8] sm:$0x1]
        %v1499 = vld [vmem:[#allocation3 + $0x1d0] sm:$0xff]
        %v1500 = vld [vmem:[#allocation3 + $0x1d8] sm:$0x1]
        %v1501 = vld [vmem:[#allocation3 + $0x1e0] sm:$0xff]
        %v1502 = vld [vmem:[#allocation3 + $0x1e8] sm:$0x1]
        %v1503 = vld [vmem:[#allocation3 + $0x1f0] sm:$0xff]
        %v1504 = vld [vmem:[#allocation3 + $0x1f8] sm:$0x1]
        %v1505 = vld [vmem:[#allocation3 + $0x200] sm:$0xff]
        %v1506 = vld [vmem:[#allocation3 + $0x208] sm:$0x1]
        %v1507 = vld [vmem:[#allocation3 + $0x210] sm:$0xff]
        %v1508 = vld [vmem:[#allocation3 + $0x218] sm:$0x1]
        %v1509 = vld [vmem:[#allocation3 + $0x220] sm:$0xff]
        %v1510 = vld [vmem:[#allocation3 + $0x228] sm:$0x1]
        %v1511 = vld [vmem:[#allocation3 + $0x230] sm:$0xff]
        %v1512 = vld [vmem:[#allocation3 + $0x238] sm:$0x1]
        %v1513 = vld [vmem:[#allocation3 + $0x240] sm:$0xff]
        %v1514 = vld [vmem:[#allocation3 + $0x248] sm:$0x1]
        %v1515 = vld [vmem:[#allocation3 + $0x250] sm:$0xff]
        %v1516 = vld [vmem:[#allocation3 + $0x258] sm:$0x1]
        %v1517 = vld [vmem:[#allocation3 + $0x260] sm:$0xff]
        %v1518 = vld [vmem:[#allocation3 + $0x268] sm:$0x1]
        %v1519 = vld [vmem:[#allocation3 + $0x270] sm:$0xff]
        %v1520 = vld [vmem:[#allocation3 + $0x278] sm:$0x1]
        %v1521 = vld [vmem:[#allocation3 + $0x280] sm:$0xff]
        %v1522 = vld [vmem:[#allocation3 + $0x288] sm:$0x1]
        %v1523 = vld [vmem:[#allocation3 + $0x290] sm:$0xff]
        %v1524 = vld [vmem:[#allocation3 + $0x298] sm:$0x1]
        %v1525 = vld [vmem:[#allocation3 + $0x2a0] sm:$0xff]
        %v1526 = vld [vmem:[#allocation3 + $0x2a8] sm:$0x1]
        %v1527 = vld [vmem:[#allocation3 + $0x2b0] sm:$0xff]
        %v1528 = vld [vmem:[#allocation3 + $0x2b8] sm:$0x1]
        %v1529 = vld [vmem:[#allocation3 + $0x2c0] sm:$0xff]
        %v1530 = vld [vmem:[#allocation3 + $0x2c8] sm:$0x1]
        %v1531 = vld [vmem:[#allocation3 + $0x2d0] sm:$0xff]
        %v1532 = vld [vmem:[#allocation3 + $0x2d8] sm:$0x1]
        %v1533 = vld [vmem:[#allocation3 + $0x2e0] sm:$0xff]
        %v1534 = vld [vmem:[#allocation3 + $0x2e8] sm:$0x1]
        %v1535 = vld [vmem:[#allocation3 + $0x2f0] sm:$0xff]
        %v1536 = vld [vmem:[#allocation3 + $0x2f8] sm:$0x1]
        %v1537 = vld [vmem:[#allocation3 + $0x300] sm:$0xff]
        %v1538 = vld [vmem:[#allocation3 + $0x308] sm:$0x1]
        %v1539 = vld [vmem:[#allocation3 + $0x310] sm:$0xff]
        %v1540 = vld [vmem:[#allocation3 + $0x318] sm:$0x1]
        %v1541 = vld [vmem:[#allocation3 + $0x320] sm:$0xff]
        %v1542 = vld [vmem:[#allocation3 + $0x328] sm:$0x1]
        %v1543 = vld [vmem:[#allocation3 + $0x330] sm:$0xff]
        %v1544 = vld [vmem:[#allocation3 + $0x338] sm:$0x1]
        %v1545 = vld [vmem:[#allocation3 + $0x340] sm:$0xff]
        %v1546 = vld [vmem:[#allocation3 + $0x348] sm:$0x1]
        %v1547 = vld [vmem:[#allocation3 + $0x350] sm:$0xff]
        %v1548 = vld [vmem:[#allocation3 + $0x358] sm:$0x1]
        %v1549 = vld [vmem:[#allocation3 + $0x360] sm:$0xff]
        %v1550 = vld [vmem:[#allocation3 + $0x368] sm:$0x1]
        %v1551 = vld [vmem:[#allocation3 + $0x370] sm:$0xff]
        %v1552 = vld [vmem:[#allocation3 + $0x378] sm:$0x1]
        %v1553 = vld [vmem:[#allocation3 + $0x380] sm:$0xff]
        %v1554 = vld [vmem:[#allocation3 + $0x388] sm:$0x1]
        %v1555 = vld [vmem:[#allocation3 + $0x390] sm:$0xff]
        %v1556 = vld [vmem:[#allocation3 + $0x398] sm:$0x1]
        %v1557 = vld [vmem:[#allocation3 + $0x3a0] sm:$0xff]
        %v1558 = vld [vmem:[#allocation3 + $0x3a8] sm:$0x1]
        %v1559 = vld [vmem:[#allocation3 + $0x3b0] sm:$0xff]
        %v1560 = vld [vmem:[#allocation3 + $0x3b8] sm:$0x1]
        %v1561 = vld [vmem:[#allocation3 + $0x3c0] sm:$0xff]
        %v1562 = vld [vmem:[#allocation3 + $0x3c8] sm:$0x1]
        %v1563 = vld [vmem:[#allocation3 + $0x3d0] sm:$0xff]
        %v1564 = vld [vmem:[#allocation3 + $0x3d8] sm:$0x1]
        %v1565 = vld [vmem:[#allocation3 + $0x3e0] sm:$0xff]
        %v1566 = vld [vmem:[#allocation3 + $0x3e8] sm:$0x1]
        %v1567 = vld [vmem:[#allocation3 + $0x3f0] sm:$0xff]
        %v1568 = vld [vmem:[#allocation3 + $0x3f8] sm:$0x1]
        %v1569 = vld [vmem:[#allocation3 + $0x400] sm:$0xff]
        %v1570 = vld [vmem:[#allocation3 + $0x408] sm:$0x1]
        %v1571 = vld [vmem:[#allocation3 + $0x410] sm:$0xff]
        %v1572 = vld [vmem:[#allocation3 + $0x418] sm:$0x1]
        %v1573 = vld [vmem:[#allocation3 + $0x420] sm:$0xff]
        %v1574 = vld [vmem:[#allocation3 + $0x428] sm:$0x1]
        %v1575 = vld [vmem:[#allocation3 + $0x430] sm:$0xff]
        %v1576 = vld [vmem:[#allocation3 + $0x438] sm:$0x1]
        %v1577 = vld [vmem:[#allocation3 + $0x440] sm:$0xff]
        %v1578 = vld [vmem:[#allocation3 + $0x448] sm:$0x1]
        %v1579 = vld [vmem:[#allocation3 + $0x450] sm:$0xff]
        %v1580 = vld [vmem:[#allocation3 + $0x458] sm:$0x1]
        %v1581 = vld [vmem:[#allocation3 + $0x460] sm:$0xff]
        %v1582 = vld [vmem:[#allocation3 + $0x468] sm:$0x1]
        %v1583 = vld [vmem:[#allocation3 + $0x470] sm:$0xff]
        %v1584 = vld [vmem:[#allocation3 + $0x478] sm:$0x1]
        %v1585 = vadd.f32 %v877, %v893
        %v1586 = vadd.f32 %v878, %v894
        %v1587 = vadd.f32 %v879, %v895
        %v1588 = vadd.f32 %v880, %v896
        %v1589 = vadd.f32 %v881, %v897
        %v1590 = vadd.f32 %v882, %v898
        %v1591 = vadd.f32 %v883, %v899
        %v1592 = vadd.f32 %v884, %v900
        %v1593 = vadd.f32 %v885, %v901
        %v1594 = vadd.f32 %v886, %v902
        %v1595 = vadd.f32 %v887, %v903
        %v1596 = vadd.f32 %v888, %v904
        %v1597 = vadd.f32 %v889, %v905
        %v1598 = vadd.f32 %v890, %v906
        %v1599 = vadd.f32 %v891, %v907
        %v1600 = vadd.f32 %v892, %v908
        %v1601 = vadd.f32 %v1585, %v909
        %v1602 = vadd.f32 %v1586, %v910
        %v1603 = vadd.f32 %v1587, %v911
        %v1604 = vadd.f32 %v1588, %v912
        %v1605 = vadd.f32 %v1589, %v913
        %v1606 = vadd.f32 %v1590, %v914
        %v1607 = vadd.f32 %v1591, %v915
        %v1608 = vadd.f32 %v1592, %v916
        %v1609 = vadd.f32 %v1593, %v917
        %v1610 = vadd.f32 %v1594, %v918
        %v1611 = vadd.f32 %v1595, %v919
        %v1612 = vadd.f32 %v1596, %v920
        %v1613 = vadd.f32 %v1597, %v921
        %v1614 = vadd.f32 %v1598, %v922
        %v1615 = vadd.f32 %v1599, %v923
        %v1616 = vadd.f32 %v1600, %v924
        %v1617 = vadd.f32 %v1601, %v925
        %v1618 = vadd.f32 %v1602, %v926
        %v1619 = vadd.f32 %v1603, %v927
        %v1620 = vadd.f32 %v1604, %v928
        %v1621 = vadd.f32 %v1605, %v929
        %v1622 = vadd.f32 %v1606, %v930
        %v1623 = vadd.f32 %v1607, %v931
        %v1624 = vadd.f32 %v1608, %v932
        %v1625 = vadd.f32 %v1609, %v933
        %v1626 = vadd.f32 %v1610, %v934
        %v1627 = vadd.f32 %v1611, %v935
        %v1628 = vadd.f32 %v1612, %v936
        %v1629 = vadd.f32 %v1613, %v937
        %v1630 = vadd.f32 %v1614, %v938
        %v1631 = vadd.f32 %v1615, %v939
        %v1632 = vadd.f32 %v1616, %v940
        %v1633 = vmul.f32 %v1617, 0.25
        %v1634 = vmul.f32 %v1618, 0.25
        %v1635 = vmul.f32 %v1619, 0.25
        %v1636 = vmul.f32 %v1620, 0.25
        %v1637 = vmul.f32 %v1621, 0.25
        %v1638 = vmul.f32 %v1622, 0.25
        %v1639 = vmul.f32 %v1623, 0.25
        %v1640 = vmul.f32 %v1624, 0.25
        %v1641 = vmul.f32 %v1625, 0.25
        %v1642 = vmul.f32 %v1626, 0.25
        %v1643 = vmul.f32 %v1627, 0.25
        %v1644 = vmul.f32 %v1628, 0.25
        %v1645 = vmul.f32 %v1629, 0.25
        %v1646 = vmul.f32 %v1630, 0.25
        %v1647 = vmul.f32 %v1631, 0.25
        %v1648 = vmul.f32 %v1632, 0.25
        %v1649 = vadd.f32 %v941, %v957
        %v1650 = vadd.f32 %v942, %v958
        %v1651 = vadd.f32 %v943, %v959
        %v1652 = vadd.f32 %v944, %v960
        %v1653 = vadd.f32 %v945, %v961
        %v1654 = vadd.f32 %v946, %v962
        %v1655 = vadd.f32 %v947, %v963
        %v1656 = vadd.f32 %v948, %v964
        %v1657 = vadd.f32 %v949, %v965
        %v1658 = vadd.f32 %v950, %v966
        %v1659 = vadd.f32 %v951, %v967
        %v1660 = vadd.f32 %v952, %v968
        %v1661 = vadd.f32 %v953, %v969
        %v1662 = vadd.f32 %v954, %v970
        %v1663 = vadd.f32 %v955, %v971
        %v1664 = vadd.f32 %v956, %v972
        %v1665 = vadd.f32 %v1649, %v973
        %v1666 = vadd.f32 %v1650, %v974
        %v1667 = vadd.f32 %v1651, %v975
        %v1668 = vadd.f32 %v1652, %v976
        %v1669 = vadd.f32 %v1653, %v977
        %v1670 = vadd.f32 %v1654, %v978
        %v1671 = vadd.f32 %v1655, %v979
        %v1672 = vadd.f32 %v1656, %v980
        %v1673 = vadd.f32 %v1657, %v981
        %v1674 = vadd.f32 %v1658, %v982
        %v1675 = vadd.f32 %v1659, %v983
        %v1676 = vadd.f32 %v1660, %v984
        %v1677 = vadd.f32 %v1661, %v985
        %v1678 = vadd.f32 %v1662, %v986
        %v1679 = vadd.f32 %v1663, %v987
        %v1680 = vadd.f32 %v1664, %v988
        %v1681 = vadd.f32 %v1665, %v989
        %v1682 = vadd.f32 %v1666, %v990
        %v1683 = vadd.f32 %v1667, %v991
        %v1684 = vadd.f32 %v1668, %v992
        %v1685 = vadd.f32 %v1669, %v993
        %v1686 = vadd.f32 %v1670, %v994
        %v1687 = vadd.f32 %v1671, %v995
        %v1688 = vadd.f32 %v1672, %v996
        %v1689 = vadd.f32 %v1673, %v997
        %v1690 = vadd.f32 %v1674, %v998
        %v1691 = vadd.f32 %v1675, %v999
        %v1692 = vadd.f32 %v1676, %v1000
        %v1693 = vadd.f32 %v1677, %v1001
        %v1694 = vadd.f32 %v1678, %v1002
        %v1695 = vadd.f32 %v1679, %v1003
        %v1696 = vadd.f32 %v1680, %v1004
        %v1697 = vmul.f32 %v1681, 0.25
        %v1698 = vmul.f32 %v1682, 0.25
        %v1699 = vmul.f32 %v1683, 0.25
        %v1700 = vmul.f32 %v1684, 0.25
        %v1701 = vmul.f32 %v1685, 0.25
        %v1702 = vmul.f32 %v1686, 0.25
        %v1703 = vmul.f32 %v1687, 0.25
        %v1704 = vmul.f32 %v1688, 0.25
        %v1705 = vmul.f32 %v1689, 0.25
        %v1706 = vmul.f32 %v1690, 0.25
        %v1707 = vmul.f32 %v1691, 0.25
        %v1708 = vmul.f32 %v1692, 0.25
        %v1709 = vmul.f32 %v1693, 0.25
        %v1710 = vmul.f32 %v1694, 0.25
        %v1711 = vmul.f32 %v1695, 0.25
        %v1712 = vmul.f32 %v1696, 0.25
        %vm1745 = vcmask 1046528
        %v1746 = vrot.slane %v1377, 1
        %v1747 = vrot.slane %v1378, 1
        %v1748 = vsel %vm1745, %v1746, %v1747
        %v1749 = vrot.slane %v1379, 1
        %v1750 = vrot.slane %v1380, 1
        %v1751 = vsel %vm1745, %v1749, %v1750
        %v1752 = vrot.slane %v1381, 1
        %v1753 = vrot.slane %v1382, 1
        %v1754 = vsel %vm1745, %v1752, %v1753
        %v1755 = vrot.slane %v1383, 1
        %v1756 = vrot.slane %v1384, 1
        %v1757 = vsel %vm1745, %v1755, %v1756
        %v1758 = vrot.slane %v1385, 1
        %v1759 = vrot.slane %v1386, 1
        %v1760 = vsel %vm1745, %v1758, %v1759
        %v1761 = vrot.slane %v1387, 1
        %v1762 = vrot.slane %v1388, 1
        %v1763 = vsel %vm1745, %v1761, %v1762
        %v1764 = vrot.slane %v1389, 1
        %v1765 = vrot.slane %v1390, 1
        %v1766 = vsel %vm1745, %v1764, %v1765
        %v1767 = vrot.slane %v1391, 1
        %v1768 = vrot.slane %v1392, 1
        %v1769 = vsel %vm1745, %v1767, %v1768
        %v1770 = vrot.slane %v1395, 1
        %v1771 = vrot.slane %v1396, 1
        %v1772 = vsel %vm1745, %v1770, %v1771
        %v1773 = vrot.slane %v1397, 1
        %v1774 = vrot.slane %v1398, 1
        %v1775 = vsel %vm1745, %v1773, %v1774
        %v1776 = vrot.slane %v1399, 1
        %v1777 = vrot.slane %v1400, 1
        %v1778 = vsel %vm1745, %v1776, %v1777
        %v1779 = vrot.slane %v1401, 1
        %v1780 = vrot.slane %v1402, 1
        %v1781 = vsel %vm1745, %v1779, %v1780
        %v1782 = vrot.slane %v1403, 1
        %v1783 = vrot.slane %v1404, 1
        %v1784 = vsel %vm1745, %v1782, %v1783
        %v1785 = vrot.slane %v1405, 1
        %v1786 = vrot.slane %v1406, 1
        %v1787 = vsel %vm1745, %v1785, %v1786
        %v1788 = vrot.slane %v1407, 1
        %v1789 = vrot.slane %v1408, 1
        %v1790 = vsel %vm1745, %v1788, %v1789
        %v1791 = vrot.slane %v1409, 1
        %v1792 = vrot.slane %v1410, 1
        %v1793 = vsel %vm1745, %v1791, %v1792
        %1794 = vrot.lane.b32.xlu0 %v1748, 4
        %v1795 = vpop.permute.xlu0 %1794
        %1796 = vrot.lane.b32.xlu0 %v1751, 4
        %v1797 = vpop.permute.xlu0 %1796
        %1798 = vrot.lane.b32.xlu0 %v1754, 4
        %v1799 = vpop.permute.xlu0 %1798
        %1800 = vrot.lane.b32.xlu0 %v1757, 4
        %v1801 = vpop.permute.xlu0 %1800
        %1802 = vrot.lane.b32.xlu0 %v1760, 4
        %v1803 = vpop.permute.xlu0 %1802
        %1804 = vrot.lane.b32.xlu0 %v1763, 4
        %v1805 = vpop.permute.xlu0 %1804
        %1806 = vrot.lane.b32.xlu0 %v1766, 4
        %v1807 = vpop.permute.xlu0 %1806
        %1808 = vrot.lane.b32.xlu0 %v1769, 4
        %v1809 = vpop.permute.xlu0 %1808
        %1810 = vrot.lane.b32.xlu0 %v1772, 4
        %v1811 = vpop.permute.xlu0 %1810
        %1812 = vrot.lane.b32.xlu0 %v1775, 4
        %v1813 = vpop.permute.xlu0 %1812
        %1814 = vrot.lane.b32.xlu0 %v1778, 4
        %v1815 = vpop.permute.xlu0 %1814
        %1816 = vrot.lane.b32.xlu0 %v1781, 4
        %v1817 = vpop.permute.xlu0 %1816
        %1818 = vrot.lane.b32.xlu0 %v1784, 4
        %v1819 = vpop.permute.xlu0 %1818
        %1820 = vrot.lane.b32.xlu0 %v1787, 4
        %v1821 = vpop.permute.xlu0 %1820
        %1822 = vrot.lane.b32.xlu0 %v1790, 4
        %v1823 = vpop.permute.xlu0 %1822
        %1824 = vrot.lane.b32.xlu0 %v1793, 4
        %v1825 = vpop.permute.xlu0 %1824
        %v1874 = vrot.slane %v1413, 1
        %v1875 = vrot.slane %v1414, 1
        %v1876 = vsel %vm1745, %v1874, %v1875
        %v1877 = vrot.slane %v1415, 1
        %v1878 = vrot.slane %v1416, 1
        %v1879 = vsel %vm1745, %v1877, %v1878
        %v1880 = vrot.slane %v1417, 1
        %v1881 = vrot.slane %v1418, 1
        %v1882 = vsel %vm1745, %v1880, %v1881
        %v1883 = vrot.slane %v1419, 1
        %v1884 = vrot.slane %v1420, 1
        %v1885 = vsel %vm1745, %v1883, %v1884
        %v1886 = vrot.slane %v1421, 1
        %v1887 = vrot.slane %v1422, 1
        %v1888 = vsel %vm1745, %v1886, %v1887
        %v1889 = vrot.slane %v1423, 1
        %v1890 = vrot.slane %v1424, 1
        %v1891 = vsel %vm1745, %v1889, %v1890
        %v1892 = vrot.slane %v1425, 1
        %v1893 = vrot.slane %v1426, 1
        %v1894 = vsel %vm1745, %v1892, %v1893
        %v1895 = vrot.slane %v1427, 1
        %v1896 = vrot.slane %v1428, 1
        %v1897 = vsel %vm1745, %v1895, %v1896
        %v1898 = vrot.slane %v1431, 1
        %v1899 = vrot.slane %v1432, 1
        %v1900 = vsel %vm1745, %v1898, %v1899
        %v1901 = vrot.slane %v1433, 1
        %v1902 = vrot.slane %v1434, 1
        %v1903 = vsel %vm1745, %v1901, %v1902
        %v1904 = vrot.slane %v1435, 1
        %v1905 = vrot.slane %v1436, 1
        %v1906 = vsel %vm1745, %v1904, %v1905
        %v1907 = vrot.slane %v1437, 1
        %v1908 = vrot.slane %v1438, 1
        %v1909 = vsel %vm1745, %v1907, %v1908
        %v1910 = vrot.slane %v1439, 1
        %v1911 = vrot.slane %v1440, 1
        %v1912 = vsel %vm1745, %v1910, %v1911
        %v1913 = vrot.slane %v1441, 1
        %v1914 = vrot.slane %v1442, 1
        %v1915 = vsel %vm1745, %v1913, %v1914
        %v1916 = vrot.slane %v1443, 1
        %v1917 = vrot.slane %v1444, 1
        %v1918 = vsel %vm1745, %v1916, %v1917
        %v1919 = vrot.slane %v1445, 1
        %v1920 = vrot.slane %v1446, 1
        %v1921 = vsel %vm1745, %v1919, %v1920
        %1922 = vrot.lane.b32.xlu0 %v1876, 8
        %v1923 = vpop.permute.xlu0 %1922
        %1924 = vrot.lane.b32.xlu0 %v1879, 8
        %v1925 = vpop.permute.xlu0 %1924
        %1926 = vrot.lane.b32.xlu0 %v1882, 8
        %v1927 = vpop.permute.xlu0 %1926
        %1928 = vrot.lane.b32.xlu0 %v1885, 8
        %v1929 = vpop.permute.xlu0 %1928
        %1930 = vrot.lane.b32.xlu0 %v1888, 8
        %v1931 = vpop.permute.xlu0 %1930
        %1932 = vrot.lane.b32.xlu0 %v1891, 8
        %v1933 = vpop.permute.xlu0 %1932
        %1934 = vrot.lane.b32.xlu0 %v1894, 8
        %v1935 = vpop.permute.xlu0 %1934
        %1936 = vrot.lane.b32.xlu0 %v1897, 8
        %v1937 = vpop.permute.xlu0 %1936
        %1938 = vrot.lane.b32.xlu0 %v1900, 8
        %v1939 = vpop.permute.xlu0 %1938
        %1940 = vrot.lane.b32.xlu0 %v1903, 8
        %v1941 = vpop.permute.xlu0 %1940
        %1942 = vrot.lane.b32.xlu0 %v1906, 8
        %v1943 = vpop.permute.xlu0 %1942
        %1944 = vrot.lane.b32.xlu0 %v1909, 8
        %v1945 = vpop.permute.xlu0 %1944
        %1946 = vrot.lane.b32.xlu0 %v1912, 8
        %v1947 = vpop.permute.xlu0 %1946
        %1948 = vrot.lane.b32.xlu0 %v1915, 8
        %v1949 = vpop.permute.xlu0 %1948
        %1950 = vrot.lane.b32.xlu0 %v1918, 8
        %v1951 = vpop.permute.xlu0 %1950
        %1952 = vrot.lane.b32.xlu0 %v1921, 8
        %v1953 = vpop.permute.xlu0 %1952
        %1986 = vrot.lane.b32.xlu0 %v1345, 12
        %v1987 = vpop.permute.xlu0 %1986
        %1988 = vrot.lane.b32.xlu0 %v1347, 12
        %v1989 = vpop.permute.xlu0 %1988
        %1990 = vrot.lane.b32.xlu0 %v1349, 12
        %v1991 = vpop.permute.xlu0 %1990
        %1992 = vrot.lane.b32.xlu0 %v1351, 12
        %v1993 = vpop.permute.xlu0 %1992
        %1994 = vrot.lane.b32.xlu0 %v1353, 12
        %v1995 = vpop.permute.xlu0 %1994
        %1996 = vrot.lane.b32.xlu0 %v1355, 12
        %v1997 = vpop.permute.xlu0 %1996
        %1998 = vrot.lane.b32.xlu0 %v1357, 12
        %v1999 = vpop.permute.xlu0 %1998
        %2000 = vrot.lane.b32.xlu0 %v1359, 12
        %v2001 = vpop.permute.xlu0 %2000
        %2002 = vrot.lane.b32.xlu0 %v1361, 12
        %v2003 = vpop.permute.xlu0 %2002
        %2004 = vrot.lane.b32.xlu0 %v1363, 12
        %v2005 = vpop.permute.xlu0 %2004
        %2006 = vrot.lane.b32.xlu0 %v1365, 12
        %v2007 = vpop.permute.xlu0 %2006
        %2008 = vrot.lane.b32.xlu0 %v1367, 12
        %v2009 = vpop.permute.xlu0 %2008
        %2010 = vrot.lane.b32.xlu0 %v1369, 12
        %v2011 = vpop.permute.xlu0 %2010
        %2012 = vrot.lane.b32.xlu0 %v1371, 12
        %v2013 = vpop.permute.xlu0 %2012
        %2014 = vrot.lane.b32.xlu0 %v1373, 12
        %v2015 = vpop.permute.xlu0 %2014
        %2016 = vrot.lane.b32.xlu0 %v1375, 12
        %v2017 = vpop.permute.xlu0 %2016
        %v2066 = vrot.slane %v1313, 1
        %v2067 = vrot.slane %v1314, 1
        %v2068 = vsel %vm1745, %v2066, %v2067
        %v2069 = vrot.slane %v1315, 1
        %v2070 = vrot.slane %v1316, 1
        %v2071 = vsel %vm1745, %v2069, %v2070
        %v2072 = vrot.slane %v1317, 1
        %v2073 = vrot.slane %v1318, 1
        %v2074 = vsel %vm1745, %v2072, %v2073
        %v2075 = vrot.slane %v1319, 1
        %v2076 = vrot.slane %v1320, 1
        %v2077 = vsel %vm1745, %v2075, %v2076
        %v2078 = vrot.slane %v1321, 1
        %v2079 = vrot.slane %v1322, 1
        %v2080 = vsel %vm1745, %v2078, %v2079
        %v2081 = vrot.slane %v1323, 1
        %v2082 = vrot.slane %v1324, 1
        %v2083 = vsel %vm1745, %v2081, %v2082
        %v2084 = vrot.slane %v1325, 1
        %v2085 = vrot.slane %v1326, 1
        %v2086 = vsel %vm1745, %v2084, %v2085
        %v2087 = vrot.slane %v1327, 1
        %v2088 = vrot.slane %v1328, 1
        %v2089 = vsel %vm1745, %v2087, %v2088
        %v2090 = vrot.slane %v1329, 1
        %v2091 = vrot.slane %v1330, 1
        %v2092 = vsel %vm1745, %v2090, %v2091
        %v2093 = vrot.slane %v1331, 1
        %v2094 = vrot.slane %v1332, 1
        %v2095 = vsel %vm1745, %v2093, %v2094
        %v2096 = vrot.slane %v1333, 1
        %v2097 = vrot.slane %v1334, 1
        %v2098 = vsel %vm1745, %v2096, %v2097
        %v2099 = vrot.slane %v1335, 1
        %v2100 = vrot.slane %v1336, 1
        %v2101 = vsel %vm1745, %v2099, %v2100
        %v2102 = vrot.slane %v1337, 1
        %v2103 = vrot.slane %v1338, 1
        %v2104 = vsel %vm1745, %v2102, %v2103
        %v2105 = vrot.slane %v1339, 1
        %v2106 = vrot.slane %v1340, 1
        %v2107 = vsel %vm1745, %v2105, %v2106
        %v2108 = vrot.slane %v1341, 1
        %v2109 = vrot.slane %v1342, 1
        %v2110 = vsel %vm1745, %v2108, %v2109
        %v2111 = vrot.slane %v1343, 1
        %v2112 = vrot.slane %v1344, 1
        %v2113 = vsel %vm1745, %v2111, %v2112
        %2114 = vrot.lane.b32.xlu0 %v2068, 16
        %v2115 = vpop.permute.xlu0 %2114
        %2116 = vrot.lane.b32.xlu0 %v2071, 16
        %v2117 = vpop.permute.xlu0 %2116
        %2118 = vrot.lane.b32.xlu0 %v2074, 16
        %v2119 = vpop.permute.xlu0 %2118
        %2120 = vrot.lane.b32.xlu0 %v2077, 16
        %v2121 = vpop.permute.xlu0 %2120
        %2122 = vrot.lane.b32.xlu0 %v2080, 16
        %v2123 = vpop.permute.xlu0 %2122
        %2124 = vrot.lane.b32.xlu0 %v2083, 16
        %v2125 = vpop.permute.xlu0 %2124
        %2126 = vrot.lane.b32.xlu0 %v2086, 16
        %v2127 = vpop.permute.xlu0 %2126
        %2128 = vrot.lane.b32.xlu0 %v2089, 16
        %v2129 = vpop.permute.xlu0 %2128
        %2130 = vrot.lane.b32.xlu0 %v2092, 16
        %v2131 = vpop.permute.xlu0 %2130
        %2132 = vrot.lane.b32.xlu0 %v2095, 16
        %v2133 = vpop.permute.xlu0 %2132
        %2134 = vrot.lane.b32.xlu0 %v2098, 16
        %v2135 = vpop.permute.xlu0 %2134
        %2136 = vrot.lane.b32.xlu0 %v2101, 16
        %v2137 = vpop.permute.xlu0 %2136
        %2138 = vrot.lane.b32.xlu0 %v2104, 16
        %v2139 = vpop.permute.xlu0 %2138
        %2140 = vrot.lane.b32.xlu0 %v2107, 16
        %v2141 = vpop.permute.xlu0 %2140
        %2142 = vrot.lane.b32.xlu0 %v2110, 16
        %v2143 = vpop.permute.xlu0 %2142
        %2144 = vrot.lane.b32.xlu0 %v2113, 16
        %v2145 = vpop.permute.xlu0 %2144
        %v2178 = vrot.slane %v1345, 1
        %v2179 = vrot.slane %v1346, 1
        %v2180 = vsel %vm1745, %v2178, %v2179
        %v2181 = vrot.slane %v1347, 1
        %v2182 = vrot.slane %v1348, 1
        %v2183 = vsel %vm1745, %v2181, %v2182
        %v2184 = vrot.slane %v1349, 1
        %v2185 = vrot.slane %v1350, 1
        %v2186 = vsel %vm1745, %v2184, %v2185
        %v2187 = vrot.slane %v1351, 1
        %v2188 = vrot.slane %v1352, 1
        %v2189 = vsel %vm1745, %v2187, %v2188
        %v2190 = vrot.slane %v1353, 1
        %v2191 = vrot.slane %v1354, 1
        %v2192 = vsel %vm1745, %v2190, %v2191
        %v2193 = vrot.slane %v1355, 1
        %v2194 = vrot.slane %v1356, 1
        %v2195 = vsel %vm1745, %v2193, %v2194
        %v2196 = vrot.slane %v1357, 1
        %v2197 = vrot.slane %v1358, 1
        %v2198 = vsel %vm1745, %v2196, %v2197
        %v2199 = vrot.slane %v1359, 1
        %v2200 = vrot.slane %v1360, 1
        %v2201 = vsel %vm1745, %v2199, %v2200
        %v2202 = vrot.slane %v1361, 1
        %v2203 = vrot.slane %v1362, 1
        %v2204 = vsel %vm1745, %v2202, %v2203
        %v2205 = vrot.slane %v1363, 1
        %v2206 = vrot.slane %v1364, 1
        %v2207 = vsel %vm1745, %v2205, %v2206
        %v2208 = vrot.slane %v1365, 1
        %v2209 = vrot.slane %v1366, 1
        %v2210 = vsel %vm1745, %v2208, %v2209
        %v2211 = vrot.slane %v1367, 1
        %v2212 = vrot.slane %v1368, 1
        %v2213 = vsel %vm1745, %v2211, %v2212
        %v2214 = vrot.slane %v1369, 1
        %v2215 = vrot.slane %v1370, 1
        %v2216 = vsel %vm1745, %v2214, %v2215
        %v2217 = vrot.slane %v1371, 1
        %v2218 = vrot.slane %v1372, 1
        %v2219 = vsel %vm1745, %v2217, %v2218
        %v2220 = vrot.slane %v1373, 1
        %v2221 = vrot.slane %v1374, 1
        %v2222 = vsel %vm1745, %v2220, %v2221
        %v2223 = vrot.slane %v1375, 1
        %v2224 = vrot.slane %v1376, 1
        %v2225 = vsel %vm1745, %v2223, %v2224
        %2226 = vrot.lane.b32.xlu0 %v2180, 20
        %v2227 = vpop.permute.xlu0 %2226
        %2228 = vrot.lane.b32.xlu0 %v2183, 20
        %v2229 = vpop.permute.xlu0 %2228
        %2230 = vrot.lane.b32.xlu0 %v2186, 20
        %v2231 = vpop.permute.xlu0 %2230
        %2232 = vrot.lane.b32.xlu0 %v2189, 20
        %v2233 = vpop.permute.xlu0 %2232
        %2234 = vrot.lane.b32.xlu0 %v2192, 20
        %v2235 = vpop.permute.xlu0 %2234
        %2236 = vrot.lane.b32.xlu0 %v2195, 20
        %v2237 = vpop.permute.xlu0 %2236
        %2238 = vrot.lane.b32.xlu0 %v2198, 20
        %v2239 = vpop.permute.xlu0 %2238
        %2240 = vrot.lane.b32.xlu0 %v2201, 20
        %v2241 = vpop.permute.xlu0 %2240
        %2242 = vrot.lane.b32.xlu0 %v2204, 20
        %v2243 = vpop.permute.xlu0 %2242
        %2244 = vrot.lane.b32.xlu0 %v2207, 20
        %v2245 = vpop.permute.xlu0 %2244
        %2246 = vrot.lane.b32.xlu0 %v2210, 20
        %v2247 = vpop.permute.xlu0 %2246
        %2248 = vrot.lane.b32.xlu0 %v2213, 20
        %v2249 = vpop.permute.xlu0 %2248
        %2250 = vrot.lane.b32.xlu0 %v2216, 20
        %v2251 = vpop.permute.xlu0 %2250
        %2252 = vrot.lane.b32.xlu0 %v2219, 20
        %v2253 = vpop.permute.xlu0 %2252
        %2254 = vrot.lane.b32.xlu0 %v2222, 20
        %v2255 = vpop.permute.xlu0 %2254
        %2256 = vrot.lane.b32.xlu0 %v2225, 20
        %v2257 = vpop.permute.xlu0 %2256
        %2276 = vrot.lane.b32.xlu0 %v1415, 24
        %v2277 = vpop.permute.xlu0 %2276
        %2278 = vrot.lane.b32.xlu0 %v1417, 24
        %v2279 = vpop.permute.xlu0 %2278
        %2280 = vrot.lane.b32.xlu0 %v1419, 24
        %v2281 = vpop.permute.xlu0 %2280
        %2282 = vrot.lane.b32.xlu0 %v1421, 24
        %v2283 = vpop.permute.xlu0 %2282
        %2284 = vrot.lane.b32.xlu0 %v1423, 24
        %v2285 = vpop.permute.xlu0 %2284
        %2286 = vrot.lane.b32.xlu0 %v1425, 24
        %v2287 = vpop.permute.xlu0 %2286
        %2288 = vrot.lane.b32.xlu0 %v1427, 24
        %v2289 = vpop.permute.xlu0 %2288
        %2290 = vrot.lane.b32.xlu0 %v1429, 24
        %v2291 = vpop.permute.xlu0 %2290
        %2292 = vrot.lane.b32.xlu0 %v1433, 24
        %v2293 = vpop.permute.xlu0 %2292
        %2294 = vrot.lane.b32.xlu0 %v1435, 24
        %v2295 = vpop.permute.xlu0 %2294
        %2296 = vrot.lane.b32.xlu0 %v1437, 24
        %v2297 = vpop.permute.xlu0 %2296
        %2298 = vrot.lane.b32.xlu0 %v1439, 24
        %v2299 = vpop.permute.xlu0 %2298
        %2300 = vrot.lane.b32.xlu0 %v1441, 24
        %v2301 = vpop.permute.xlu0 %2300
        %2302 = vrot.lane.b32.xlu0 %v1443, 24
        %v2303 = vpop.permute.xlu0 %2302
        %2304 = vrot.lane.b32.xlu0 %v1445, 24
        %v2305 = vpop.permute.xlu0 %2304
        %2306 = vrot.lane.b32.xlu0 %v1447, 24
        %v2307 = vpop.permute.xlu0 %2306
        %v2328 = vrot.slane %v1393, 1
        %v2329 = vrot.slane %v1394, 1
        %v2330 = vsel %vm1745, %v2328, %v2329
        %v2331 = vrot.slane %v1411, 1
        %v2332 = vrot.slane %v1412, 1
        %v2333 = vsel %vm1745, %v2331, %v2332
        %2334 = vrot.lane.b32.xlu0 %v1751, 28
        %v2335 = vpop.permute.xlu0 %2334
        %2336 = vrot.lane.b32.xlu0 %v1754, 28
        %v2337 = vpop.permute.xlu0 %2336
        %2338 = vrot.lane.b32.xlu0 %v1757, 28
        %v2339 = vpop.permute.xlu0 %2338
        %2340 = vrot.lane.b32.xlu0 %v1760, 28
        %v2341 = vpop.permute.xlu0 %2340
        %2342 = vrot.lane.b32.xlu0 %v1763, 28
        %v2343 = vpop.permute.xlu0 %2342
        %2344 = vrot.lane.b32.xlu0 %v1766, 28
        %v2345 = vpop.permute.xlu0 %2344
        %2346 = vrot.lane.b32.xlu0 %v1769, 28
        %v2347 = vpop.permute.xlu0 %2346
        %2348 = vrot.lane.b32.xlu0 %v2330, 28
        %v2349 = vpop.permute.xlu0 %2348
        %2350 = vrot.lane.b32.xlu0 %v1775, 28
        %v2351 = vpop.permute.xlu0 %2350
        %2352 = vrot.lane.b32.xlu0 %v1778, 28
        %v2353 = vpop.permute.xlu0 %2352
        %2354 = vrot.lane.b32.xlu0 %v1781, 28
        %v2355 = vpop.permute.xlu0 %2354
        %2356 = vrot.lane.b32.xlu0 %v1784, 28
        %v2357 = vpop.permute.xlu0 %2356
        %2358 = vrot.lane.b32.xlu0 %v1787, 28
        %v2359 = vpop.permute.xlu0 %2358
        %2360 = vrot.lane.b32.xlu0 %v1790, 28
        %v2361 = vpop.permute.xlu0 %2360
        %2362 = vrot.lane.b32.xlu0 %v1793, 28
        %v2363 = vpop.permute.xlu0 %2362
        %2364 = vrot.lane.b32.xlu0 %v2333, 28
        %v2365 = vpop.permute.xlu0 %2364
        %v2384 = vrot.slane %v1429, 1
        %v2385 = vrot.slane %v1430, 1
        %v2386 = vsel %vm1745, %v2384, %v2385
        %v2387 = vrot.slane %v1447, 1
        %v2388 = vrot.slane %v1448, 1
        %v2389 = vsel %vm1745, %v2387, %v2388
        %2390 = vrot.lane.b32.xlu0 %v1879, 32
        %v2391 = vpop.permute.xlu0 %2390
        %2392 = vrot.lane.b32.xlu0 %v1882, 32
        %v2393 = vpop.permute.xlu0 %2392
        %2394 = vrot.lane.b32.xlu0 %v1885, 32
        %v2395 = vpop.permute.xlu0 %2394
        %2396 = vrot.lane.b32.xlu0 %v1888, 32
        %v2397 = vpop.permute.xlu0 %2396
        %2398 = vrot.lane.b32.xlu0 %v1891, 32
        %v2399 = vpop.permute.xlu0 %2398
        %2400 = vrot.lane.b32.xlu0 %v1894, 32
        %v2401 = vpop.permute.xlu0 %2400
        %2402 = vrot.lane.b32.xlu0 %v1897, 32
        %v2403 = vpop.permute.xlu0 %2402
        %2404 = vrot.lane.b32.xlu0 %v2386, 32
        %v2405 = vpop.permute.xlu0 %2404
        %2406 = vrot.lane.b32.xlu0 %v1903, 32
        %v2407 = vpop.permute.xlu0 %2406
        %2408 = vrot.lane.b32.xlu0 %v1906, 32
        %v2409 = vpop.permute.xlu0 %2408
        %2410 = vrot.lane.b32.xlu0 %v1909, 32
        %v2411 = vpop.permute.xlu0 %2410
        %2412 = vrot.lane.b32.xlu0 %v1912, 32
        %v2413 = vpop.permute.xlu0 %2412
        %2414 = vrot.lane.b32.xlu0 %v1915, 32
        %v2415 = vpop.permute.xlu0 %2414
        %2416 = vrot.lane.b32.xlu0 %v1918, 32
        %v2417 = vpop.permute.xlu0 %2416
        %2418 = vrot.lane.b32.xlu0 %v1921, 32
        %v2419 = vpop.permute.xlu0 %2418
        %2420 = vrot.lane.b32.xlu0 %v2389, 32
        %v2421 = vpop.permute.xlu0 %2420
        %2454 = vrot.lane.b32.xlu0 %v1549, 36
        %v2455 = vpop.permute.xlu0 %2454
        %2456 = vrot.lane.b32.xlu0 %v1551, 36
        %v2457 = vpop.permute.xlu0 %2456
        %2458 = vrot.lane.b32.xlu0 %v1553, 36
        %v2459 = vpop.permute.xlu0 %2458
        %2460 = vrot.lane.b32.xlu0 %v1555, 36
        %v2461 = vpop.permute.xlu0 %2460
        %2462 = vrot.lane.b32.xlu0 %v1557, 36
        %v2463 = vpop.permute.xlu0 %2462
        %2464 = vrot.lane.b32.xlu0 %v1559, 36
        %v2465 = vpop.permute.xlu0 %2464
        %2466 = vrot.lane.b32.xlu0 %v1561, 36
        %v2467 = vpop.permute.xlu0 %2466
        %2468 = vrot.lane.b32.xlu0 %v1563, 36
        %v2469 = vpop.permute.xlu0 %2468
        %2470 = vrot.lane.b32.xlu0 %v1567, 36
        %v2471 = vpop.permute.xlu0 %2470
        %2472 = vrot.lane.b32.xlu0 %v1569, 36
        %v2473 = vpop.permute.xlu0 %2472
        %2474 = vrot.lane.b32.xlu0 %v1571, 36
        %v2475 = vpop.permute.xlu0 %2474
        %2476 = vrot.lane.b32.xlu0 %v1573, 36
        %v2477 = vpop.permute.xlu0 %2476
        %2478 = vrot.lane.b32.xlu0 %v1575, 36
        %v2479 = vpop.permute.xlu0 %2478
        %2480 = vrot.lane.b32.xlu0 %v1577, 36
        %v2481 = vpop.permute.xlu0 %2480
        %2482 = vrot.lane.b32.xlu0 %v1579, 36
        %v2483 = vpop.permute.xlu0 %2482
        %2484 = vrot.lane.b32.xlu0 %v1581, 36
        %v2485 = vpop.permute.xlu0 %2484
        %v2534 = vrot.slane %v1513, 1
        %v2535 = vrot.slane %v1514, 1
        %v2536 = vsel %vm1745, %v2534, %v2535
        %v2537 = vrot.slane %v1515, 1
        %v2538 = vrot.slane %v1516, 1
        %v2539 = vsel %vm1745, %v2537, %v2538
        %v2540 = vrot.slane %v1517, 1
        %v2541 = vrot.slane %v1518, 1
        %v2542 = vsel %vm1745, %v2540, %v2541
        %v2543 = vrot.slane %v1519, 1
        %v2544 = vrot.slane %v1520, 1
        %v2545 = vsel %vm1745, %v2543, %v2544
        %v2546 = vrot.slane %v1521, 1
        %v2547 = vrot.slane %v1522, 1
        %v2548 = vsel %vm1745, %v2546, %v2547
        %v2549 = vrot.slane %v1523, 1
        %v2550 = vrot.slane %v1524, 1
        %v2551 = vsel %vm1745, %v2549, %v2550
        %v2552 = vrot.slane %v1525, 1
        %v2553 = vrot.slane %v1526, 1
        %v2554 = vsel %vm1745, %v2552, %v2553
        %v2555 = vrot.slane %v1527, 1
        %v2556 = vrot.slane %v1528, 1
        %v2557 = vsel %vm1745, %v2555, %v2556
        %v2558 = vrot.slane %v1531, 1
        %v2559 = vrot.slane %v1532, 1
        %v2560 = vsel %vm1745, %v2558, %v2559
        %v2561 = vrot.slane %v1533, 1
        %v2562 = vrot.slane %v1534, 1
        %v2563 = vsel %vm1745, %v2561, %v2562
        %v2564 = vrot.slane %v1535, 1
        %v2565 = vrot.slane %v1536, 1
        %v2566 = vsel %vm1745, %v2564, %v2565
        %v2567 = vrot.slane %v1537, 1
        %v2568 = vrot.slane %v1538, 1
        %v2569 = vsel %vm1745, %v2567, %v2568
        %v2570 = vrot.slane %v1539, 1
        %v2571 = vrot.slane %v1540, 1
        %v2572 = vsel %vm1745, %v2570, %v2571
        %v2573 = vrot.slane %v1541, 1
        %v2574 = vrot.slane %v1542, 1
        %v2575 = vsel %vm1745, %v2573, %v2574
        %v2576 = vrot.slane %v1543, 1
        %v2577 = vrot.slane %v1544, 1
        %v2578 = vsel %vm1745, %v2576, %v2577
        %v2579 = vrot.slane %v1545, 1
        %v2580 = vrot.slane %v1546, 1
        %v2581 = vsel %vm1745, %v2579, %v2580
        %2582 = vrot.lane.b32.xlu0 %v2536, 40
        %v2583 = vpop.permute.xlu0 %2582
        %2584 = vrot.lane.b32.xlu0 %v2539, 40
        %v2585 = vpop.permute.xlu0 %2584
        %2586 = vrot.lane.b32.xlu0 %v2542, 40
        %v2587 = vpop.permute.xlu0 %2586
        %2588 = vrot.lane.b32.xlu0 %v2545, 40
        %v2589 = vpop.permute.xlu0 %2588
        %2590 = vrot.lane.b32.xlu0 %v2548, 40
        %v2591 = vpop.permute.xlu0 %2590
        %2592 = vrot.lane.b32.xlu0 %v2551, 40
        %v2593 = vpop.permute.xlu0 %2592
        %2594 = vrot.lane.b32.xlu0 %v2554, 40
        %v2595 = vpop.permute.xlu0 %2594
        %2596 = vrot.lane.b32.xlu0 %v2557, 40
        %v2597 = vpop.permute.xlu0 %2596
        %2598 = vrot.lane.b32.xlu0 %v2560, 40
        %v2599 = vpop.permute.xlu0 %2598
        %2600 = vrot.lane.b32.xlu0 %v2563, 40
        %v2601 = vpop.permute.xlu0 %2600
        %2602 = vrot.lane.b32.xlu0 %v2566, 40
        %v2603 = vpop.permute.xlu0 %2602
        %2604 = vrot.lane.b32.xlu0 %v2569, 40
        %v2605 = vpop.permute.xlu0 %2604
        %2606 = vrot.lane.b32.xlu0 %v2572, 40
        %v2607 = vpop.permute.xlu0 %2606
        %2608 = vrot.lane.b32.xlu0 %v2575, 40
        %v2609 = vpop.permute.xlu0 %2608
        %2610 = vrot.lane.b32.xlu0 %v2578, 40
        %v2611 = vpop.permute.xlu0 %2610
        %2612 = vrot.lane.b32.xlu0 %v2581, 40
        %v2613 = vpop.permute.xlu0 %2612
        %v2646 = vrot.slane %v1549, 1
        %v2647 = vrot.slane %v1550, 1
        %v2648 = vsel %vm1745, %v2646, %v2647
        %v2649 = vrot.slane %v1551, 1
        %v2650 = vrot.slane %v1552, 1
        %v2651 = vsel %vm1745, %v2649, %v2650
        %v2652 = vrot.slane %v1553, 1
        %v2653 = vrot.slane %v1554, 1
        %v2654 = vsel %vm1745, %v2652, %v2653
        %v2655 = vrot.slane %v1555, 1
        %v2656 = vrot.slane %v1556, 1
        %v2657 = vsel %vm1745, %v2655, %v2656
        %v2658 = vrot.slane %v1557, 1
        %v2659 = vrot.slane %v1558, 1
        %v2660 = vsel %vm1745, %v2658, %v2659
        %v2661 = vrot.slane %v1559, 1
        %v2662 = vrot.slane %v1560, 1
        %v2663 = vsel %vm1745, %v2661, %v2662
        %v2664 = vrot.slane %v1561, 1
        %v2665 = vrot.slane %v1562, 1
        %v2666 = vsel %vm1745, %v2664, %v2665
        %v2667 = vrot.slane %v1563, 1
        %v2668 = vrot.slane %v1564, 1
        %v2669 = vsel %vm1745, %v2667, %v2668
        %v2670 = vrot.slane %v1567, 1
        %v2671 = vrot.slane %v1568, 1
        %v2672 = vsel %vm1745, %v2670, %v2671
        %v2673 = vrot.slane %v1569, 1
        %v2674 = vrot.slane %v1570, 1
        %v2675 = vsel %vm1745, %v2673, %v2674
        %v2676 = vrot.slane %v1571, 1
        %v2677 = vrot.slane %v1572, 1
        %v2678 = vsel %vm1745, %v2676, %v2677
        %v2679 = vrot.slane %v1573, 1
        %v2680 = vrot.slane %v1574, 1
        %v2681 = vsel %vm1745, %v2679, %v2680
        %v2682 = vrot.slane %v1575, 1
        %v2683 = vrot.slane %v1576, 1
        %v2684 = vsel %vm1745, %v2682, %v2683
        %v2685 = vrot.slane %v1577, 1
        %v2686 = vrot.slane %v1578, 1
        %v2687 = vsel %vm1745, %v2685, %v2686
        %v2688 = vrot.slane %v1579, 1
        %v2689 = vrot.slane %v1580, 1
        %v2690 = vsel %vm1745, %v2688, %v2689
        %v2691 = vrot.slane %v1581, 1
        %v2692 = vrot.slane %v1582, 1
        %v2693 = vsel %vm1745, %v2691, %v2692
        %2694 = vrot.lane.b32.xlu0 %v2648, 44
        %v2695 = vpop.permute.xlu0 %2694
        %2696 = vrot.lane.b32.xlu0 %v2651, 44
        %v2697 = vpop.permute.xlu0 %2696
        %2698 = vrot.lane.b32.xlu0 %v2654, 44
        %v2699 = vpop.permute.xlu0 %2698
        %2700 = vrot.lane.b32.xlu0 %v2657, 44
        %v2701 = vpop.permute.xlu0 %2700
        %2702 = vrot.lane.b32.xlu0 %v2660, 44
        %v2703 = vpop.permute.xlu0 %2702
        %2704 = vrot.lane.b32.xlu0 %v2663, 44
        %v2705 = vpop.permute.xlu0 %2704
        %2706 = vrot.lane.b32.xlu0 %v2666, 44
        %v2707 = vpop.permute.xlu0 %2706
        %2708 = vrot.lane.b32.xlu0 %v2669, 44
        %v2709 = vpop.permute.xlu0 %2708
        %2710 = vrot.lane.b32.xlu0 %v2672, 44
        %v2711 = vpop.permute.xlu0 %2710
        %2712 = vrot.lane.b32.xlu0 %v2675, 44
        %v2713 = vpop.permute.xlu0 %2712
        %2714 = vrot.lane.b32.xlu0 %v2678, 44
        %v2715 = vpop.permute.xlu0 %2714
        %2716 = vrot.lane.b32.xlu0 %v2681, 44
        %v2717 = vpop.permute.xlu0 %2716
        %2718 = vrot.lane.b32.xlu0 %v2684, 44
        %v2719 = vpop.permute.xlu0 %2718
        %2720 = vrot.lane.b32.xlu0 %v2687, 44
        %v2721 = vpop.permute.xlu0 %2720
        %2722 = vrot.lane.b32.xlu0 %v2690, 44
        %v2723 = vpop.permute.xlu0 %2722
        %2724 = vrot.lane.b32.xlu0 %v2693, 44
        %v2725 = vpop.permute.xlu0 %2724
        %2758 = vrot.lane.b32.xlu0 %v1481, 48
        %v2759 = vpop.permute.xlu0 %2758
        %2760 = vrot.lane.b32.xlu0 %v1483, 48
        %v2761 = vpop.permute.xlu0 %2760
        %2762 = vrot.lane.b32.xlu0 %v1485, 48
        %v2763 = vpop.permute.xlu0 %2762
        %2764 = vrot.lane.b32.xlu0 %v1487, 48
        %v2765 = vpop.permute.xlu0 %2764
        %2766 = vrot.lane.b32.xlu0 %v1489, 48
        %v2767 = vpop.permute.xlu0 %2766
        %2768 = vrot.lane.b32.xlu0 %v1491, 48
        %v2769 = vpop.permute.xlu0 %2768
        %2770 = vrot.lane.b32.xlu0 %v1493, 48
        %v2771 = vpop.permute.xlu0 %2770
        %2772 = vrot.lane.b32.xlu0 %v1495, 48
        %v2773 = vpop.permute.xlu0 %2772
        %2774 = vrot.lane.b32.xlu0 %v1497, 48
        %v2775 = vpop.permute.xlu0 %2774
        %2776 = vrot.lane.b32.xlu0 %v1499, 48
        %v2777 = vpop.permute.xlu0 %2776
        %2778 = vrot.lane.b32.xlu0 %v1501, 48
        %v2779 = vpop.permute.xlu0 %2778
        %2780 = vrot.lane.b32.xlu0 %v1503, 48
        %v2781 = vpop.permute.xlu0 %2780
        %2782 = vrot.lane.b32.xlu0 %v1505, 48
        %v2783 = vpop.permute.xlu0 %2782
        %2784 = vrot.lane.b32.xlu0 %v1507, 48
        %v2785 = vpop.permute.xlu0 %2784
        %2786 = vrot.lane.b32.xlu0 %v1509, 48
        %v2787 = vpop.permute.xlu0 %2786
        %2788 = vrot.lane.b32.xlu0 %v1511, 48
        %v2789 = vpop.permute.xlu0 %2788
        %v2838 = vrot.slane %v1449, 1
        %v2839 = vrot.slane %v1450, 1
        %v2840 = vsel %vm1745, %v2838, %v2839
        %v2841 = vrot.slane %v1451, 1
        %v2842 = vrot.slane %v1452, 1
        %v2843 = vsel %vm1745, %v2841, %v2842
        %v2844 = vrot.slane %v1453, 1
        %v2845 = vrot.slane %v1454, 1
        %v2846 = vsel %vm1745, %v2844, %v2845
        %v2847 = vrot.slane %v1455, 1
        %v2848 = vrot.slane %v1456, 1
        %v2849 = vsel %vm1745, %v2847, %v2848
        %v2850 = vrot.slane %v1457, 1
        %v2851 = vrot.slane %v1458, 1
        %v2852 = vsel %vm1745, %v2850, %v2851
        %v2853 = vrot.slane %v1459, 1
        %v2854 = vrot.slane %v1460, 1
        %v2855 = vsel %vm1745, %v2853, %v2854
        %v2856 = vrot.slane %v1461, 1
        %v2857 = vrot.slane %v1462, 1
        %v2858 = vsel %vm1745, %v2856, %v2857
        %v2859 = vrot.slane %v1463, 1
        %v2860 = vrot.slane %v1464, 1
        %v2861 = vsel %vm1745, %v2859, %v2860
        %v2862 = vrot.slane %v1465, 1
        %v2863 = vrot.slane %v1466, 1
        %v2864 = vsel %vm1745, %v2862, %v2863
        %v2865 = vrot.slane %v1467, 1
        %v2866 = vrot.slane %v1468, 1
        %v2867 = vsel %vm1745, %v2865, %v2866
        %v2868 = vrot.slane %v1469, 1
        %v2869 = vrot.slane %v1470, 1
        %v2870 = vsel %vm1745, %v2868, %v2869
        %v2871 = vrot.slane %v1471, 1
        %v2872 = vrot.slane %v1472, 1
        %v2873 = vsel %vm1745, %v2871, %v2872
        %v2874 = vrot.slane %v1473, 1
        %v2875 = vrot.slane %v1474, 1
        %v2876 = vsel %vm1745, %v2874, %v2875
        %v2877 = vrot.slane %v1475, 1
        %v2878 = vrot.slane %v1476, 1
        %v2879 = vsel %vm1745, %v2877, %v2878
        %v2880 = vrot.slane %v1477, 1
        %v2881 = vrot.slane %v1478, 1
        %v2882 = vsel %vm1745, %v2880, %v2881
        %v2883 = vrot.slane %v1479, 1
        %v2884 = vrot.slane %v1480, 1
        %v2885 = vsel %vm1745, %v2883, %v2884
        %2886 = vrot.lane.b32.xlu0 %v2840, 52
        %v2887 = vpop.permute.xlu0 %2886
        %2888 = vrot.lane.b32.xlu0 %v2843, 52
        %v2889 = vpop.permute.xlu0 %2888
        %2890 = vrot.lane.b32.xlu0 %v2846, 52
        %v2891 = vpop.permute.xlu0 %2890
        %2892 = vrot.lane.b32.xlu0 %v2849, 52
        %v2893 = vpop.permute.xlu0 %2892
        %2894 = vrot.lane.b32.xlu0 %v2852, 52
        %v2895 = vpop.permute.xlu0 %2894
        %2896 = vrot.lane.b32.xlu0 %v2855, 52
        %v2897 = vpop.permute.xlu0 %2896
        %2898 = vrot.lane.b32.xlu0 %v2858, 52
        %v2899 = vpop.permute.xlu0 %2898
        %2900 = vrot.lane.b32.xlu0 %v2861, 52
        %v2901 = vpop.permute.xlu0 %2900
        %2902 = vrot.lane.b32.xlu0 %v2864, 52
        %v2903 = vpop.permute.xlu0 %2902
        %2904 = vrot.lane.b32.xlu0 %v2867, 52
        %v2905 = vpop.permute.xlu0 %2904
        %2906 = vrot.lane.b32.xlu0 %v2870, 52
        %v2907 = vpop.permute.xlu0 %2906
        %2908 = vrot.lane.b32.xlu0 %v2873, 52
        %v2909 = vpop.permute.xlu0 %2908
        %2910 = vrot.lane.b32.xlu0 %v2876, 52
        %v2911 = vpop.permute.xlu0 %2910
        %2912 = vrot.lane.b32.xlu0 %v2879, 52
        %v2913 = vpop.permute.xlu0 %2912
        %2914 = vrot.lane.b32.xlu0 %v2882, 52
        %v2915 = vpop.permute.xlu0 %2914
        %2916 = vrot.lane.b32.xlu0 %v2885, 52
        %v2917 = vpop.permute.xlu0 %2916
        %v2950 = vrot.slane %v1481, 1
        %v2951 = vrot.slane %v1482, 1
        %v2952 = vsel %vm1745, %v2950, %v2951
        %v2953 = vrot.slane %v1483, 1
        %v2954 = vrot.slane %v1484, 1
        %v2955 = vsel %vm1745, %v2953, %v2954
        %v2956 = vrot.slane %v1485, 1
        %v2957 = vrot.slane %v1486, 1
        %v2958 = vsel %vm1745, %v2956, %v2957
        %v2959 = vrot.slane %v1487, 1
        %v2960 = vrot.slane %v1488, 1
        %v2961 = vsel %vm1745, %v2959, %v2960
        %v2962 = vrot.slane %v1489, 1
        %v2963 = vrot.slane %v1490, 1
        %v2964 = vsel %vm1745, %v2962, %v2963
        %v2965 = vrot.slane %v1491, 1
        %v2966 = vrot.slane %v1492, 1
        %v2967 = vsel %vm1745, %v2965, %v2966
        %v2968 = vrot.slane %v1493, 1
        %v2969 = vrot.slane %v1494, 1
        %v2970 = vsel %vm1745, %v2968, %v2969
        %v2971 = vrot.slane %v1495, 1
        %v2972 = vrot.slane %v1496, 1
        %v2973 = vsel %vm1745, %v2971, %v2972
        %v2974 = vrot.slane %v1497, 1
        %v2975 = vrot.slane %v1498, 1
        %v2976 = vsel %vm1745, %v2974, %v2975
        %v2977 = vrot.slane %v1499, 1
        %v2978 = vrot.slane %v1500, 1
        %v2979 = vsel %vm1745, %v2977, %v2978
        %v2980 = vrot.slane %v1501, 1
        %v2981 = vrot.slane %v1502, 1
        %v2982 = vsel %vm1745, %v2980, %v2981
        %v2983 = vrot.slane %v1503, 1
        %v2984 = vrot.slane %v1504, 1
        %v2985 = vsel %vm1745, %v2983, %v2984
        %v2986 = vrot.slane %v1505, 1
        %v2987 = vrot.slane %v1506, 1
        %v2988 = vsel %vm1745, %v2986, %v2987
        %v2989 = vrot.slane %v1507, 1
        %v2990 = vrot.slane %v1508, 1
        %v2991 = vsel %vm1745, %v2989, %v2990
        %v2992 = vrot.slane %v1509, 1
        %v2993 = vrot.slane %v1510, 1
        %v2994 = vsel %vm1745, %v2992, %v2993
        %v2995 = vrot.slane %v1511, 1
        %v2996 = vrot.slane %v1512, 1
        %v2997 = vsel %vm1745, %v2995, %v2996
        %2998 = vrot.lane.b32.xlu0 %v2952, 56
        %v2999 = vpop.permute.xlu0 %2998
        %3000 = vrot.lane.b32.xlu0 %v2955, 56
        %v3001 = vpop.permute.xlu0 %3000
        %3002 = vrot.lane.b32.xlu0 %v2958, 56
        %v3003 = vpop.permute.xlu0 %3002
        %3004 = vrot.lane.b32.xlu0 %v2961, 56
        %v3005 = vpop.permute.xlu0 %3004
        %3006 = vrot.lane.b32.xlu0 %v2964, 56
        %v3007 = vpop.permute.xlu0 %3006
        %3008 = vrot.lane.b32.xlu0 %v2967, 56
        %v3009 = vpop.permute.xlu0 %3008
        %3010 = vrot.lane.b32.xlu0 %v2970, 56
        %v3011 = vpop.permute.xlu0 %3010
        %3012 = vrot.lane.b32.xlu0 %v2973, 56
        %v3013 = vpop.permute.xlu0 %3012
        %3014 = vrot.lane.b32.xlu0 %v2976, 56
        %v3015 = vpop.permute.xlu0 %3014
        %3016 = vrot.lane.b32.xlu0 %v2979, 56
        %v3017 = vpop.permute.xlu0 %3016
        %3018 = vrot.lane.b32.xlu0 %v2982, 56
        %v3019 = vpop.permute.xlu0 %3018
        %3020 = vrot.lane.b32.xlu0 %v2985, 56
        %v3021 = vpop.permute.xlu0 %3020
        %3022 = vrot.lane.b32.xlu0 %v2988, 56
        %v3023 = vpop.permute.xlu0 %3022
        %3024 = vrot.lane.b32.xlu0 %v2991, 56
        %v3025 = vpop.permute.xlu0 %3024
        %3026 = vrot.lane.b32.xlu0 %v2994, 56
        %v3027 = vpop.permute.xlu0 %3026
        %3028 = vrot.lane.b32.xlu0 %v2997, 56
        %v3029 = vpop.permute.xlu0 %3028
        %3048 = vrot.lane.b32.xlu0 %v1551, 60
        %v3049 = vpop.permute.xlu0 %3048
        %3050 = vrot.lane.b32.xlu0 %v1553, 60
        %v3051 = vpop.permute.xlu0 %3050
        %3052 = vrot.lane.b32.xlu0 %v1555, 60
        %v3053 = vpop.permute.xlu0 %3052
        %3054 = vrot.lane.b32.xlu0 %v1557, 60
        %v3055 = vpop.permute.xlu0 %3054
        %3056 = vrot.lane.b32.xlu0 %v1559, 60
        %v3057 = vpop.permute.xlu0 %3056
        %3058 = vrot.lane.b32.xlu0 %v1561, 60
        %v3059 = vpop.permute.xlu0 %3058
        %3060 = vrot.lane.b32.xlu0 %v1563, 60
        %v3061 = vpop.permute.xlu0 %3060
        %3062 = vrot.lane.b32.xlu0 %v1565, 60
        %v3063 = vpop.permute.xlu0 %3062
        %3064 = vrot.lane.b32.xlu0 %v1569, 60
        %v3065 = vpop.permute.xlu0 %3064
        %3066 = vrot.lane.b32.xlu0 %v1571, 60
        %v3067 = vpop.permute.xlu0 %3066
        %3068 = vrot.lane.b32.xlu0 %v1573, 60
        %v3069 = vpop.permute.xlu0 %3068
        %3070 = vrot.lane.b32.xlu0 %v1575, 60
        %v3071 = vpop.permute.xlu0 %3070
        %3072 = vrot.lane.b32.xlu0 %v1577, 60
        %v3073 = vpop.permute.xlu0 %3072
        %3074 = vrot.lane.b32.xlu0 %v1579, 60
        %v3075 = vpop.permute.xlu0 %3074
        %3076 = vrot.lane.b32.xlu0 %v1581, 60
        %v3077 = vpop.permute.xlu0 %3076
        %3078 = vrot.lane.b32.xlu0 %v1583, 60
        %v3079 = vpop.permute.xlu0 %3078
        %v3096 = vsel %vm1005, %v1413, %v1795
        %v3097 = vsel %vm1005, %v1415, %v1797
        %v3098 = vsel %vm1005, %v1417, %v1799
        %v3099 = vsel %vm1005, %v1419, %v1801
        %v3100 = vsel %vm1005, %v1421, %v1803
        %v3101 = vsel %vm1005, %v1423, %v1805
        %v3102 = vsel %vm1005, %v1425, %v1807
        %v3103 = vsel %vm1005, %v1427, %v1809
        %v3104 = vsel %vm1005, %v1431, %v1811
        %v3105 = vsel %vm1005, %v1433, %v1813
        %v3106 = vsel %vm1005, %v1435, %v1815
        %v3107 = vsel %vm1005, %v1437, %v1817
        %v3108 = vsel %vm1005, %v1439, %v1819
        %v3109 = vsel %vm1005, %v1441, %v1821
        %v3110 = vsel %vm1005, %v1443, %v1823
        %v3111 = vsel %vm1005, %v1445, %v1825
        %vm3112 = vcmask 64512
        %v3113 = vsel %vm3112, %v3096, %v1923
        %v3114 = vsel %vm3112, %v3097, %v1925
        %v3115 = vsel %vm3112, %v3098, %v1927
        %v3116 = vsel %vm3112, %v3099, %v1929
        %v3117 = vsel %vm3112, %v3100, %v1931
        %v3118 = vsel %vm3112, %v3101, %v1933
        %v3119 = vsel %vm3112, %v3102, %v1935
        %v3120 = vsel %vm3112, %v3103, %v1937
        %v3121 = vsel %vm3112, %v3104, %v1939
        %v3122 = vsel %vm3112, %v3105, %v1941
        %v3123 = vsel %vm3112, %v3106, %v1943
        %v3124 = vsel %vm3112, %v3107, %v1945
        %v3125 = vsel %vm3112, %v3108, %v1947
        %v3126 = vsel %vm3112, %v3109, %v1949
        %v3127 = vsel %vm3112, %v3110, %v1951
        %v3128 = vsel %vm3112, %v3111, %v1953
        %vm3129 = vcmask 97280
        %v3130 = vsel %vm3129, %v3113, %v1987
        %v3131 = vsel %vm3129, %v3114, %v1989
        %v3132 = vsel %vm3129, %v3115, %v1991
        %v3133 = vsel %vm3129, %v3116, %v1993
        %v3134 = vsel %vm3129, %v3117, %v1995
        %v3135 = vsel %vm3129, %v3118, %v1997
        %v3136 = vsel %vm3129, %v3119, %v1999
        %v3137 = vsel %vm3129, %v3120, %v2001
        %v3138 = vsel %vm3129, %v3121, %v2003
        %v3139 = vsel %vm3129, %v3122, %v2005
        %v3140 = vsel %vm3129, %v3123, %v2007
        %v3141 = vsel %vm3129, %v3124, %v2009
        %v3142 = vsel %vm3129, %v3125, %v2011
        %v3143 = vsel %vm3129, %v3126, %v2013
        %v3144 = vsel %vm3129, %v3127, %v2015
        %v3145 = vsel %vm3129, %v3128, %v2017
        %vm3146 = vcmask 130048
        %v3147 = vsel %vm3146, %v3130, %v2115
        %v3148 = vsel %vm3146, %v3131, %v2117
        %v3149 = vsel %vm3146, %v3132, %v2119
        %v3150 = vsel %vm3146, %v3133, %v2121
        %v3151 = vsel %vm3146, %v3134, %v2123
        %v3152 = vsel %vm3146, %v3135, %v2125
        %v3153 = vsel %vm3146, %v3136, %v2127
        %v3154 = vsel %vm3146, %v3137, %v2129
        %v3155 = vsel %vm3146, %v3138, %v2131
        %v3156 = vsel %vm3146, %v3139, %v2133
        %v3157 = vsel %vm3146, %v3140, %v2135
        %v3158 = vsel %vm3146, %v3141, %v2137
        %v3159 = vsel %vm3146, %v3142, %v2139
        %v3160 = vsel %vm3146, %v3143, %v2141
        %v3161 = vsel %vm3146, %v3144, %v2143
        %v3162 = vsel %vm3146, %v3145, %v2145
        %vm3163 = vcmask 162816
        %v3164 = vsel %vm3163, %v3147, %v2227
        %v3165 = vsel %vm3163, %v3148, %v2229
        %v3166 = vsel %vm3163, %v3149, %v2231
        %v3167 = vsel %vm3163, %v3150, %v2233
        %v3168 = vsel %vm3163, %v3151, %v2235
        %v3169 = vsel %vm3163, %v3152, %v2237
        %v3170 = vsel %vm3163, %v3153, %v2239
        %v3171 = vsel %vm3163, %v3154, %v2241
        %v3172 = vsel %vm3163, %v3155, %v2243
        %v3173 = vsel %vm3163, %v3156, %v2245
        %v3174 = vsel %vm3163, %v3157, %v2247
        %v3175 = vsel %vm3163, %v3158, %v2249
        %v3176 = vsel %vm3163, %v3159, %v2251
        %v3177 = vsel %vm3163, %v3160, %v2253
        %v3178 = vsel %vm3163, %v3161, %v2255
        %v3179 = vsel %vm3163, %v3162, %v2257
        %vm3180 = vcmask 195584
        %v3181 = vsel %vm3180, %v3164, %v2277
        %v3182 = vsel %vm3180, %v3165, %v2279
        %v3183 = vsel %vm3180, %v3166, %v2281
        %v3184 = vsel %vm3180, %v3167, %v2283
        %v3185 = vsel %vm3180, %v3168, %v2285
        %v3186 = vsel %vm3180, %v3169, %v2287
        %v3187 = vsel %vm3180, %v3170, %v2289
        %v3188 = vsel %vm3180, %v3171, %v2291
        %v3189 = vsel %vm3180, %v3172, %v2293
        %v3190 = vsel %vm3180, %v3173, %v2295
        %v3191 = vsel %vm3180, %v3174, %v2297
        %v3192 = vsel %vm3180, %v3175, %v2299
        %v3193 = vsel %vm3180, %v3176, %v2301
        %v3194 = vsel %vm3180, %v3177, %v2303
        %v3195 = vsel %vm3180, %v3178, %v2305
        %v3196 = vsel %vm3180, %v3179, %v2307
        %vm3197 = vcmask 228352
        %v3198 = vsel %vm3197, %v3181, %v2335
        %v3199 = vsel %vm3197, %v3182, %v2337
        %v3200 = vsel %vm3197, %v3183, %v2339
        %v3201 = vsel %vm3197, %v3184, %v2341
        %v3202 = vsel %vm3197, %v3185, %v2343
        %v3203 = vsel %vm3197, %v3186, %v2345
        %v3204 = vsel %vm3197, %v3187, %v2347
        %v3205 = vsel %vm3197, %v3188, %v2349
        %v3206 = vsel %vm3197, %v3189, %v2351
        %v3207 = vsel %vm3197, %v3190, %v2353
        %v3208 = vsel %vm3197, %v3191, %v2355
        %v3209 = vsel %vm3197, %v3192, %v2357
        %v3210 = vsel %vm3197, %v3193, %v2359
        %v3211 = vsel %vm3197, %v3194, %v2361
        %v3212 = vsel %vm3197, %v3195, %v2363
        %v3213 = vsel %vm3197, %v3196, %v2365
        %vm3214 = vcmask 261120
        %v3215 = vsel %vm3214, %v3198, %v2391
        %v3216 = vsel %vm3214, %v3199, %v2393
        %v3217 = vsel %vm3214, %v3200, %v2395
        %v3218 = vsel %vm3214, %v3201, %v2397
        %v3219 = vsel %vm3214, %v3202, %v2399
        %v3220 = vsel %vm3214, %v3203, %v2401
        %v3221 = vsel %vm3214, %v3204, %v2403
        %v3222 = vsel %vm3214, %v3205, %v2405
        %v3223 = vsel %vm3214, %v3206, %v2407
        %v3224 = vsel %vm3214, %v3207, %v2409
        %v3225 = vsel %vm3214, %v3208, %v2411
        %v3226 = vsel %vm3214, %v3209, %v2413
        %v3227 = vsel %vm3214, %v3210, %v2415
        %v3228 = vsel %vm3214, %v3211, %v2417
        %v3229 = vsel %vm3214, %v3212, %v2419
        %v3230 = vsel %vm3214, %v3213, %v2421
        %vm3231 = vcmask 293888
        %v3232 = vsel %vm3231, %v3215, %v2455
        %v3233 = vsel %vm3231, %v3216, %v2457
        %v3234 = vsel %vm3231, %v3217, %v2459
        %v3235 = vsel %vm3231, %v3218, %v2461
        %v3236 = vsel %vm3231, %v3219, %v2463
        %v3237 = vsel %vm3231, %v3220, %v2465
        %v3238 = vsel %vm3231, %v3221, %v2467
        %v3239 = vsel %vm3231, %v3222, %v2469
        %v3240 = vsel %vm3231, %v3223, %v2471
        %v3241 = vsel %vm3231, %v3224, %v2473
        %v3242 = vsel %vm3231, %v3225, %v2475
        %v3243 = vsel %vm3231, %v3226, %v2477
        %v3244 = vsel %vm3231, %v3227, %v2479
        %v3245 = vsel %vm3231, %v3228, %v2481
        %v3246 = vsel %vm3231, %v3229, %v2483
        %v3247 = vsel %vm3231, %v3230, %v2485
        %vm3248 = vcmask 326656
        %v3249 = vsel %vm3248, %v3232, %v2583
        %v3250 = vsel %vm3248, %v3233, %v2585
        %v3251 = vsel %vm3248, %v3234, %v2587
        %v3252 = vsel %vm3248, %v3235, %v2589
        %v3253 = vsel %vm3248, %v3236, %v2591
        %v3254 = vsel %vm3248, %v3237, %v2593
        %v3255 = vsel %vm3248, %v3238, %v2595
        %v3256 = vsel %vm3248, %v3239, %v2597
        %v3257 = vsel %vm3248, %v3240, %v2599
        %v3258 = vsel %vm3248, %v3241, %v2601
        %v3259 = vsel %vm3248, %v3242, %v2603
        %v3260 = vsel %vm3248, %v3243, %v2605
        %v3261 = vsel %vm3248, %v3244, %v2607
        %v3262 = vsel %vm3248, %v3245, %v2609
        %v3263 = vsel %vm3248, %v3246, %v2611
        %v3264 = vsel %vm3248, %v3247, %v2613
        %vm3265 = vcmask 359424
        %v3266 = vsel %vm3265, %v3249, %v2695
        %v3267 = vsel %vm3265, %v3250, %v2697
        %v3268 = vsel %vm3265, %v3251, %v2699
        %v3269 = vsel %vm3265, %v3252, %v2701
        %v3270 = vsel %vm3265, %v3253, %v2703
        %v3271 = vsel %vm3265, %v3254, %v2705
        %v3272 = vsel %vm3265, %v3255, %v2707
        %v3273 = vsel %vm3265, %v3256, %v2709
        %v3274 = vsel %vm3265, %v3257, %v2711
        %v3275 = vsel %vm3265, %v3258, %v2713
        %v3276 = vsel %vm3265, %v3259, %v2715
        %v3277 = vsel %vm3265, %v3260, %v2717
        %v3278 = vsel %vm3265, %v3261, %v2719
        %v3279 = vsel %vm3265, %v3262, %v2721
        %v3280 = vsel %vm3265, %v3263, %v2723
        %v3281 = vsel %vm3265, %v3264, %v2725
        %vm3282 = vcmask 392192
        %v3283 = vsel %vm3282, %v3266, %v2759
        %v3284 = vsel %vm3282, %v3267, %v2761
        %v3285 = vsel %vm3282, %v3268, %v2763
        %v3286 = vsel %vm3282, %v3269, %v2765
        %v3287 = vsel %vm3282, %v3270, %v2767
        %v3288 = vsel %vm3282, %v3271, %v2769
        %v3289 = vsel %vm3282, %v3272, %v2771
        %v3290 = vsel %vm3282, %v3273, %v2773
        %v3291 = vsel %vm3282, %v3274, %v2775
        %v3292 = vsel %vm3282, %v3275, %v2777
        %v3293 = vsel %vm3282, %v3276, %v2779
        %v3294 = vsel %vm3282, %v3277, %v2781
        %v3295 = vsel %vm3282, %v3278, %v2783
        %v3296 = vsel %vm3282, %v3279, %v2785
        %v3297 = vsel %vm3282, %v3280, %v2787
        %v3298 = vsel %vm3282, %v3281, %v2789
        %vm3299 = vcmask 424960
        %v3300 = vsel %vm3299, %v3283, %v2887
        %v3301 = vsel %vm3299, %v3284, %v2889
        %v3302 = vsel %vm3299, %v3285, %v2891
        %v3303 = vsel %vm3299, %v3286, %v2893
        %v3304 = vsel %vm3299, %v3287, %v2895
        %v3305 = vsel %vm3299, %v3288, %v2897
        %v3306 = vsel %vm3299, %v3289, %v2899
        %v3307 = vsel %vm3299, %v3290, %v2901
        %v3308 = vsel %vm3299, %v3291, %v2903
        %v3309 = vsel %vm3299, %v3292, %v2905
        %v3310 = vsel %vm3299, %v3293, %v2907
        %v3311 = vsel %vm3299, %v3294, %v2909
        %v3312 = vsel %vm3299, %v3295, %v2911
        %v3313 = vsel %vm3299, %v3296, %v2913
        %v3314 = vsel %vm3299, %v3297, %v2915
        %v3315 = vsel %vm3299, %v3298, %v2917
        %vm3316 = vcmask 457728
        %v3317 = vsel %vm3316, %v3300, %v2999
        %v3318 = vsel %vm3316, %v3301, %v3001
        %v3319 = vsel %vm3316, %v3302, %v3003
        %v3320 = vsel %vm3316, %v3303, %v3005
        %v3321 = vsel %vm3316, %v3304, %v3007
        %v3322 = vsel %vm3316, %v3305, %v3009
        %v3323 = vsel %vm3316, %v3306, %v3011
        %v3324 = vsel %vm3316, %v3307, %v3013
        %v3325 = vsel %vm3316, %v3308, %v3015
        %v3326 = vsel %vm3316, %v3309, %v3017
        %v3327 = vsel %vm3316, %v3310, %v3019
        %v3328 = vsel %vm3316, %v3311, %v3021
        %v3329 = vsel %vm3316, %v3312, %v3023
        %v3330 = vsel %vm3316, %v3313, %v3025
        %v3331 = vsel %vm3316, %v3314, %v3027
        %v3332 = vsel %vm3316, %v3315, %v3029
        %vm3333 = vcmask 490496
        %v3334 = vsel %vm3333, %v3317, %v3049
        %v3335 = vsel %vm3333, %v3318, %v3051
        %v3336 = vsel %vm3333, %v3319, %v3053
        %v3337 = vsel %vm3333, %v3320, %v3055
        %v3338 = vsel %vm3333, %v3321, %v3057
        %v3339 = vsel %vm3333, %v3322, %v3059
        %v3340 = vsel %vm3333, %v3323, %v3061
        %v3341 = vsel %vm3333, %v3324, %v3063
        %v3342 = vsel %vm3333, %v3325, %v3065
        %v3343 = vsel %vm3333, %v3326, %v3067
        %v3344 = vsel %vm3333, %v3327, %v3069
        %v3345 = vsel %vm3333, %v3328, %v3071
        %v3346 = vsel %vm3333, %v3329, %v3073
        %v3347 = vsel %vm3333, %v3330, %v3075
        %v3348 = vsel %vm3333, %v3331, %v3077
        %v3349 = vsel %vm3333, %v3332, %v3079
        %3352 = vrot.lane.b32.xlu0 %v1551, 4
        %v3353 = vpop.permute.xlu0 %3352
        %3354 = vrot.lane.b32.xlu0 %v1552, 4
        %v3355 = vpop.permute.xlu0 %3354
        %3356 = vrot.lane.b32.xlu0 %v1553, 4
        %v3357 = vpop.permute.xlu0 %3356
        %3358 = vrot.lane.b32.xlu0 %v1554, 4
        %v3359 = vpop.permute.xlu0 %3358
        %3360 = vrot.lane.b32.xlu0 %v1555, 4
        %v3361 = vpop.permute.xlu0 %3360
        %3362 = vrot.lane.b32.xlu0 %v1556, 4
        %v3363 = vpop.permute.xlu0 %3362
        %3364 = vrot.lane.b32.xlu0 %v1557, 4
        %v3365 = vpop.permute.xlu0 %3364
        %3366 = vrot.lane.b32.xlu0 %v1558, 4
        %v3367 = vpop.permute.xlu0 %3366
        %3368 = vrot.lane.b32.xlu0 %v1559, 4
        %v3369 = vpop.permute.xlu0 %3368
        %3370 = vrot.lane.b32.xlu0 %v1560, 4
        %v3371 = vpop.permute.xlu0 %3370
        %3372 = vrot.lane.b32.xlu0 %v1561, 4
        %v3373 = vpop.permute.xlu0 %3372
        %3374 = vrot.lane.b32.xlu0 %v1562, 4
        %v3375 = vpop.permute.xlu0 %3374
        %3376 = vrot.lane.b32.xlu0 %v1563, 4
        %v3377 = vpop.permute.xlu0 %3376
        %3378 = vrot.lane.b32.xlu0 %v1564, 4
        %v3379 = vpop.permute.xlu0 %3378
        %3380 = vrot.lane.b32.xlu0 %v1565, 4
        %v3381 = vpop.permute.xlu0 %3380
        %3382 = vrot.lane.b32.xlu0 %v1566, 4
        %v3383 = vpop.permute.xlu0 %3382
        %3384 = vrot.lane.b32.xlu0 %v1569, 4
        %v3385 = vpop.permute.xlu0 %3384
        %3386 = vrot.lane.b32.xlu0 %v1570, 4
        %v3387 = vpop.permute.xlu0 %3386
        %3388 = vrot.lane.b32.xlu0 %v1571, 4
        %v3389 = vpop.permute.xlu0 %3388
        %3390 = vrot.lane.b32.xlu0 %v1572, 4
        %v3391 = vpop.permute.xlu0 %3390
        %3392 = vrot.lane.b32.xlu0 %v1573, 4
        %v3393 = vpop.permute.xlu0 %3392
        %3394 = vrot.lane.b32.xlu0 %v1574, 4
        %v3395 = vpop.permute.xlu0 %3394
        %3396 = vrot.lane.b32.xlu0 %v1575, 4
        %v3397 = vpop.permute.xlu0 %3396
        %3398 = vrot.lane.b32.xlu0 %v1576, 4
        %v3399 = vpop.permute.xlu0 %3398
        %3400 = vrot.lane.b32.xlu0 %v1577, 4
        %v3401 = vpop.permute.xlu0 %3400
        %3402 = vrot.lane.b32.xlu0 %v1578, 4
        %v3403 = vpop.permute.xlu0 %3402
        %3404 = vrot.lane.b32.xlu0 %v1579, 4
        %v3405 = vpop.permute.xlu0 %3404
        %3406 = vrot.lane.b32.xlu0 %v1580, 4
        %v3407 = vpop.permute.xlu0 %3406
        %3408 = vrot.lane.b32.xlu0 %v1581, 4
        %v3409 = vpop.permute.xlu0 %3408
        %3410 = vrot.lane.b32.xlu0 %v1582, 4
        %v3411 = vpop.permute.xlu0 %3410
        %3412 = vrot.lane.b32.xlu0 %v1583, 4
        %v3413 = vpop.permute.xlu0 %3412
        %3414 = vrot.lane.b32.xlu0 %v1584, 4
        %v3415 = vpop.permute.xlu0 %3414
        %v3464 = vrot.slane %v1633, 7
        %v3465 = vrot.slane %v1634, 7
        %v3466 = vrot.slane %v1635, 7
        %v3467 = vrot.slane %v1636, 7
        %v3468 = vrot.slane %v1637, 7
        %v3469 = vrot.slane %v1638, 7
        %v3470 = vrot.slane %v1639, 7
        %v3471 = vrot.slane %v1640, 7
        %v3472 = vrot.slane %v1641, 7
        %v3473 = vrot.slane %v1642, 7
        %v3474 = vrot.slane %v1643, 7
        %v3475 = vrot.slane %v1644, 7
        %v3476 = vrot.slane %v1645, 7
        %v3477 = vrot.slane %v1646, 7
        %v3478 = vrot.slane %v1647, 7
        %v3479 = vrot.slane %v1648, 7
        %3480 = vrot.lane.b32.xlu0 %v3464, 8
        %v3481 = vpop.permute.xlu0 %3480
        %3482 = vrot.lane.b32.xlu0 %v3465, 8
        %v3483 = vpop.permute.xlu0 %3482
        %3484 = vrot.lane.b32.xlu0 %v3466, 8
        %v3485 = vpop.permute.xlu0 %3484
        %3486 = vrot.lane.b32.xlu0 %v3467, 8
        %v3487 = vpop.permute.xlu0 %3486
        %3488 = vrot.lane.b32.xlu0 %v3468, 8
        %v3489 = vpop.permute.xlu0 %3488
        %3490 = vrot.lane.b32.xlu0 %v3469, 8
        %v3491 = vpop.permute.xlu0 %3490
        %3492 = vrot.lane.b32.xlu0 %v3470, 8
        %v3493 = vpop.permute.xlu0 %3492
        %3494 = vrot.lane.b32.xlu0 %v3471, 8
        %v3495 = vpop.permute.xlu0 %3494
        %3496 = vrot.lane.b32.xlu0 %v3472, 8
        %v3497 = vpop.permute.xlu0 %3496
        %3498 = vrot.lane.b32.xlu0 %v3473, 8
        %v3499 = vpop.permute.xlu0 %3498
        %3500 = vrot.lane.b32.xlu0 %v3474, 8
        %v3501 = vpop.permute.xlu0 %3500
        %3502 = vrot.lane.b32.xlu0 %v3475, 8
        %v3503 = vpop.permute.xlu0 %3502
        %3504 = vrot.lane.b32.xlu0 %v3476, 8
        %v3505 = vpop.permute.xlu0 %3504
        %3506 = vrot.lane.b32.xlu0 %v3477, 8
        %v3507 = vpop.permute.xlu0 %3506
        %3508 = vrot.lane.b32.xlu0 %v3478, 8
        %v3509 = vpop.permute.xlu0 %3508
        %3510 = vrot.lane.b32.xlu0 %v3479, 8
        %v3511 = vpop.permute.xlu0 %3510
        %v3544 = vrot.slane %v1697, 7
        %v3545 = vrot.slane %v1698, 7
        %v3546 = vrot.slane %v1699, 7
        %v3547 = vrot.slane %v1700, 7
        %v3548 = vrot.slane %v1701, 7
        %v3549 = vrot.slane %v1702, 7
        %v3550 = vrot.slane %v1703, 7
        %v3551 = vrot.slane %v1704, 7
        %v3552 = vrot.slane %v1705, 7
        %v3553 = vrot.slane %v1706, 7
        %v3554 = vrot.slane %v1707, 7
        %v3555 = vrot.slane %v1708, 7
        %v3556 = vrot.slane %v1709, 7
        %v3557 = vrot.slane %v1710, 7
        %v3558 = vrot.slane %v1711, 7
        %v3559 = vrot.slane %v1712, 7
        %3560 = vrot.lane.b32.xlu0 %v3544, 12
        %v3561 = vpop.permute.xlu0 %3560
        %3562 = vrot.lane.b32.xlu0 %v3545, 12
        %v3563 = vpop.permute.xlu0 %3562
        %3564 = vrot.lane.b32.xlu0 %v3546, 12
        %v3565 = vpop.permute.xlu0 %3564
        %3566 = vrot.lane.b32.xlu0 %v3547, 12
        %v3567 = vpop.permute.xlu0 %3566
        %3568 = vrot.lane.b32.xlu0 %v3548, 12
        %v3569 = vpop.permute.xlu0 %3568
        %3570 = vrot.lane.b32.xlu0 %v3549, 12
        %v3571 = vpop.permute.xlu0 %3570
        %3572 = vrot.lane.b32.xlu0 %v3550, 12
        %v3573 = vpop.permute.xlu0 %3572
        %3574 = vrot.lane.b32.xlu0 %v3551, 12
        %v3575 = vpop.permute.xlu0 %3574
        %3576 = vrot.lane.b32.xlu0 %v3552, 12
        %v3577 = vpop.permute.xlu0 %3576
        %3578 = vrot.lane.b32.xlu0 %v3553, 12
        %v3579 = vpop.permute.xlu0 %3578
        %3580 = vrot.lane.b32.xlu0 %v3554, 12
        %v3581 = vpop.permute.xlu0 %3580
        %3582 = vrot.lane.b32.xlu0 %v3555, 12
        %v3583 = vpop.permute.xlu0 %3582
        %3584 = vrot.lane.b32.xlu0 %v3556, 12
        %v3585 = vpop.permute.xlu0 %3584
        %3586 = vrot.lane.b32.xlu0 %v3557, 12
        %v3587 = vpop.permute.xlu0 %3586
        %3588 = vrot.lane.b32.xlu0 %v3558, 12
        %v3589 = vpop.permute.xlu0 %3588
        %3590 = vrot.lane.b32.xlu0 %v3559, 12
        %v3591 = vpop.permute.xlu0 %3590
        %v3608 = vsel %vm1005, %v1515, %v3353
        %v3609 = vsel %vm1005, %v1516, %v3355
        %v3610 = vsel %vm1005, %v1517, %v3357
        %v3611 = vsel %vm1005, %v1518, %v3359
        %v3612 = vsel %vm1005, %v1519, %v3361
        %v3613 = vsel %vm1005, %v1520, %v3363
        %v3614 = vsel %vm1005, %v1521, %v3365
        %v3615 = vsel %vm1005, %v1522, %v3367
        %v3616 = vsel %vm1005, %v1523, %v3369
        %v3617 = vsel %vm1005, %v1524, %v3371
        %v3618 = vsel %vm1005, %v1525, %v3373
        %v3619 = vsel %vm1005, %v1526, %v3375
        %v3620 = vsel %vm1005, %v1527, %v3377
        %v3621 = vsel %vm1005, %v1528, %v3379
        %v3622 = vsel %vm1005, %v1529, %v3381
        %v3623 = vsel %vm1005, %v1530, %v3383
        %v3624 = vsel %vm1005, %v1533, %v3385
        %v3625 = vsel %vm1005, %v1534, %v3387
        %v3626 = vsel %vm1005, %v1535, %v3389
        %v3627 = vsel %vm1005, %v1536, %v3391
        %v3628 = vsel %vm1005, %v1537, %v3393
        %v3629 = vsel %vm1005, %v1538, %v3395
        %v3630 = vsel %vm1005, %v1539, %v3397
        %v3631 = vsel %vm1005, %v1540, %v3399
        %v3632 = vsel %vm1005, %v1541, %v3401
        %v3633 = vsel %vm1005, %v1542, %v3403
        %v3634 = vsel %vm1005, %v1543, %v3405
        %v3635 = vsel %vm1005, %v1544, %v3407
        %v3636 = vsel %vm1005, %v1545, %v3409
        %v3637 = vsel %vm1005, %v1546, %v3411
        %v3638 = vsel %vm1005, %v1547, %v3413
        %v3639 = vsel %vm1005, %v1548, %v3415
        %v3640 = vsel %vm3112, %v3608, %v3481
        %v3641 = vsel %vm3112, %v3609, %v3481
        %v3642 = vsel %vm3112, %v3610, %v3483
        %v3643 = vsel %vm3112, %v3611, %v3483
        %v3644 = vsel %vm3112, %v3612, %v3485
        %v3645 = vsel %vm3112, %v3613, %v3485
        %v3646 = vsel %vm3112, %v3614, %v3487
        %v3647 = vsel %vm3112, %v3615, %v3487
        %v3648 = vsel %vm3112, %v3616, %v3489
        %v3649 = vsel %vm3112, %v3617, %v3489
        %v3650 = vsel %vm3112, %v3618, %v3491
        %v3651 = vsel %vm3112, %v3619, %v3491
        %v3652 = vsel %vm3112, %v3620, %v3493
        %v3653 = vsel %vm3112, %v3621, %v3493
        %v3654 = vsel %vm3112, %v3622, %v3495
        %v3655 = vsel %vm3112, %v3623, %v3495
        %v3656 = vsel %vm3112, %v3624, %v3497
        %v3657 = vsel %vm3112, %v3625, %v3497
        %v3658 = vsel %vm3112, %v3626, %v3499
        %v3659 = vsel %vm3112, %v3627, %v3499
        %v3660 = vsel %vm3112, %v3628, %v3501
        %v3661 = vsel %vm3112, %v3629, %v3501
        %v3662 = vsel %vm3112, %v3630, %v3503
        %v3663 = vsel %vm3112, %v3631, %v3503
        %v3664 = vsel %vm3112, %v3632, %v3505
        %v3665 = vsel %vm3112, %v3633, %v3505
        %v3666 = vsel %vm3112, %v3634, %v3507
        %v3667 = vsel %vm3112, %v3635, %v3507
        %v3668 = vsel %vm3112, %v3636, %v3509
        %v3669 = vsel %vm3112, %v3637, %v3509
        %v3670 = vsel %vm3112, %v3638, %v3511
        %v3671 = vsel %vm3112, %v3639, %v3511
        %v3672 = vsel %vm3129, %v3640, %v3561
        %v3673 = vsel %vm3129, %v3641, %v3561
        %v3674 = vsel %vm3129, %v3642, %v3563
        %v3675 = vsel %vm3129, %v3643, %v3563
        %v3676 = vsel %vm3129, %v3644, %v3565
        %v3677 = vsel %vm3129, %v3645, %v3565
        %v3678 = vsel %vm3129, %v3646, %v3567
        %v3679 = vsel %vm3129, %v3647, %v3567
        %v3680 = vsel %vm3129, %v3648, %v3569
        %v3681 = vsel %vm3129, %v3649, %v3569
        %v3682 = vsel %vm3129, %v3650, %v3571
        %v3683 = vsel %vm3129, %v3651, %v3571
        %v3684 = vsel %vm3129, %v3652, %v3573
        %v3685 = vsel %vm3129, %v3653, %v3573
        %v3686 = vsel %vm3129, %v3654, %v3575
        %v3687 = vsel %vm3129, %v3655, %v3575
        %v3688 = vsel %vm3129, %v3656, %v3577
        %v3689 = vsel %vm3129, %v3657, %v3577
        %v3690 = vsel %vm3129, %v3658, %v3579
        %v3691 = vsel %vm3129, %v3659, %v3579
        %v3692 = vsel %vm3129, %v3660, %v3581
        %v3693 = vsel %vm3129, %v3661, %v3581
        %v3694 = vsel %vm3129, %v3662, %v3583
        %v3695 = vsel %vm3129, %v3663, %v3583
        %v3696 = vsel %vm3129, %v3664, %v3585
        %v3697 = vsel %vm3129, %v3665, %v3585
        %v3698 = vsel %vm3129, %v3666, %v3587
        %v3699 = vsel %vm3129, %v3667, %v3587
        %v3700 = vsel %vm3129, %v3668, %v3589
        %v3701 = vsel %vm3129, %v3669, %v3589
        %v3702 = vsel %vm3129, %v3670, %v3591
        %v3703 = vsel %vm3129, %v3671, %v3591
        %v3736 = vrot.slane %v3672, 1
        %v3737 = vrot.slane %v3673, 1
        %v3738 = vsel %vm1745, %v3736, %v3737
        %v3739 = vrot.slane %v3674, 1
        %v3740 = vrot.slane %v3675, 1
        %v3741 = vsel %vm1745, %v3739, %v3740
        %v3742 = vrot.slane %v3676, 1
        %v3743 = vrot.slane %v3677, 1
        %v3744 = vsel %vm1745, %v3742, %v3743
        %v3745 = vrot.slane %v3678, 1
        %v3746 = vrot.slane %v3679, 1
        %v3747 = vsel %vm1745, %v3745, %v3746
        %v3748 = vrot.slane %v3680, 1
        %v3749 = vrot.slane %v3681, 1
        %v3750 = vsel %vm1745, %v3748, %v3749
        %v3751 = vrot.slane %v3682, 1
        %v3752 = vrot.slane %v3683, 1
        %v3753 = vsel %vm1745, %v3751, %v3752
        %v3754 = vrot.slane %v3684, 1
        %v3755 = vrot.slane %v3685, 1
        %v3756 = vsel %vm1745, %v3754, %v3755
        %v3757 = vrot.slane %v3686, 1
        %v3758 = vrot.slane %v3687, 1
        %v3759 = vsel %vm1745, %v3757, %v3758
        %v3760 = vrot.slane %v3688, 1
        %v3761 = vrot.slane %v3689, 1
        %v3762 = vsel %vm1745, %v3760, %v3761
        %v3763 = vrot.slane %v3690, 1
        %v3764 = vrot.slane %v3691, 1
        %v3765 = vsel %vm1745, %v3763, %v3764
        %v3766 = vrot.slane %v3692, 1
        %v3767 = vrot.slane %v3693, 1
        %v3768 = vsel %vm1745, %v3766, %v3767
        %v3769 = vrot.slane %v3694, 1
        %v3770 = vrot.slane %v3695, 1
        %v3771 = vsel %vm1745, %v3769, %v3770
        %v3772 = vrot.slane %v3696, 1
        %v3773 = vrot.slane %v3697, 1
        %v3774 = vsel %vm1745, %v3772, %v3773
        %v3775 = vrot.slane %v3698, 1
        %v3776 = vrot.slane %v3699, 1
        %v3777 = vsel %vm1745, %v3775, %v3776
        %v3778 = vrot.slane %v3700, 1
        %v3779 = vrot.slane %v3701, 1
        %v3780 = vsel %vm1745, %v3778, %v3779
        %v3781 = vrot.slane %v3702, 1
        %v3782 = vrot.slane %v3703, 1
        %v3783 = vsel %vm1745, %v3781, %v3782
        %3784 = vrot.lane.b32.xlu0 %v3738, 64
        %v3785 = vpop.permute.xlu0 %3784
        %3786 = vrot.lane.b32.xlu0 %v3741, 64
        %v3787 = vpop.permute.xlu0 %3786
        %3788 = vrot.lane.b32.xlu0 %v3744, 64
        %v3789 = vpop.permute.xlu0 %3788
        %3790 = vrot.lane.b32.xlu0 %v3747, 64
        %v3791 = vpop.permute.xlu0 %3790
        %3792 = vrot.lane.b32.xlu0 %v3750, 64
        %v3793 = vpop.permute.xlu0 %3792
        %3794 = vrot.lane.b32.xlu0 %v3753, 64
        %v3795 = vpop.permute.xlu0 %3794
        %3796 = vrot.lane.b32.xlu0 %v3756, 64
        %v3797 = vpop.permute.xlu0 %3796
        %3798 = vrot.lane.b32.xlu0 %v3759, 64
        %v3799 = vpop.permute.xlu0 %3798
        %3800 = vrot.lane.b32.xlu0 %v3762, 64
        %v3801 = vpop.permute.xlu0 %3800
        %3802 = vrot.lane.b32.xlu0 %v3765, 64
        %v3803 = vpop.permute.xlu0 %3802
        %3804 = vrot.lane.b32.xlu0 %v3768, 64
        %v3805 = vpop.permute.xlu0 %3804
        %3806 = vrot.lane.b32.xlu0 %v3771, 64
        %v3807 = vpop.permute.xlu0 %3806
        %3808 = vrot.lane.b32.xlu0 %v3774, 64
        %v3809 = vpop.permute.xlu0 %3808
        %3810 = vrot.lane.b32.xlu0 %v3777, 64
        %v3811 = vpop.permute.xlu0 %3810
        %3812 = vrot.lane.b32.xlu0 %v3780, 64
        %v3813 = vpop.permute.xlu0 %3812
        %3814 = vrot.lane.b32.xlu0 %v3783, 64
        %v3815 = vpop.permute.xlu0 %3814
        %vm3832 = vcmask 523264
        %v3833 = vsel %vm3832, %v3334, %v3785
        %v3834 = vsel %vm3832, %v3335, %v3787
        %v3835 = vsel %vm3832, %v3336, %v3789
        %v3836 = vsel %vm3832, %v3337, %v3791
        %v3837 = vsel %vm3832, %v3338, %v3793
        %v3838 = vsel %vm3832, %v3339, %v3795
        %v3839 = vsel %vm3832, %v3340, %v3797
        %v3840 = vsel %vm3832, %v3341, %v3799
        %v3841 = vsel %vm3832, %v3342, %v3801
        %v3842 = vsel %vm3832, %v3343, %v3803
        %v3843 = vsel %vm3832, %v3344, %v3805
        %v3844 = vsel %vm3832, %v3345, %v3807
        %v3845 = vsel %vm3832, %v3346, %v3809
        %v3846 = vsel %vm3832, %v3347, %v3811
        %v3847 = vsel %vm3832, %v3348, %v3813
        %v3848 = vsel %vm3832, %v3349, %v3815
        %v3849 = vld [vmem:[%s2] sm:$0xff]
        %v3850 = vld [vmem:[%s2 + $0x8] sm:$0xff]
        %v3851 = vld [vmem:[%s2 + $0x10] sm:$0xff]
        %v3852 = vld [vmem:[%s2 + $0x18] sm:$0xff]
        %v3853 = vld [vmem:[%s2 + $0x20] sm:$0xff]
        %v3854 = vld [vmem:[%s2 + $0x28] sm:$0xff]
        %v3855 = vld [vmem:[%s2 + $0x30] sm:$0xff]
        %v3856 = vld [vmem:[%s2 + $0x38] sm:$0xff]
        %v3857 = vld [vmem:[%s2 + $0x40] sm:$0xff]
        %v3858 = vld [vmem:[%s2 + $0x48] sm:$0xff]
        %vm3859 = vcmask 654336
        %v3861 = vsel %vm3859, %v3833, 0
        %v3864 = vsel %vm3859, %v3834, 0
        %v3867 = vsel %vm3859, %v3835, 0
        %v3870 = vsel %vm3859, %v3836, 0
        %v3873 = vsel %vm3859, %v3837, 0
        %v3876 = vsel %vm3859, %v3838, 0
        %v3879 = vsel %vm3859, %v3839, 0
        %v3882 = vsel %vm3859, %v3840, 0
        %v3885 = vsel %vm3859, %v3841, 0
        %v3888 = vsel %vm3859, %v3842, 0
        %v3891 = vsel %vm3859, %v3843, 0
        %v3894 = vsel %vm3859, %v3844, 0
        %v3897 = vsel %vm3859, %v3845, 0
        %v3900 = vsel %vm3859, %v3846, 0
        %v3903 = vsel %vm3859, %v3847, 0
        %v3906 = vsel %vm3859, %v3848, 0
        %3908 = vmatprep.subr.mxu0 0.0
        %3909 = vmatpush1.msra.mxu0 0.0
        %3910 = vmatprep.subr.mxu0 0.0
        %3911 = vmatpush1.msra.mxu0 0.0
        %3912 = vmatprep.subr.mxu0 0.0
        %3913 = vmatpush1.msra.mxu0 0.0
        %3914 = vmatprep.subr.mxu0 0.0
        %3915 = vmatpush1.msra.mxu0 0.0
        %3916 = vmatprep.subr.mxu0 0.0
        %3917 = vmatpush1.msra.mxu0 0.0
        %3918 = vmatprep.subr.mxu0 0.0
        %3919 = vmatpush1.msra.mxu0 0.0
        %3920 = vmatprep.subr.mxu0 0.0
        %3921 = vmatpush1.msra.mxu0 %v3858
        %3922 = vmatprep.subr.mxu0 0.0
        %3923 = vmatpush1.msra.mxu0 %v3857
        %3924 = vmatprep.subr.mxu0 0.0
        %3925 = vmatpush1.msra.mxu0 %v3856
        %3926 = vmatprep.subr.mxu0 0.0
        %3927 = vmatpush1.msra.mxu0 %v3855
        %3928 = vmatprep.subr.mxu0 0.0
        %3929 = vmatpush1.msra.mxu0 %v3854
        %3930 = vmatprep.subr.mxu0 0.0
        %3931 = vmatpush1.msra.mxu0 %v3853
        %3932 = vmatprep.subr.mxu0 0.0
        %3933 = vmatpush1.msra.mxu0 %v3852
        %3934 = vmatprep.subr.mxu0 0.0
        %3935 = vmatpush1.msra.mxu0 %v3851
        %3936 = vmatprep.subr.mxu0 0.0
        %3937 = vmatpush1.msra.mxu0 %v3850
        %3938 = vmatprep.subr.mxu0 0.0
        %3939 = vmatpush1.msra.mxu0 %v3849
        %3940 = vmatprep.subr.mxu0 0.0
        %3941 = vmatpush2.msra.mxu0 0.0
        %3942 = vmatprep.subr.mxu0 0.0
        %3943 = vmatpush2.msra.mxu0 0.0
        %3944 = vmatprep.subr.mxu0 0.0
        %3945 = vmatpush2.msra.mxu0 0.0
        %3946 = vmatprep.subr.mxu0 0.0
        %3947 = vmatpush2.msra.mxu0 0.0
        %3948 = vmatprep.subr.mxu0 0.0
        %3949 = vmatpush2.msra.mxu0 0.0
        %3950 = vmatprep.subr.mxu0 0.0
        %3951 = vmatpush2.msra.mxu0 0.0
        %3952 = vmatprep.subr.mxu0 0.0
        %3953 = vmatpush2.msra.mxu0 0.0
        %3954 = vmatprep.subr.mxu0 0.0
        %3955 = vmatpush2.msra.mxu0 0.0
        %3956 = vmatprep.subr.mxu0 0.0
        %3957 = vmatpush2.msra.mxu0 0.0
        %3958 = vmatprep.subr.mxu0 0.0
        %3959 = vmatpush2.msra.mxu0 0.0
        %3960 = vmatprep.subr.mxu0 0.0
        %3961 = vmatpush2.msra.mxu0 0.0
        %3962 = vmatprep.subr.mxu0 0.0
        %3963 = vmatpush2.msra.mxu0 0.0
        %3964 = vmatprep.subr.mxu0 0.0
        %3965 = vmatpush2.msra.mxu0 0.0
        %3966 = vmatprep.subr.mxu0 0.0
        %3967 = vmatpush2.msra.mxu0 0.0
        %3968 = vmatprep.subr.mxu0 0.0
        %3969 = vmatpush2.msra.mxu0 0.0
        %3970 = vmatprep.subr.mxu0 0.0
        %3971 = vmatpush2.msra.mxu0 0.0
        %3972 = vmatprep.mubr.f32.mxu0 0.0
        %3973 = vmatmul.mubr.f32.gmra.mxu0 %v3861
        %v3974 = vpop.f32.mrf.mxu0
        %v3975 = vadd.f32 0.0, %v3974
        %v3976 = vpop.f32.mrf.mxu0
        %3977 = vmatprep.mubr.f32.mxu0 0.0
        %3978 = vmatmul.mubr.f32.gmra.mxu0 %v3864
        %v3979 = vpop.f32.mrf.mxu0
        %v3980 = vadd.f32 0.0, %v3979
        %v3981 = vpop.f32.mrf.mxu0
        %3982 = vmatprep.mubr.f32.mxu0 0.0
        %3983 = vmatmul.mubr.f32.gmra.mxu0 %v3867
        %v3984 = vpop.f32.mrf.mxu0
        %v3985 = vadd.f32 0.0, %v3984
        %v3986 = vpop.f32.mrf.mxu0
        %3987 = vmatprep.mubr.f32.mxu0 0.0
        %3988 = vmatmul.mubr.f32.gmra.mxu0 %v3870
        %v3989 = vpop.f32.mrf.mxu0
        %v3990 = vadd.f32 0.0, %v3989
        %v3991 = vpop.f32.mrf.mxu0
        %3992 = vmatprep.mubr.f32.mxu0 0.0
        %3993 = vmatmul.mubr.f32.gmra.mxu0 %v3873
        %v3994 = vpop.f32.mrf.mxu0
        %v3995 = vadd.f32 0.0, %v3994
        %v3996 = vpop.f32.mrf.mxu0
        %3997 = vmatprep.mubr.f32.mxu0 0.0
        %3998 = vmatmul.mubr.f32.gmra.mxu0 %v3876
        %v3999 = vpop.f32.mrf.mxu0
        %v4000 = vadd.f32 0.0, %v3999
        %v4001 = vpop.f32.mrf.mxu0
        %4002 = vmatprep.mubr.f32.mxu0 0.0
        %4003 = vmatmul.mubr.f32.gmra.mxu0 %v3879
        %v4004 = vpop.f32.mrf.mxu0
        %v4005 = vadd.f32 0.0, %v4004
        %v4006 = vpop.f32.mrf.mxu0
        %4007 = vmatprep.mubr.f32.mxu0 0.0
        %4008 = vmatmul.mubr.f32.gmra.mxu0 %v3882
        %v4009 = vpop.f32.mrf.mxu0
        %v4010 = vadd.f32 0.0, %v4009
        %v4011 = vpop.f32.mrf.mxu0
        %4012 = vmatprep.mubr.f32.mxu0 0.0
        %4013 = vmatmul.mubr.f32.gmra.mxu0 %v3885
        %v4014 = vpop.f32.mrf.mxu0
        %v4015 = vadd.f32 0.0, %v4014
        %v4016 = vpop.f32.mrf.mxu0
        %4017 = vmatprep.mubr.f32.mxu0 0.0
        %4018 = vmatmul.mubr.f32.gmra.mxu0 %v3888
        %v4019 = vpop.f32.mrf.mxu0
        %v4020 = vadd.f32 0.0, %v4019
        %v4021 = vpop.f32.mrf.mxu0
        %4022 = vmatprep.mubr.f32.mxu0 0.0
        %4023 = vmatmul.mubr.f32.gmra.mxu0 %v3891
        %v4024 = vpop.f32.mrf.mxu0
        %v4025 = vadd.f32 0.0, %v4024
        %v4026 = vpop.f32.mrf.mxu0
        %4027 = vmatprep.mubr.f32.mxu0 0.0
        %4028 = vmatmul.mubr.f32.gmra.mxu0 %v3894
        %v4029 = vpop.f32.mrf.mxu0
        %v4030 = vadd.f32 0.0, %v4029
        %v4031 = vpop.f32.mrf.mxu0
        %4032 = vmatprep.mubr.f32.mxu0 0.0
        %4033 = vmatmul.mubr.f32.gmra.mxu0 %v3897
        %v4034 = vpop.f32.mrf.mxu0
        %v4035 = vadd.f32 0.0, %v4034
        %v4036 = vpop.f32.mrf.mxu0
        %4037 = vmatprep.mubr.f32.mxu0 0.0
        %4038 = vmatmul.mubr.f32.gmra.mxu0 %v3900
        %v4039 = vpop.f32.mrf.mxu0
        %v4040 = vadd.f32 0.0, %v4039
        %v4041 = vpop.f32.mrf.mxu0
        %4042 = vmatprep.mubr.f32.mxu0 0.0
        %4043 = vmatmul.mubr.f32.gmra.mxu0 %v3903
        %v4044 = vpop.f32.mrf.mxu0
        %v4045 = vadd.f32 0.0, %v4044
        %v4046 = vpop.f32.mrf.mxu0
        %4047 = vmatprep.mubr.f32.mxu0 0.0
        %4048 = vmatmul.mubr.f32.gmra.mxu0 %v3906
        %v4049 = vpop.f32.mrf.mxu0
        %v4050 = vadd.f32 0.0, %v4049
        %v4051 = vpop.f32.mrf.mxu0
        %4052 = vdwg.mxu0
        %v4053 = vld [vmem:[%s3] sm:$0xff]
        %v4054 = vld [vmem:[%s3 + $0x8] sm:$0xff]
        %v4055 = vld [vmem:[%s3 + $0x10] sm:$0xff]
        %v4056 = vld [vmem:[%s3 + $0x18] sm:$0xff]
        %v4057 = vld [vmem:[%s3 + $0x20] sm:$0xff]
        %v4058 = vld [vmem:[%s3 + $0x28] sm:$0xff]
        %v4059 = vld [vmem:[%s3 + $0x30] sm:$0xff]
        %v4060 = vld [vmem:[%s3 + $0x38] sm:$0xff]
        %v4061 = vadd.f32 %v3975, %v4053
        %v4062 = vadd.f32 %v3980, %v4054
        %v4063 = vadd.f32 %v3985, %v4055
        %v4064 = vadd.f32 %v3990, %v4056
        %v4065 = vadd.f32 %v3995, %v4057
        %v4066 = vadd.f32 %v4000, %v4058
        %v4067 = vadd.f32 %v4005, %v4059
        %v4068 = vadd.f32 %v4010, %v4060
        %v4069 = vadd.f32 %v4015, %v4053
        %v4070 = vadd.f32 %v4020, %v4054
        %v4071 = vadd.f32 %v4025, %v4055
        %v4072 = vadd.f32 %v4030, %v4056
        %v4073 = vadd.f32 %v4035, %v4057
        %v4074 = vadd.f32 %v4040, %v4058
        %v4075 = vadd.f32 %v4045, %v4059
        %v4076 = vadd.f32 %v4050, %v4060
        %v4077 = vsel %vm1005, %v1633, 0.0
        %v4078 = vsel %vm1005, %v1634, 0.0
        %v4079 = vadd.f32 %v4077, %v4078
        %v4080 = vsel %vm1005, %v1635, 0.0
        %v4081 = vadd.f32 %v4079, %v4080
        %v4082 = vsel %vm1005, %v1636, 0.0
        %v4083 = vadd.f32 %v4081, %v4082
        %v4084 = vsel %vm1005, %v1637, 0.0
        %v4085 = vadd.f32 %v4083, %v4084
        %v4086 = vsel %vm1005, %v1638, 0.0
        %v4087 = vadd.f32 %v4085, %v4086
        %v4088 = vsel %vm1005, %v1639, 0.0
        %v4089 = vadd.f32 %v4087, %v4088
        %v4090 = vsel %vm1005, %v1640, 0.0
        %v4091 = vadd.f32 %v4089, %v4090
        %v4092 = vrot.slane %v4091, 4
        %v4093 = vadd.f32 %v4091, %v4092
        %v4094 = vrot.slane %v4093, 2
        %v4095 = vadd.f32 %v4093, %v4094
        %v4096 = vrot.slane %v4095, 1
        %v4097 = vadd.f32 %v4095, %v4096
        %v4098 = vsel %vm1005, %v1641, 0.0
        %v4099 = vsel %vm1005, %v1642, 0.0
        %v4100 = vadd.f32 %v4098, %v4099
        %v4101 = vsel %vm1005, %v1643, 0.0
        %v4102 = vadd.f32 %v4100, %v4101
        %v4103 = vsel %vm1005, %v1644, 0.0
        %v4104 = vadd.f32 %v4102, %v4103
        %v4105 = vsel %vm1005, %v1645, 0.0
        %v4106 = vadd.f32 %v4104, %v4105
        %v4107 = vsel %vm1005, %v1646, 0.0
        %v4108 = vadd.f32 %v4106, %v4107
        %v4109 = vsel %vm1005, %v1647, 0.0
        %v4110 = vadd.f32 %v4108, %v4109
        %v4111 = vsel %vm1005, %v1648, 0.0
        %v4112 = vadd.f32 %v4110, %v4111
        %v4113 = vrot.slane %v4112, 4
        %v4114 = vadd.f32 %v4112, %v4113
        %v4115 = vrot.slane %v4114, 2
        %v4116 = vadd.f32 %v4114, %v4115
        %v4117 = vrot.slane %v4116, 1
        %v4118 = vadd.f32 %v4116, %v4117
        %v4119 = vrcp.pop 64.0
        %v4120 = vmul.f32 %v4097, %v4119
        %v4121 = vmul.f32 %v4118, %v4119
        %v4122 = vsel %vm1005, %v1697, 0.0
        %v4123 = vsel %vm1005, %v1698, 0.0
        %v4124 = vadd.f32 %v4122, %v4123
        %v4125 = vsel %vm1005, %v1699, 0.0
        %v4126 = vadd.f32 %v4124, %v4125
        %v4127 = vsel %vm1005, %v1700, 0.0
        %v4128 = vadd.f32 %v4126, %v4127
        %v4129 = vsel %vm1005, %v1701, 0.0
        %v4130 = vadd.f32 %v4128, %v4129
        %v4131 = vsel %vm1005, %v1702, 0.0
        %v4132 = vadd.f32 %v4130, %v4131
        %v4133 = vsel %vm1005, %v1703, 0.0
        %v4134 = vadd.f32 %v4132, %v4133
        %v4135 = vsel %vm1005, %v1704, 0.0
        %v4136 = vadd.f32 %v4134, %v4135
        %v4137 = vrot.slane %v4136, 4
        %v4138 = vadd.f32 %v4136, %v4137
        %v4139 = vrot.slane %v4138, 2
        %v4140 = vadd.f32 %v4138, %v4139
        %v4141 = vrot.slane %v4140, 1
        %v4142 = vadd.f32 %v4140, %v4141
        %v4143 = vsel %vm1005, %v1705, 0.0
        %v4144 = vsel %vm1005, %v1706, 0.0
        %v4145 = vadd.f32 %v4143, %v4144
        %v4146 = vsel %vm1005, %v1707, 0.0
        %v4147 = vadd.f32 %v4145, %v4146
        %v4148 = vsel %vm1005, %v1708, 0.0
        %v4149 = vadd.f32 %v4147, %v4148
        %v4150 = vsel %vm1005, %v1709, 0.0
        %v4151 = vadd.f32 %v4149, %v4150
        %v4152 = vsel %vm1005, %v1710, 0.0
        %v4153 = vadd.f32 %v4151, %v4152
        %v4154 = vsel %vm1005, %v1711, 0.0
        %v4155 = vadd.f32 %v4153, %v4154
        %v4156 = vsel %vm1005, %v1712, 0.0
        %v4157 = vadd.f32 %v4155, %v4156
        %v4158 = vrot.slane %v4157, 4
        %v4159 = vadd.f32 %v4157, %v4158
        %v4160 = vrot.slane %v4159, 2
        %v4161 = vadd.f32 %v4159, %v4160
        %v4162 = vrot.slane %v4161, 1
        %v4163 = vadd.f32 %v4161, %v4162
        %v4164 = vmul.f32 %v4142, %v4119
        %v4165 = vmul.f32 %v4163, %v4119
        %v4166 = vld [vmem:[%s4] sm:$0xf]
        %v4167 = vld [vmem:[%s5] sm:$0xf]
        %vm4170 = vcmask 1041409
        %v4171 = vsel %vm4170, %v4165, %v4164
        %v4172 = vsel %vm1005, %v4171, 0
        %vm4174 = vcmask 1043456
        %v4176 = vsel %vm4174, %v4167, 0
        %4178 = vmatprep.subr.mxu0 0.0
        %4179 = vmatpush1.msra.mxu0 0.0
        %4180 = vmatprep.subr.mxu0 0.0
        %4181 = vmatpush1.msra.mxu0 0.0
        %4182 = vmatprep.subr.mxu0 0.0
        %4183 = vmatpush1.msra.mxu0 0.0
        %4184 = vmatprep.subr.mxu0 0.0
        %4185 = vmatpush1.msra.mxu0 0.0
        %4186 = vmatprep.subr.mxu0 0.0
        %4187 = vmatpush1.msra.mxu0 0.0
        %4188 = vmatprep.subr.mxu0 0.0
        %4189 = vmatpush1.msra.mxu0 0.0
        %4190 = vmatprep.subr.mxu0 0.0
        %4191 = vmatpush1.msra.mxu0 0.0
        %4192 = vmatprep.subr.mxu0 0.0
        %4193 = vmatpush1.msra.mxu0 0.0
        %4194 = vmatprep.subr.mxu0 0.0
        %4195 = vmatpush1.msra.mxu0 0.0
        %4196 = vmatprep.subr.mxu0 0.0
        %4197 = vmatpush1.msra.mxu0 0.0
        %4198 = vmatprep.subr.mxu0 0.0
        %4199 = vmatpush1.msra.mxu0 0.0
        %4200 = vmatprep.subr.mxu0 0.0
        %4201 = vmatpush1.msra.mxu0 0.0
        %4202 = vmatprep.subr.mxu0 0.0
        %4203 = vmatpush1.msra.mxu0 0.0
        %4204 = vmatprep.subr.mxu0 0.0
        %4205 = vmatpush1.msra.mxu0 0.0
        %4206 = vmatprep.subr.mxu0 0.0
        %4207 = vmatpush1.msra.mxu0 0.0
        %4208 = vmatprep.subr.mxu0 0.0
        %4209 = vmatpush1.msra.mxu0 %v4176
        %4210 = vmatprep.subr.mxu0 0.0
        %4211 = vmatpush2.msra.mxu0 0.0
        %4212 = vmatprep.subr.mxu0 0.0
        %4213 = vmatpush2.msra.mxu0 0.0
        %4214 = vmatprep.subr.mxu0 0.0
        %4215 = vmatpush2.msra.mxu0 0.0
        %4216 = vmatprep.subr.mxu0 0.0
        %4217 = vmatpush2.msra.mxu0 0.0
        %4218 = vmatprep.subr.mxu0 0.0
        %4219 = vmatpush2.msra.mxu0 0.0
        %4220 = vmatprep.subr.mxu0 0.0
        %4221 = vmatpush2.msra.mxu0 0.0
        %4222 = vmatprep.subr.mxu0 0.0
        %4223 = vmatpush2.msra.mxu0 0.0
        %4224 = vmatprep.subr.mxu0 0.0
        %4225 = vmatpush2.msra.mxu0 0.0
        %4226 = vmatprep.subr.mxu0 0.0
        %4227 = vmatpush2.msra.mxu0 0.0
        %4228 = vmatprep.subr.mxu0 0.0
        %4229 = vmatpush2.msra.mxu0 0.0
        %4230 = vmatprep.subr.mxu0 0.0
        %4231 = vmatpush2.msra.mxu0 0.0
        %4232 = vmatprep.subr.mxu0 0.0
        %4233 = vmatpush2.msra.mxu0 0.0
        %4234 = vmatprep.subr.mxu0 0.0
        %4235 = vmatpush2.msra.mxu0 0.0
        %4236 = vmatprep.subr.mxu0 0.0
        %4237 = vmatpush2.msra.mxu0 0.0
        %4238 = vmatprep.subr.mxu0 0.0
        %4239 = vmatpush2.msra.mxu0 0.0
        %4240 = vmatprep.subr.mxu0 0.0
        %4241 = vmatpush2.msra.mxu0 0.0
        %4242 = vmatprep.mubr.f32.mxu0 0.0
        %4243 = vmatmul.mubr.f32.gmra.mxu0 %v4172
        %v4244 = vpop.f32.mrf.mxu0
        %v4245 = vadd.f32 0.0, %v4244
        %v4246 = vpop.f32.mrf.mxu0
        %4247 = vdwg.mxu0
        %v4250 = vsel %vm4170, %v4121, %v4120
        %v4251 = vsel %vm1005, %v4250, 0
        %v4254 = vsel %vm4174, %v4166, 0
        %4256 = vmatprep.subr.mxu0 0.0
        %4257 = vmatpush1.msra.mxu0 0.0
        %4258 = vmatprep.subr.mxu0 0.0
        %4259 = vmatpush1.msra.mxu0 0.0
        %4260 = vmatprep.subr.mxu0 0.0
        %4261 = vmatpush1.msra.mxu0 0.0
        %4262 = vmatprep.subr.mxu0 0.0
        %4263 = vmatpush1.msra.mxu0 0.0
        %4264 = vmatprep.subr.mxu0 0.0
        %4265 = vmatpush1.msra.mxu0 0.0
        %4266 = vmatprep.subr.mxu0 0.0
        %4267 = vmatpush1.msra.mxu0 0.0
        %4268 = vmatprep.subr.mxu0 0.0
        %4269 = vmatpush1.msra.mxu0 0.0
        %4270 = vmatprep.subr.mxu0 0.0
        %4271 = vmatpush1.msra.mxu0 0.0
        %4272 = vmatprep.subr.mxu0 0.0
        %4273 = vmatpush1.msra.mxu0 0.0
        %4274 = vmatprep.subr.mxu0 0.0
        %4275 = vmatpush1.msra.mxu0 0.0
        %4276 = vmatprep.subr.mxu0 0.0
        %4277 = vmatpush1.msra.mxu0 0.0
        %4278 = vmatprep.subr.mxu0 0.0
        %4279 = vmatpush1.msra.mxu0 0.0
        %4280 = vmatprep.subr.mxu0 0.0
        %4281 = vmatpush1.msra.mxu0 0.0
        %4282 = vmatprep.subr.mxu0 0.0
        %4283 = vmatpush1.msra.mxu0 0.0
        %4284 = vmatprep.subr.mxu0 0.0
        %4285 = vmatpush1.msra.mxu0 0.0
        %4286 = vmatprep.subr.mxu0 0.0
        %4287 = vmatpush1.msra.mxu0 %v4254
        %4288 = vmatprep.subr.mxu0 0.0
        %4289 = vmatpush2.msra.mxu0 0.0
        %4290 = vmatprep.subr.mxu0 0.0
        %4291 = vmatpush2.msra.mxu0 0.0
        %4292 = vmatprep.subr.mxu0 0.0
        %4293 = vmatpush2.msra.mxu0 0.0
        %4294 = vmatprep.subr.mxu0 0.0
        %4295 = vmatpush2.msra.mxu0 0.0
        %4296 = vmatprep.subr.mxu0 0.0
        %4297 = vmatpush2.msra.mxu0 0.0
        %4298 = vmatprep.subr.mxu0 0.0
        %4299 = vmatpush2.msra.mxu0 0.0
        %4300 = vmatprep.subr.mxu0 0.0
        %4301 = vmatpush2.msra.mxu0 0.0
        %4302 = vmatprep.subr.mxu0 0.0
        %4303 = vmatpush2.msra.mxu0 0.0
        %4304 = vmatprep.subr.mxu0 0.0
        %4305 = vmatpush2.msra.mxu0 0.0
        %4306 = vmatprep.subr.mxu0 0.0
        %4307 = vmatpush2.msra.mxu0 0.0
        %4308 = vmatprep.subr.mxu0 0.0
        %4309 = vmatpush2.msra.mxu0 0.0
        %4310 = vmatprep.subr.mxu0 0.0
        %4311 = vmatpush2.msra.mxu0 0.0
        %4312 = vmatprep.subr.mxu0 0.0
        %4313 = vmatpush2.msra.mxu0 0.0
        %4314 = vmatprep.subr.mxu0 0.0
        %4315 = vmatpush2.msra.mxu0 0.0
        %4316 = vmatprep.subr.mxu0 0.0
        %4317 = vmatpush2.msra.mxu0 0.0
        %4318 = vmatprep.subr.mxu0 0.0
        %4319 = vmatpush2.msra.mxu0 0.0
        %4320 = vmatprep.mubr.f32.mxu0 0.0
        %4321 = vmatmul.mubr.f32.gmra.mxu0 %v4251
        %v4322 = vpop.f32.mrf.mxu0
        %v4323 = vadd.f32 %v4245, %v4322
        %v4324 = vpop.f32.mrf.mxu0
        %4325 = vdwg.mxu0
        %v4326 = vld [vmem:[%s6] sm:$0x1]
        %v4328 = vlaneseq
        %v4329 = vshrl.u32 %v4328, 7
        %v4330 = vsub.s32 0, %v4329
        %v4331 = vrot.slane %v4326, %v4330
        %v4333 = vadd.f32 %v4323, %v4331
        %v4334 = vxor.u32 %v4333, 2147483648
        %v4335 = vmul.f32 %v4334, 1.442695
        %v4336 = vpow.pop %v4335
        %v4337 = vadd.f32 %v4336, 1.0
        %v4338 = vrcp.pop %v4337
        %v4339 = vmul.f32 1.0, %v4338
        %v4342 = vunpack.c.l.s4 1966171168
        %v4343 = vunpack.c.0.s8 %v4342
        %v4344 = vlaneseq
        %v4345 = vshrl.u32 %v4344, 7
        %v4346 = vsub.s32 %v4343, %v4345
        %v4347 = vrot.slane %v4339, %v4346
        %v4348 = vcombine.high %v4347, %v4347
        %v4350 = vunpack.c.l.s4 1966171168
        %v4351 = vunpack.c.0.s8 %v4350
        %v4352 = vlaneseq
        %v4353 = vshrl.u32 %v4352, 7
        %v4354 = vsub.s32 %v4351, %v4353
        %v4355 = vrot.slane %v4347, %v4354
        %v4357 = vunpack.c.l.s4 1966171168
        %v4358 = vunpack.c.0.s8 %v4357
        %v4359 = vlaneseq
        %v4360 = vshrl.u32 %v4359, 7
        %v4361 = vsub.s32 %v4358, %v4360
        %v4362 = vrot.slane %v4348, %v4361
        %v4363 = vlaneseq
        %v4364 = vshrl.u32 %v4363, 7
        %v4365 = vsub.s32 0, %v4364
        %v4366 = vrot.slane %v4355, %v4365
        %v4367 = vlaneseq
        %v4368 = vshrl.u32 %v4367, 7
        %v4369 = vsub.s32 0, %v4368
        %v4370 = vrot.slane %v4362, %v4369
        %v4373 = vmul.f32 %v4061, %v4366
        %v4374 = vmul.f32 %v4062, %v4366
        %v4375 = vmul.f32 %v4063, %v4366
        %v4376 = vmul.f32 %v4064, %v4366
        %v4377 = vmul.f32 %v4065, %v4366
        %v4378 = vmul.f32 %v4066, %v4366
        %v4379 = vmul.f32 %v4067, %v4366
        %v4380 = vmul.f32 %v4068, %v4366
        %v4381 = vmul.f32 %v4069, %v4370
        %v4382 = vmul.f32 %v4070, %v4370
        %v4383 = vmul.f32 %v4071, %v4370
        %v4384 = vmul.f32 %v4072, %v4370
        %v4385 = vmul.f32 %v4073, %v4370
        %v4386 = vmul.f32 %v4074, %v4370
        %v4387 = vmul.f32 %v4075, %v4370
        %v4388 = vmul.f32 %v4076, %v4370
        %v4389 = vxor.u32 %v4373, 2147483648
        %v4390 = vxor.u32 %v4374, 2147483648
        %v4391 = vxor.u32 %v4375, 2147483648
        %v4392 = vxor.u32 %v4376, 2147483648
        %v4393 = vxor.u32 %v4377, 2147483648
        %v4394 = vxor.u32 %v4378, 2147483648
        %v4395 = vxor.u32 %v4379, 2147483648
        %v4396 = vxor.u32 %v4380, 2147483648
        %v4397 = vxor.u32 %v4381, 2147483648
        %v4398 = vxor.u32 %v4382, 2147483648
        %v4399 = vxor.u32 %v4383, 2147483648
        %v4400 = vxor.u32 %v4384, 2147483648
        %v4401 = vxor.u32 %v4385, 2147483648
        %v4402 = vxor.u32 %v4386, 2147483648
        %v4403 = vxor.u32 %v4387, 2147483648
        %v4404 = vxor.u32 %v4388, 2147483648
        %v4405 = vmul.f32 %v4389, 1.442695
        %v4406 = vpow.pop %v4405
        %v4407 = vmul.f32 %v4390, 1.442695
        %v4408 = vpow.pop %v4407
        %v4409 = vmul.f32 %v4391, 1.442695
        %v4410 = vpow.pop %v4409
        %v4411 = vmul.f32 %v4392, 1.442695
        %v4412 = vpow.pop %v4411
        %v4413 = vmul.f32 %v4393, 1.442695
        %v4414 = vpow.pop %v4413
        %v4415 = vmul.f32 %v4394, 1.442695
        %v4416 = vpow.pop %v4415
        %v4417 = vmul.f32 %v4395, 1.442695
        %v4418 = vpow.pop %v4417
        %v4419 = vmul.f32 %v4396, 1.442695
        %v4420 = vpow.pop %v4419
        %v4421 = vmul.f32 %v4397, 1.442695
        %v4422 = vpow.pop %v4421
        %v4423 = vmul.f32 %v4398, 1.442695
        %v4424 = vpow.pop %v4423
        %v4425 = vmul.f32 %v4399, 1.442695
        %v4426 = vpow.pop %v4425
        %v4427 = vmul.f32 %v4400, 1.442695
        %v4428 = vpow.pop %v4427
        %v4429 = vmul.f32 %v4401, 1.442695
        %v4430 = vpow.pop %v4429
        %v4431 = vmul.f32 %v4402, 1.442695
        %v4432 = vpow.pop %v4431
        %v4433 = vmul.f32 %v4403, 1.442695
        %v4434 = vpow.pop %v4433
        %v4435 = vmul.f32 %v4404, 1.442695
        %v4436 = vpow.pop %v4435
        %v4437 = vadd.f32 %v4406, 1.0
        %v4438 = vadd.f32 %v4408, 1.0
        %v4439 = vadd.f32 %v4410, 1.0
        %v4440 = vadd.f32 %v4412, 1.0
        %v4441 = vadd.f32 %v4414, 1.0
        %v4442 = vadd.f32 %v4416, 1.0
        %v4443 = vadd.f32 %v4418, 1.0
        %v4444 = vadd.f32 %v4420, 1.0
        %v4445 = vadd.f32 %v4422, 1.0
        %v4446 = vadd.f32 %v4424, 1.0
        %v4447 = vadd.f32 %v4426, 1.0
        %v4448 = vadd.f32 %v4428, 1.0
        %v4449 = vadd.f32 %v4430, 1.0
        %v4450 = vadd.f32 %v4432, 1.0
        %v4451 = vadd.f32 %v4434, 1.0
        %v4452 = vadd.f32 %v4436, 1.0
        %v4453 = vrcp.pop %v4437
        %v4454 = vmul.f32 1.0, %v4453
        %v4455 = vrcp.pop %v4438
        %v4456 = vmul.f32 1.0, %v4455
        %v4457 = vrcp.pop %v4439
        %v4458 = vmul.f32 1.0, %v4457
        %v4459 = vrcp.pop %v4440
        %v4460 = vmul.f32 1.0, %v4459
        %v4461 = vrcp.pop %v4441
        %v4462 = vmul.f32 1.0, %v4461
        %v4463 = vrcp.pop %v4442
        %v4464 = vmul.f32 1.0, %v4463
        %v4465 = vrcp.pop %v4443
        %v4466 = vmul.f32 1.0, %v4465
        %v4467 = vrcp.pop %v4444
        %v4468 = vmul.f32 1.0, %v4467
        %v4469 = vrcp.pop %v4445
        %v4470 = vmul.f32 1.0, %v4469
        %v4471 = vrcp.pop %v4446
        %v4472 = vmul.f32 1.0, %v4471
        %v4473 = vrcp.pop %v4447
        %v4474 = vmul.f32 1.0, %v4473
        %v4475 = vrcp.pop %v4448
        %v4476 = vmul.f32 1.0, %v4475
        %v4477 = vrcp.pop %v4449
        %v4478 = vmul.f32 1.0, %v4477
        %v4479 = vrcp.pop %v4450
        %v4480 = vmul.f32 1.0, %v4479
        %v4481 = vrcp.pop %v4451
        %v4482 = vmul.f32 1.0, %v4481
        %v4483 = vrcp.pop %v4452
        %v4484 = vmul.f32 1.0, %v4483
        %v4485 = vmul.f32 %v4373, %v4454
        %v4486 = vmul.f32 %v4374, %v4456
        %v4487 = vmul.f32 %v4375, %v4458
        %v4488 = vmul.f32 %v4376, %v4460
        %v4489 = vmul.f32 %v4377, %v4462
        %v4490 = vmul.f32 %v4378, %v4464
        %v4491 = vmul.f32 %v4379, %v4466
        %v4492 = vmul.f32 %v4380, %v4468
        %v4493 = vmul.f32 %v4381, %v4470
        %v4494 = vmul.f32 %v4382, %v4472
        %v4495 = vmul.f32 %v4383, %v4474
        %v4496 = vmul.f32 %v4384, %v4476
        %v4497 = vmul.f32 %v4385, %v4478
        %v4498 = vmul.f32 %v4386, %v4480
        %v4499 = vmul.f32 %v4387, %v4482
        %v4500 = vmul.f32 %v4388, %v4484
        %v4501 = vcombine.high %v4485, 0.0
        %v4503 = vunpack.c.l.s4 1983009808
        %v4504 = vunpack.c.0.s8 %v4503
        %v4505 = vlaneseq
        %v4506 = vshrl.u32 %v4505, 7
        %v4507 = vsub.s32 %v4504, %v4506
        %v4508 = vrot.slane %v4485, %v4507
        %v4510 = vunpack.c.l.s4 1983009808
        %v4511 = vunpack.c.0.s8 %v4510
        %v4512 = vlaneseq
        %v4513 = vshrl.u32 %v4512, 7
        %v4514 = vsub.s32 %v4511, %v4513
        %v4515 = vrot.slane %v4501, %v4514
        %v4516 = vcombine.high %v4493, 0.0
        %v4518 = vunpack.c.l.s4 1983009808
        %v4519 = vunpack.c.0.s8 %v4518
        %v4520 = vlaneseq
        %v4521 = vshrl.u32 %v4520, 7
        %v4522 = vsub.s32 %v4519, %v4521
        %v4523 = vrot.slane %v4493, %v4522
        %v4525 = vunpack.c.l.s4 1983009808
        %v4526 = vunpack.c.0.s8 %v4525
        %v4527 = vlaneseq
        %v4528 = vshrl.u32 %v4527, 7
        %v4529 = vsub.s32 %v4526, %v4528
        %v4530 = vrot.slane %v4516, %v4529
        %v4531 = vcombine.low %v4508, %v4523
        %v4532 = vcombine.high %v4508, %v4523
        %v4534 = vunpack.c.l.s4 1934713408
        %v4535 = vunpack.c.0.s8 %v4534
        %v4536 = vlaneseq
        %v4537 = vshrl.u32 %v4536, 7
        %v4538 = vsub.s32 %v4535, %v4537
        %v4539 = vrot.slane %v4531, %v4538
        %v4541 = vunpack.c.l.s4 1934713408
        %v4542 = vunpack.c.0.s8 %v4541
        %v4543 = vlaneseq
        %v4544 = vshrl.u32 %v4543, 7
        %v4545 = vsub.s32 %v4542, %v4544
        %v4546 = vrot.slane %v4532, %v4545
        %v4547 = vcombine.low %v4515, %v4530
        %v4548 = vcombine.high %v4515, %v4530
        %v4550 = vunpack.c.l.s4 1934713408
        %v4551 = vunpack.c.0.s8 %v4550
        %v4552 = vlaneseq
        %v4553 = vshrl.u32 %v4552, 7
        %v4554 = vsub.s32 %v4551, %v4553
        %v4555 = vrot.slane %v4547, %v4554
        %v4557 = vunpack.c.l.s4 1934713408
        %v4558 = vunpack.c.0.s8 %v4557
        %v4559 = vlaneseq
        %v4560 = vshrl.u32 %v4559, 7
        %v4561 = vsub.s32 %v4558, %v4560
        %v4562 = vrot.slane %v4548, %v4561
        %v4563 = vcombine.high %v4539, 0.0
        %v4564 = vcombine.high %v4546, 0.0
        %v4565 = vcombine.high %v4555, 0.0
        %v4566 = vcombine.high %v4562, 0.0
        %v4567 = vcombine.high %v4486, 0.0
        %v4569 = vunpack.c.l.s4 1983009808
        %v4570 = vunpack.c.0.s8 %v4569
        %v4571 = vlaneseq
        %v4572 = vshrl.u32 %v4571, 7
        %v4573 = vsub.s32 %v4570, %v4572
        %v4574 = vrot.slane %v4486, %v4573
        %v4576 = vunpack.c.l.s4 1983009808
        %v4577 = vunpack.c.0.s8 %v4576
        %v4578 = vlaneseq
        %v4579 = vshrl.u32 %v4578, 7
        %v4580 = vsub.s32 %v4577, %v4579
        %v4581 = vrot.slane %v4567, %v4580
        %v4582 = vcombine.high %v4494, 0.0
        %v4584 = vunpack.c.l.s4 1983009808
        %v4585 = vunpack.c.0.s8 %v4584
        %v4586 = vlaneseq
        %v4587 = vshrl.u32 %v4586, 7
        %v4588 = vsub.s32 %v4585, %v4587
        %v4589 = vrot.slane %v4494, %v4588
        %v4591 = vunpack.c.l.s4 1983009808
        %v4592 = vunpack.c.0.s8 %v4591
        %v4593 = vlaneseq
        %v4594 = vshrl.u32 %v4593, 7
        %v4595 = vsub.s32 %v4592, %v4594
        %v4596 = vrot.slane %v4582, %v4595
        %v4597 = vcombine.low %v4574, %v4589
        %v4598 = vcombine.high %v4574, %v4589
        %v4600 = vunpack.c.l.s4 1934713408
        %v4601 = vunpack.c.0.s8 %v4600
        %v4602 = vlaneseq
        %v4603 = vshrl.u32 %v4602, 7
        %v4604 = vsub.s32 %v4601, %v4603
        %v4605 = vrot.slane %v4597, %v4604
        %v4607 = vunpack.c.l.s4 1934713408
        %v4608 = vunpack.c.0.s8 %v4607
        %v4609 = vlaneseq
        %v4610 = vshrl.u32 %v4609, 7
        %v4611 = vsub.s32 %v4608, %v4610
        %v4612 = vrot.slane %v4598, %v4611
        %v4613 = vcombine.low %v4581, %v4596
        %v4614 = vcombine.high %v4581, %v4596
        %v4616 = vunpack.c.l.s4 1934713408
        %v4617 = vunpack.c.0.s8 %v4616
        %v4618 = vlaneseq
        %v4619 = vshrl.u32 %v4618, 7
        %v4620 = vsub.s32 %v4617, %v4619
        %v4621 = vrot.slane %v4613, %v4620
        %v4623 = vunpack.c.l.s4 1934713408
        %v4624 = vunpack.c.0.s8 %v4623
        %v4625 = vlaneseq
        %v4626 = vshrl.u32 %v4625, 7
        %v4627 = vsub.s32 %v4624, %v4626
        %v4628 = vrot.slane %v4614, %v4627
        %v4629 = vcombine.high %v4605, 0.0
        %v4630 = vcombine.high %v4612, 0.0
        %v4631 = vcombine.high %v4621, 0.0
        %v4632 = vcombine.high %v4628, 0.0
        %v4633 = vcombine.high %v4487, 0.0
        %v4635 = vunpack.c.l.s4 1983009808
        %v4636 = vunpack.c.0.s8 %v4635
        %v4637 = vlaneseq
        %v4638 = vshrl.u32 %v4637, 7
        %v4639 = vsub.s32 %v4636, %v4638
        %v4640 = vrot.slane %v4487, %v4639
        %v4642 = vunpack.c.l.s4 1983009808
        %v4643 = vunpack.c.0.s8 %v4642
        %v4644 = vlaneseq
        %v4645 = vshrl.u32 %v4644, 7
        %v4646 = vsub.s32 %v4643, %v4645
        %v4647 = vrot.slane %v4633, %v4646
        %v4648 = vcombine.high %v4495, 0.0
        %v4650 = vunpack.c.l.s4 1983009808
        %v4651 = vunpack.c.0.s8 %v4650
        %v4652 = vlaneseq
        %v4653 = vshrl.u32 %v4652, 7
        %v4654 = vsub.s32 %v4651, %v4653
        %v4655 = vrot.slane %v4495, %v4654
        %v4657 = vunpack.c.l.s4 1983009808
        %v4658 = vunpack.c.0.s8 %v4657
        %v4659 = vlaneseq
        %v4660 = vshrl.u32 %v4659, 7
        %v4661 = vsub.s32 %v4658, %v4660
        %v4662 = vrot.slane %v4648, %v4661
        %v4663 = vcombine.low %v4640, %v4655
        %v4664 = vcombine.high %v4640, %v4655
        %v4666 = vunpack.c.l.s4 1934713408
        %v4667 = vunpack.c.0.s8 %v4666
        %v4668 = vlaneseq
        %v4669 = vshrl.u32 %v4668, 7
        %v4670 = vsub.s32 %v4667, %v4669
        %v4671 = vrot.slane %v4663, %v4670
        %v4673 = vunpack.c.l.s4 1934713408
        %v4674 = vunpack.c.0.s8 %v4673
        %v4675 = vlaneseq
        %v4676 = vshrl.u32 %v4675, 7
        %v4677 = vsub.s32 %v4674, %v4676
        %v4678 = vrot.slane %v4664, %v4677
        %v4679 = vcombine.low %v4647, %v4662
        %v4680 = vcombine.high %v4647, %v4662
        %v4682 = vunpack.c.l.s4 1934713408
        %v4683 = vunpack.c.0.s8 %v4682
        %v4684 = vlaneseq
        %v4685 = vshrl.u32 %v4684, 7
        %v4686 = vsub.s32 %v4683, %v4685
        %v4687 = vrot.slane %v4679, %v4686
        %v4689 = vunpack.c.l.s4 1934713408
        %v4690 = vunpack.c.0.s8 %v4689
        %v4691 = vlaneseq
        %v4692 = vshrl.u32 %v4691, 7
        %v4693 = vsub.s32 %v4690, %v4692
        %v4694 = vrot.slane %v4680, %v4693
        %v4695 = vcombine.high %v4671, 0.0
        %v4696 = vcombine.high %v4678, 0.0
        %v4697 = vcombine.high %v4687, 0.0
        %v4698 = vcombine.high %v4694, 0.0
        %v4699 = vcombine.high %v4488, 0.0
        %v4701 = vunpack.c.l.s4 1983009808
        %v4702 = vunpack.c.0.s8 %v4701
        %v4703 = vlaneseq
        %v4704 = vshrl.u32 %v4703, 7
        %v4705 = vsub.s32 %v4702, %v4704
        %v4706 = vrot.slane %v4488, %v4705
        %v4708 = vunpack.c.l.s4 1983009808
        %v4709 = vunpack.c.0.s8 %v4708
        %v4710 = vlaneseq
        %v4711 = vshrl.u32 %v4710, 7
        %v4712 = vsub.s32 %v4709, %v4711
        %v4713 = vrot.slane %v4699, %v4712
        %v4714 = vcombine.high %v4496, 0.0
        %v4716 = vunpack.c.l.s4 1983009808
        %v4717 = vunpack.c.0.s8 %v4716
        %v4718 = vlaneseq
        %v4719 = vshrl.u32 %v4718, 7
        %v4720 = vsub.s32 %v4717, %v4719
        %v4721 = vrot.slane %v4496, %v4720
        %v4723 = vunpack.c.l.s4 1983009808
        %v4724 = vunpack.c.0.s8 %v4723
        %v4725 = vlaneseq
        %v4726 = vshrl.u32 %v4725, 7
        %v4727 = vsub.s32 %v4724, %v4726
        %v4728 = vrot.slane %v4714, %v4727
        %v4729 = vcombine.low %v4706, %v4721
        %v4730 = vcombine.high %v4706, %v4721
        %v4732 = vunpack.c.l.s4 1934713408
        %v4733 = vunpack.c.0.s8 %v4732
        %v4734 = vlaneseq
        %v4735 = vshrl.u32 %v4734, 7
        %v4736 = vsub.s32 %v4733, %v4735
        %v4737 = vrot.slane %v4729, %v4736
        %v4739 = vunpack.c.l.s4 1934713408
        %v4740 = vunpack.c.0.s8 %v4739
        %v4741 = vlaneseq
        %v4742 = vshrl.u32 %v4741, 7
        %v4743 = vsub.s32 %v4740, %v4742
        %v4744 = vrot.slane %v4730, %v4743
        %v4745 = vcombine.low %v4713, %v4728
        %v4746 = vcombine.high %v4713, %v4728
        %v4748 = vunpack.c.l.s4 1934713408
        %v4749 = vunpack.c.0.s8 %v4748
        %v4750 = vlaneseq
        %v4751 = vshrl.u32 %v4750, 7
        %v4752 = vsub.s32 %v4749, %v4751
        %v4753 = vrot.slane %v4745, %v4752
        %v4755 = vunpack.c.l.s4 1934713408
        %v4756 = vunpack.c.0.s8 %v4755
        %v4757 = vlaneseq
        %v4758 = vshrl.u32 %v4757, 7
        %v4759 = vsub.s32 %v4756, %v4758
        %v4760 = vrot.slane %v4746, %v4759
        %v4761 = vcombine.high %v4737, 0.0
        %v4762 = vcombine.high %v4744, 0.0
        %v4763 = vcombine.high %v4753, 0.0
        %v4764 = vcombine.high %v4760, 0.0
        %v4765 = vcombine.high %v4489, 0.0
        %v4767 = vunpack.c.l.s4 1983009808
        %v4768 = vunpack.c.0.s8 %v4767
        %v4769 = vlaneseq
        %v4770 = vshrl.u32 %v4769, 7
        %v4771 = vsub.s32 %v4768, %v4770
        %v4772 = vrot.slane %v4489, %v4771
        %v4774 = vunpack.c.l.s4 1983009808
        %v4775 = vunpack.c.0.s8 %v4774
        %v4776 = vlaneseq
        %v4777 = vshrl.u32 %v4776, 7
        %v4778 = vsub.s32 %v4775, %v4777
        %v4779 = vrot.slane %v4765, %v4778
        %v4780 = vcombine.high %v4497, 0.0
        %v4782 = vunpack.c.l.s4 1983009808
        %v4783 = vunpack.c.0.s8 %v4782
        %v4784 = vlaneseq
        %v4785 = vshrl.u32 %v4784, 7
        %v4786 = vsub.s32 %v4783, %v4785
        %v4787 = vrot.slane %v4497, %v4786
        %v4789 = vunpack.c.l.s4 1983009808
        %v4790 = vunpack.c.0.s8 %v4789
        %v4791 = vlaneseq
        %v4792 = vshrl.u32 %v4791, 7
        %v4793 = vsub.s32 %v4790, %v4792
        %v4794 = vrot.slane %v4780, %v4793
        %v4795 = vcombine.low %v4772, %v4787
        %v4796 = vcombine.high %v4772, %v4787
        %v4798 = vunpack.c.l.s4 1934713408
        %v4799 = vunpack.c.0.s8 %v4798
        %v4800 = vlaneseq
        %v4801 = vshrl.u32 %v4800, 7
        %v4802 = vsub.s32 %v4799, %v4801
        %v4803 = vrot.slane %v4795, %v4802
        %v4805 = vunpack.c.l.s4 1934713408
        %v4806 = vunpack.c.0.s8 %v4805
        %v4807 = vlaneseq
        %v4808 = vshrl.u32 %v4807, 7
        %v4809 = vsub.s32 %v4806, %v4808
        %v4810 = vrot.slane %v4796, %v4809
        %v4811 = vcombine.low %v4779, %v4794
        %v4812 = vcombine.high %v4779, %v4794
        %v4814 = vunpack.c.l.s4 1934713408
        %v4815 = vunpack.c.0.s8 %v4814
        %v4816 = vlaneseq
        %v4817 = vshrl.u32 %v4816, 7
        %v4818 = vsub.s32 %v4815, %v4817
        %v4819 = vrot.slane %v4811, %v4818
        %v4821 = vunpack.c.l.s4 1934713408
        %v4822 = vunpack.c.0.s8 %v4821
        %v4823 = vlaneseq
        %v4824 = vshrl.u32 %v4823, 7
        %v4825 = vsub.s32 %v4822, %v4824
        %v4826 = vrot.slane %v4812, %v4825
        %v4827 = vcombine.high %v4803, 0.0
        %v4828 = vcombine.high %v4810, 0.0
        %v4829 = vcombine.high %v4819, 0.0
        %v4830 = vcombine.high %v4826, 0.0
        %v4831 = vcombine.high %v4490, 0.0
        %v4833 = vunpack.c.l.s4 1983009808
        %v4834 = vunpack.c.0.s8 %v4833
        %v4835 = vlaneseq
        %v4836 = vshrl.u32 %v4835, 7
        %v4837 = vsub.s32 %v4834, %v4836
        %v4838 = vrot.slane %v4490, %v4837
        %v4840 = vunpack.c.l.s4 1983009808
        %v4841 = vunpack.c.0.s8 %v4840
        %v4842 = vlaneseq
        %v4843 = vshrl.u32 %v4842, 7
        %v4844 = vsub.s32 %v4841, %v4843
        %v4845 = vrot.slane %v4831, %v4844
        %v4846 = vcombine.high %v4498, 0.0
        %v4848 = vunpack.c.l.s4 1983009808
        %v4849 = vunpack.c.0.s8 %v4848
        %v4850 = vlaneseq
        %v4851 = vshrl.u32 %v4850, 7
        %v4852 = vsub.s32 %v4849, %v4851
        %v4853 = vrot.slane %v4498, %v4852
        %v4855 = vunpack.c.l.s4 1983009808
        %v4856 = vunpack.c.0.s8 %v4855
        %v4857 = vlaneseq
        %v4858 = vshrl.u32 %v4857, 7
        %v4859 = vsub.s32 %v4856, %v4858
        %v4860 = vrot.slane %v4846, %v4859
        %v4861 = vcombine.low %v4838, %v4853
        %v4862 = vcombine.high %v4838, %v4853
        %v4864 = vunpack.c.l.s4 1934713408
        %v4865 = vunpack.c.0.s8 %v4864
        %v4866 = vlaneseq
        %v4867 = vshrl.u32 %v4866, 7
        %v4868 = vsub.s32 %v4865, %v4867
        %v4869 = vrot.slane %v4861, %v4868
        %v4871 = vunpack.c.l.s4 1934713408
        %v4872 = vunpack.c.0.s8 %v4871
        %v4873 = vlaneseq
        %v4874 = vshrl.u32 %v4873, 7
        %v4875 = vsub.s32 %v4872, %v4874
        %v4876 = vrot.slane %v4862, %v4875
        %v4877 = vcombine.low %v4845, %v4860
        %v4878 = vcombine.high %v4845, %v4860
        %v4880 = vunpack.c.l.s4 1934713408
        %v4881 = vunpack.c.0.s8 %v4880
        %v4882 = vlaneseq
        %v4883 = vshrl.u32 %v4882, 7
        %v4884 = vsub.s32 %v4881, %v4883
        %v4885 = vrot.slane %v4877, %v4884
        %v4887 = vunpack.c.l.s4 1934713408
        %v4888 = vunpack.c.0.s8 %v4887
        %v4889 = vlaneseq
        %v4890 = vshrl.u32 %v4889, 7
        %v4891 = vsub.s32 %v4888, %v4890
        %v4892 = vrot.slane %v4878, %v4891
        %v4893 = vcombine.high %v4869, 0.0
        %v4894 = vcombine.high %v4876, 0.0
        %v4895 = vcombine.high %v4885, 0.0
        %v4896 = vcombine.high %v4892, 0.0
        %v4897 = vcombine.high %v4491, 0.0
        %v4899 = vunpack.c.l.s4 1983009808
        %v4900 = vunpack.c.0.s8 %v4899
        %v4901 = vlaneseq
        %v4902 = vshrl.u32 %v4901, 7
        %v4903 = vsub.s32 %v4900, %v4902
        %v4904 = vrot.slane %v4491, %v4903
        %v4906 = vunpack.c.l.s4 1983009808
        %v4907 = vunpack.c.0.s8 %v4906
        %v4908 = vlaneseq
        %v4909 = vshrl.u32 %v4908, 7
        %v4910 = vsub.s32 %v4907, %v4909
        %v4911 = vrot.slane %v4897, %v4910
        %v4912 = vcombine.high %v4499, 0.0
        %v4914 = vunpack.c.l.s4 1983009808
        %v4915 = vunpack.c.0.s8 %v4914
        %v4916 = vlaneseq
        %v4917 = vshrl.u32 %v4916, 7
        %v4918 = vsub.s32 %v4915, %v4917
        %v4919 = vrot.slane %v4499, %v4918
        %v4921 = vunpack.c.l.s4 1983009808
        %v4922 = vunpack.c.0.s8 %v4921
        %v4923 = vlaneseq
        %v4924 = vshrl.u32 %v4923, 7
        %v4925 = vsub.s32 %v4922, %v4924
        %v4926 = vrot.slane %v4912, %v4925
        %v4927 = vcombine.low %v4904, %v4919
        %v4928 = vcombine.high %v4904, %v4919
        %v4930 = vunpack.c.l.s4 1934713408
        %v4931 = vunpack.c.0.s8 %v4930
        %v4932 = vlaneseq
        %v4933 = vshrl.u32 %v4932, 7
        %v4934 = vsub.s32 %v4931, %v4933
        %v4935 = vrot.slane %v4927, %v4934
        %v4937 = vunpack.c.l.s4 1934713408
        %v4938 = vunpack.c.0.s8 %v4937
        %v4939 = vlaneseq
        %v4940 = vshrl.u32 %v4939, 7
        %v4941 = vsub.s32 %v4938, %v4940
        %v4942 = vrot.slane %v4928, %v4941
        %v4943 = vcombine.low %v4911, %v4926
        %v4944 = vcombine.high %v4911, %v4926
        %v4946 = vunpack.c.l.s4 1934713408
        %v4947 = vunpack.c.0.s8 %v4946
        %v4948 = vlaneseq
        %v4949 = vshrl.u32 %v4948, 7
        %v4950 = vsub.s32 %v4947, %v4949
        %v4951 = vrot.slane %v4943, %v4950
        %v4953 = vunpack.c.l.s4 1934713408
        %v4954 = vunpack.c.0.s8 %v4953
        %v4955 = vlaneseq
        %v4956 = vshrl.u32 %v4955, 7
        %v4957 = vsub.s32 %v4954, %v4956
        %v4958 = vrot.slane %v4944, %v4957
        %v4959 = vcombine.high %v4935, 0.0
        %v4960 = vcombine.high %v4942, 0.0
        %v4961 = vcombine.high %v4951, 0.0
        %v4962 = vcombine.high %v4958, 0.0
        %v4963 = vcombine.high %v4492, 0.0
        %v4965 = vunpack.c.l.s4 1983009808
        %v4966 = vunpack.c.0.s8 %v4965
        %v4967 = vlaneseq
        %v4968 = vshrl.u32 %v4967, 7
        %v4969 = vsub.s32 %v4966, %v4968
        %v4970 = vrot.slane %v4492, %v4969
        %v4972 = vunpack.c.l.s4 1983009808
        %v4973 = vunpack.c.0.s8 %v4972
        %v4974 = vlaneseq
        %v4975 = vshrl.u32 %v4974, 7
        %v4976 = vsub.s32 %v4973, %v4975
        %v4977 = vrot.slane %v4963, %v4976
        %v4978 = vcombine.high %v4500, 0.0
        %v4980 = vunpack.c.l.s4 1983009808
        %v4981 = vunpack.c.0.s8 %v4980
        %v4982 = vlaneseq
        %v4983 = vshrl.u32 %v4982, 7
        %v4984 = vsub.s32 %v4981, %v4983
        %v4985 = vrot.slane %v4500, %v4984
        %v4987 = vunpack.c.l.s4 1983009808
        %v4988 = vunpack.c.0.s8 %v4987
        %v4989 = vlaneseq
        %v4990 = vshrl.u32 %v4989, 7
        %v4991 = vsub.s32 %v4988, %v4990
        %v4992 = vrot.slane %v4978, %v4991
        %v4993 = vcombine.low %v4970, %v4985
        %v4994 = vcombine.high %v4970, %v4985
        %v4996 = vunpack.c.l.s4 1934713408
        %v4997 = vunpack.c.0.s8 %v4996
        %v4998 = vlaneseq
        %v4999 = vshrl.u32 %v4998, 7
        %v5000 = vsub.s32 %v4997, %v4999
        %v5001 = vrot.slane %v4993, %v5000
        %v5003 = vunpack.c.l.s4 1934713408
        %v5004 = vunpack.c.0.s8 %v5003
        %v5005 = vlaneseq
        %v5006 = vshrl.u32 %v5005, 7
        %v5007 = vsub.s32 %v5004, %v5006
        %v5008 = vrot.slane %v4994, %v5007
        %v5009 = vcombine.low %v4977, %v4992
        %v5010 = vcombine.high %v4977, %v4992
        %v5012 = vunpack.c.l.s4 1934713408
        %v5013 = vunpack.c.0.s8 %v5012
        %v5014 = vlaneseq
        %v5015 = vshrl.u32 %v5014, 7
        %v5016 = vsub.s32 %v5013, %v5015
        %v5017 = vrot.slane %v5009, %v5016
        %v5019 = vunpack.c.l.s4 1934713408
        %v5020 = vunpack.c.0.s8 %v5019
        %v5021 = vlaneseq
        %v5022 = vshrl.u32 %v5021, 7
        %v5023 = vsub.s32 %v5020, %v5022
        %v5024 = vrot.slane %v5010, %v5023
        %v5025 = vcombine.high %v5001, 0.0
        %v5026 = vcombine.high %v5008, 0.0
        %v5027 = vcombine.high %v5017, 0.0
        %v5028 = vcombine.high %v5024, 0.0
        %5030 = vrot.lane.b32.xlu0 %v4563, 8
        %v5031 = vpop.permute.xlu0 %5030
        %5034 = vrot.lane.b32.xlu0 %v4546, 16
        %v5035 = vpop.permute.xlu0 %5034
        %5038 = vrot.lane.b32.xlu0 %v4564, 24
        %v5039 = vpop.permute.xlu0 %5038
        %5042 = vrot.lane.b32.xlu0 %v4555, 32
        %v5043 = vpop.permute.xlu0 %5042
        %5046 = vrot.lane.b32.xlu0 %v4565, 40
        %v5047 = vpop.permute.xlu0 %5046
        %5050 = vrot.lane.b32.xlu0 %v4562, 48
        %v5051 = vpop.permute.xlu0 %5050
        %5054 = vrot.lane.b32.xlu0 %v4566, 56
        %v5055 = vpop.permute.xlu0 %5054
        %5058 = vrot.lane.b32.xlu0 %v4605, 64
        %v5059 = vpop.permute.xlu0 %5058
        %5062 = vrot.lane.b32.xlu0 %v4629, 72
        %v5063 = vpop.permute.xlu0 %5062
        %5066 = vrot.lane.b32.xlu0 %v4612, 80
        %v5067 = vpop.permute.xlu0 %5066
        %5070 = vrot.lane.b32.xlu0 %v4630, 88
        %v5071 = vpop.permute.xlu0 %5070
        %5074 = vrot.lane.b32.xlu0 %v4621, 96
        %v5075 = vpop.permute.xlu0 %5074
        %5078 = vrot.lane.b32.xlu0 %v4631, 104
        %v5079 = vpop.permute.xlu0 %5078
        %5082 = vrot.lane.b32.xlu0 %v4628, 112
        %v5083 = vpop.permute.xlu0 %5082
        %5086 = vrot.lane.b32.xlu0 %v4632, 120
        %v5087 = vpop.permute.xlu0 %5086
        %5090 = vrot.lane.b32.xlu0 %v4695, 8
        %v5091 = vpop.permute.xlu0 %5090
        %5094 = vrot.lane.b32.xlu0 %v4678, 16
        %v5095 = vpop.permute.xlu0 %5094
        %5098 = vrot.lane.b32.xlu0 %v4696, 24
        %v5099 = vpop.permute.xlu0 %5098
        %5102 = vrot.lane.b32.xlu0 %v4687, 32
        %v5103 = vpop.permute.xlu0 %5102
        %5106 = vrot.lane.b32.xlu0 %v4697, 40
        %v5107 = vpop.permute.xlu0 %5106
        %5110 = vrot.lane.b32.xlu0 %v4694, 48
        %v5111 = vpop.permute.xlu0 %5110
        %5114 = vrot.lane.b32.xlu0 %v4698, 56
        %v5115 = vpop.permute.xlu0 %5114
        %5118 = vrot.lane.b32.xlu0 %v4737, 64
        %v5119 = vpop.permute.xlu0 %5118
        %5122 = vrot.lane.b32.xlu0 %v4761, 72
        %v5123 = vpop.permute.xlu0 %5122
        %5126 = vrot.lane.b32.xlu0 %v4744, 80
        %v5127 = vpop.permute.xlu0 %5126
        %5130 = vrot.lane.b32.xlu0 %v4762, 88
        %v5131 = vpop.permute.xlu0 %5130
        %5134 = vrot.lane.b32.xlu0 %v4753, 96
        %v5135 = vpop.permute.xlu0 %5134
        %5138 = vrot.lane.b32.xlu0 %v4763, 104
        %v5139 = vpop.permute.xlu0 %5138
        %5142 = vrot.lane.b32.xlu0 %v4760, 112
        %v5143 = vpop.permute.xlu0 %5142
        %5146 = vrot.lane.b32.xlu0 %v4764, 120
        %v5147 = vpop.permute.xlu0 %5146
        %5150 = vrot.lane.b32.xlu0 %v4827, 8
        %v5151 = vpop.permute.xlu0 %5150
        %5154 = vrot.lane.b32.xlu0 %v4810, 16
        %v5155 = vpop.permute.xlu0 %5154
        %5158 = vrot.lane.b32.xlu0 %v4828, 24
        %v5159 = vpop.permute.xlu0 %5158
        %5162 = vrot.lane.b32.xlu0 %v4819, 32
        %v5163 = vpop.permute.xlu0 %5162
        %5166 = vrot.lane.b32.xlu0 %v4829, 40
        %v5167 = vpop.permute.xlu0 %5166
        %5170 = vrot.lane.b32.xlu0 %v4826, 48
        %v5171 = vpop.permute.xlu0 %5170
        %5174 = vrot.lane.b32.xlu0 %v4830, 56
        %v5175 = vpop.permute.xlu0 %5174
        %5178 = vrot.lane.b32.xlu0 %v4869, 64
        %v5179 = vpop.permute.xlu0 %5178
        %5182 = vrot.lane.b32.xlu0 %v4893, 72
        %v5183 = vpop.permute.xlu0 %5182
        %5186 = vrot.lane.b32.xlu0 %v4876, 80
        %v5187 = vpop.permute.xlu0 %5186
        %5190 = vrot.lane.b32.xlu0 %v4894, 88
        %v5191 = vpop.permute.xlu0 %5190
        %5194 = vrot.lane.b32.xlu0 %v4885, 96
        %v5195 = vpop.permute.xlu0 %5194
        %5198 = vrot.lane.b32.xlu0 %v4895, 104
        %v5199 = vpop.permute.xlu0 %5198
        %5202 = vrot.lane.b32.xlu0 %v4892, 112
        %v5203 = vpop.permute.xlu0 %5202
        %5206 = vrot.lane.b32.xlu0 %v4896, 120
        %v5207 = vpop.permute.xlu0 %5206
        %5210 = vrot.lane.b32.xlu0 %v4959, 8
        %v5211 = vpop.permute.xlu0 %5210
        %5214 = vrot.lane.b32.xlu0 %v4942, 16
        %v5215 = vpop.permute.xlu0 %5214
        %5218 = vrot.lane.b32.xlu0 %v4960, 24
        %v5219 = vpop.permute.xlu0 %5218
        %5222 = vrot.lane.b32.xlu0 %v4951, 32
        %v5223 = vpop.permute.xlu0 %5222
        %5226 = vrot.lane.b32.xlu0 %v4961, 40
        %v5227 = vpop.permute.xlu0 %5226
        %5230 = vrot.lane.b32.xlu0 %v4958, 48
        %v5231 = vpop.permute.xlu0 %5230
        %5234 = vrot.lane.b32.xlu0 %v4962, 56
        %v5235 = vpop.permute.xlu0 %5234
        %5238 = vrot.lane.b32.xlu0 %v5001, 64
        %v5239 = vpop.permute.xlu0 %5238
        %5242 = vrot.lane.b32.xlu0 %v5025, 72
        %v5243 = vpop.permute.xlu0 %5242
        %5246 = vrot.lane.b32.xlu0 %v5008, 80
        %v5247 = vpop.permute.xlu0 %5246
        %5250 = vrot.lane.b32.xlu0 %v5026, 88
        %v5251 = vpop.permute.xlu0 %5250
        %5254 = vrot.lane.b32.xlu0 %v5017, 96
        %v5255 = vpop.permute.xlu0 %5254
        %5258 = vrot.lane.b32.xlu0 %v5027, 104
        %v5259 = vpop.permute.xlu0 %5258
        %5262 = vrot.lane.b32.xlu0 %v5024, 112
        %v5263 = vpop.permute.xlu0 %5262
        %5266 = vrot.lane.b32.xlu0 %v5028, 120
        %v5267 = vpop.permute.xlu0 %5266
        %v5269 = vsel %vm3112, %v4539, %v5031
        %v5270 = vsel %vm3146, %v5269, %v5035
        %v5271 = vsel %vm3180, %v5270, %v5039
        %v5272 = vsel %vm3214, %v5271, %v5043
        %v5273 = vsel %vm3248, %v5272, %v5047
        %v5274 = vsel %vm3282, %v5273, %v5051
        %v5275 = vsel %vm3316, %v5274, %v5055
        %v5276 = vsel %vm3832, %v5275, %v5059
        %vm5277 = vcmask 588800
        %v5278 = vsel %vm5277, %v5276, %v5063
        %v5279 = vsel %vm3859, %v5278, %v5067
        %vm5280 = vcmask 719872
        %v5281 = vsel %vm5280, %v5279, %v5071
        %vm5282 = vcmask 785408
        %v5283 = vsel %vm5282, %v5281, %v5075
        %vm5284 = vcmask 850944
        %v5285 = vsel %vm5284, %v5283, %v5079
        %vm5286 = vcmask 916480
        %v5287 = vsel %vm5286, %v5285, %v5083
        %vm5288 = vcmask 982016
        %v5289 = vsel %vm5288, %v5287, %v5087
        %v5290 = vsel %vm3112, %v4671, %v5091
        %v5291 = vsel %vm3146, %v5290, %v5095
        %v5292 = vsel %vm3180, %v5291, %v5099
        %v5293 = vsel %vm3214, %v5292, %v5103
        %v5294 = vsel %vm3248, %v5293, %v5107
        %v5295 = vsel %vm3282, %v5294, %v5111
        %v5296 = vsel %vm3316, %v5295, %v5115
        %v5297 = vsel %vm3832, %v5296, %v5119
        %v5298 = vsel %vm5277, %v5297, %v5123
        %v5299 = vsel %vm3859, %v5298, %v5127
        %v5300 = vsel %vm5280, %v5299, %v5131
        %v5301 = vsel %vm5282, %v5300, %v5135
        %v5302 = vsel %vm5284, %v5301, %v5139
        %v5303 = vsel %vm5286, %v5302, %v5143
        %v5304 = vsel %vm5288, %v5303, %v5147
        %v5305 = vsel %vm3112, %v4803, %v5151
        %v5306 = vsel %vm3146, %v5305, %v5155
        %v5307 = vsel %vm3180, %v5306, %v5159
        %v5308 = vsel %vm3214, %v5307, %v5163
        %v5309 = vsel %vm3248, %v5308, %v5167
        %v5310 = vsel %vm3282, %v5309, %v5171
        %v5311 = vsel %vm3316, %v5310, %v5175
        %v5312 = vsel %vm3832, %v5311, %v5179
        %v5313 = vsel %vm5277, %v5312, %v5183
        %v5314 = vsel %vm3859, %v5313, %v5187
        %v5315 = vsel %vm5280, %v5314, %v5191
        %v5316 = vsel %vm5282, %v5315, %v5195
        %v5317 = vsel %vm5284, %v5316, %v5199
        %v5318 = vsel %vm5286, %v5317, %v5203
        %v5319 = vsel %vm5288, %v5318, %v5207
        %v5320 = vsel %vm3112, %v4935, %v5211
        %v5321 = vsel %vm3146, %v5320, %v5215
        %v5322 = vsel %vm3180, %v5321, %v5219
        %v5323 = vsel %vm3214, %v5322, %v5223
        %v5324 = vsel %vm3248, %v5323, %v5227
        %v5325 = vsel %vm3282, %v5324, %v5231
        %v5326 = vsel %vm3316, %v5325, %v5235
        %v5327 = vsel %vm3832, %v5326, %v5239
        %v5328 = vsel %vm5277, %v5327, %v5243
        %v5329 = vsel %vm3859, %v5328, %v5247
        %v5330 = vsel %vm5280, %v5329, %v5251
        %v5331 = vsel %vm5282, %v5330, %v5255
        %v5332 = vsel %vm5284, %v5331, %v5259
        %v5333 = vsel %vm5286, %v5332, %v5263
        %v5334 = vsel %vm5288, %v5333, %v5267
        %v5339 = vcombine.low %v5289, %v5304
        %v5340 = vcombine.low %v5319, %v5334
        %v5342 = vunpack.c.l.s4 1983009808
        %v5343 = vunpack.c.0.s8 %v5342
        %v5344 = vlaneseq
        %v5345 = vshrl.u32 %v5344, 7
        %v5346 = vsub.s32 %v5343, %v5345
        %v5347 = vrot.slane %v5339, %v5346
        %v5349 = vunpack.c.l.s4 1983009808
        %v5350 = vunpack.c.0.s8 %v5349
        %v5351 = vlaneseq
        %v5352 = vshrl.u32 %v5351, 7
        %v5353 = vsub.s32 %v5350, %v5352
        %v5354 = vrot.slane %v5340, %v5353
        %v5355 = vcombine.low %v5347, %v5354
        %5357 = vst [vmem:[%s874] sm:$0xff] %v5355
        %s5358 = sand.u32 %s186, 1
        %s5359 = scalar_lea.sflag [#allocation7], %s5358
        %s5360 = sand.u32 %s186, 1
        %s5361 = smul.addr %s5360, 8
        %s5362 = scalar_lea.vmem [#allocation6], %s5361
        // Predicated region
        $region125: #{tpu_custom_call.1} parent=115 // pred_check
          %p5363 = pneg %p196
        $region126: #{tpu_custom_call.1} parent=115 // pred_check_branch
          %5365 = sbr.rel (%p5363) target = $region128
        $region127: #{tpu_custom_call.1} parent=115 // pred_region
          %s5367 = ssub.s32 128, 128
          %5368 = vsyncadd %s5359, %s5367
          %s5369 = smul.addr %s21, 4
          %s5370 = smul.addr %s5369, 32
          %s5371 = scalar_lea.hbm %s7, %s5370
          %s5373 = sshll.u32 %s5362, 4
          %s5374 = int_to_ptr.vmem [resolvable:$true] %s5373
          %5376 = dma.vmem_to_hbm [thread:$0]  %s5374, 128, %s5371, %s5359
        $region128: #{tpu_custom_call.1} parent=115 // pred_fallthru
          _
      $region116: #{tpu_custom_call.1} parent=5 // pred_fallthru
        _
      %p5377 = scmp.le.s32.totalorder 2, %s16
      // Predicated region
      $region129: #{tpu_custom_call.1} parent=5 // pred_check
        %p5378 = pneg %p5377
      $region130: #{tpu_custom_call.1} parent=5 // pred_check_branch
        %5380 = sbr.rel (%p5378) target = $region132
      $region131: #{tpu_custom_call.1} parent=5 // pred_region
        %s5381 = ssub.s32 %s16, 2
        // Predicated region
        $region133: #{tpu_custom_call.1} parent=131 // pred_check
          %p5382 = pneg %p202
        $region134: #{tpu_custom_call.1} parent=131 // pred_check_branch
          %5384 = sbr.rel (%p5382) target = $region136
        $region135: #{tpu_custom_call.1} parent=131 // pred_region
          %s5385 = sand.u32 %s187, 1
          %s5386 = scalar_lea.sflag [#allocation7], %s5385
          %s5387 = sand.u32 %s187, 1
          %s5388 = smul.addr %s5387, 8
          %s5389 = scalar_lea.vmem [#allocation6], %s5388
          %5390 = dma.done %s5386, 128
        $region136: #{tpu_custom_call.1} parent=131 // pred_fallthru
          _
      $region132: #{tpu_custom_call.1} parent=5 // pred_fallthru
        _
    $region6: #{tpu_custom_call.1} parent=1 // loop_footer
      %s20 = sadd.s32 1, %s16
    $region7: #{tpu_custom_call.1} parent=1 // loop_footer_branch
      %15 = sbr.rel target = $region3
    $region8: #{tpu_custom_call.1} parent=1 // loop_exit
      _
    %5391 = vsyncpa [#allocation7], 1
    %s5392 = scalar_lea.sflag [#allocation7], 1
    %5393 = vsyncpa %s5392, 1

</llo_original>
